<compile_context>
chip_gen: v6e
topology: v6e:2x2x1
jax: 0.10.0
libtpu: 0.0.40
codegen_flags: <defaults>
</compile_context>

<pallas_src>
import functools

import jax
import jax.numpy as jnp
from jax.experimental import pallas as pl
from jax.experimental.pallas import tpu as pltpu

POOL_SIZES = (5, 9, 13)  # matches the PyTorch default


def _neg_limit(dtype):
    # finfo.min instead of -inf: identical pooling result (every output window
    # contains its centre pixel, so padded positions never win) and robust for
    # non-float dtypes.
    if jnp.issubdtype(dtype, jnp.floating):
        return jnp.finfo(dtype).min
    return jnp.iinfo(dtype).min


def _spp_kernel(x_ref, o_ref, pad_scr, r5_scr, p5_scr, *, H, W, pad, row_chunk):
    """One (batch, channel-tile) grid step, channels-last.

    x_ref:   (1, H, W, TC)        input tile
    o_ref:   (4, H, W, TC)        groups [pool13, pool9, pool5, identity]
    pad_scr: (H+2p, W+2p, TC)     border-padded input (VMEM only, p = 6)
    r5_scr:  (H+8, W+2p, TC)      row-direction 5-window max
    p5_scr:  (H+8, W+8, TC)       5x5 pool on the extended output grid
    """
    neg = _neg_limit(x_ref.dtype)
    He = H + 2 * (pad - 2)   # H + 8: extended rows needed by the 13-cascade
    We = W + 2 * (pad - 2)   # W + 8
    e = pad - 2              # 4: margin of the extended 5x5 grid

    # 1) Border-padded input, VMEM only (never materialized in HBM).
    pad_scr[...] = jnp.full(pad_scr.shape, neg, dtype=pad_scr.dtype)
    pad_scr[pad:pad + H, pad:pad + W, :] = x_ref[0]

    # 2) Row-direction 5-window max over the extended rows.  Shifts are along
    #    the untiled leading dim -> plain address offsets.  Chunked over rows
    #    so the accumulator's vreg live range stays small.
    for i0 in range(0, He, row_chunk):
        rows = min(row_chunk, He - i0)
        r5 = pad_scr[i0:i0 + rows, :, :]
        for d in range(1, 5):
            r5 = jnp.maximum(r5, pad_scr[i0 + d:i0 + d + rows, :, :])
        r5_scr[i0:i0 + rows, :, :] = r5

    # 3) Column-direction 5-window max -> full 5x5 pool on the extended grid.
    #    Shifts are sublane-offset VMEM loads (C stays dense on lanes).
    for i0 in range(0, He, row_chunk):
        rows = min(row_chunk, He - i0)
        p5 = r5_scr[i0:i0 + rows, 0:We, :]
        for d in range(1, 5):
            p5 = jnp.maximum(p5, r5_scr[i0:i0 + rows, d:d + We, :])
        p5_scr[i0:i0 + rows, :, :] = p5

    # 4) Cascade: 9x9 / 13x13 are exact unions of shifted 5x5 windows.
    for r0 in range(0, H, row_chunk):
        rows = min(row_chunk, H - r0)

        def p5_at(dh, dw):
            return p5_scr[e + dh + r0:e + dh + r0 + rows,
                          e + dw:e + dw + W, :]

        # group 2: pool5 = centre crop of the extended 5x5 result.
        o_ref[2, r0:r0 + rows, :, :] = p5_at(0, 0)

        # group 1: pool9 = union of four 5x5 windows shifted by (+-2, +-2).
        p9 = p5_at(-2, -2)
        for dh, dw in ((-2, 2), (2, -2), (2, 2)):
            p9 = jnp.maximum(p9, p5_at(dh, dw))
        o_ref[1, r0:r0 + rows, :, :] = p9

        # group 0: pool13 = union of nine 5x5 windows shifted by {-4,0,4}^2.
        p13 = p5_at(-4, -4)
        for dh, dw in ((-4, 0), (-4, 4), (0, -4), (0, 0), (0, 4),
                       (4, -4), (4, 0), (4, 4)):
            p13 = jnp.maximum(p13, p5_at(dh, dw))
        o_ref[0, r0:r0 + rows, :, :] = p13

        # group 3: identity branch (trailing `x` in torch.cat).
        o_ref[3, r0:r0 + rows, :, :] = x_ref[0, r0:r0 + rows, :, :]


def spatial_pyramid_pooling(x, pool_sizes=POOL_SIZES):
    """x: (N, C, H, W) -> (N, 4*C, H, W); channels ordered [p13, p9, p5, x]."""
    if tuple(pool_sizes) != POOL_SIZES:
        # TODO(synk): cascade is specialized for the module default (5, 9, 13).
        raise NotImplementedError("kernel specialized for pool_sizes=(5,9,13)")
    N, C, H, W = x.shape
    pad = max(pool_sizes) // 2               # 6
    Hp, Wp = H + 2 * pad, W + 2 * pad
    He, We = H + 2 * (pad - 2), W + 2 * (pad - 2)

    # Channel tile: one 128-lane group when C allows it (keeps per-step blocks
    # plus scratch tiny in VMEM and register pressure minimal); otherwise take
    # the whole (lane-padded) channel dim.
    tc = 128 if C % 128 == 0 else C
    lane_groups = -(-tc // 128)
    # Keep the per-chunk accumulator around <= 32 vregs.
    row_chunk = max(1, 32 // (-(-Wp // 8) * lane_groups))

    # Channels-last so C sits on the 128-lane axis inside the kernel.
    x_nhwc = jnp.transpose(x, (0, 2, 3, 1))  # (N, H, W, C)

    kernel = functools.partial(_spp_kernel, H=H, W=W, pad=pad,
                               row_chunk=row_chunk)

    out = pl.pallas_call(
        kernel,
        out_shape=jax.ShapeDtypeStruct((N * 4, H, W, C), x.dtype),
        grid=(N, C // tc),
        in_specs=[pl.BlockSpec((1, H, W, tc), lambda n, c: (n, 0, 0, c))],
        out_specs=pl.BlockSpec((4, H, W, tc), lambda n, c: (n, 0, 0, c)),
        scratch_shapes=[
            pltpu.VMEM((Hp, Wp, tc), x.dtype),   # padded input
            pltpu.VMEM((He, Wp, tc), x.dtype),   # row-direction 5-max
            pltpu.VMEM((He, We, tc), x.dtype),   # extended 5x5 pool
        ],
        compiler_params=pltpu.CompilerParams(
            dimension_semantics=("parallel", "parallel"),
            vmem_limit_bytes=32 * 1024 * 1024,
        ),
    )(x_nhwc)

    # (N*4, H, W, C) -> (N, 4, C, H, W) -> (N, 4C, H, W): [p13, p9, p5, x].
    out = out.reshape(N, 4, H, W, C).transpose(0, 1, 4, 2, 3)
    return out.reshape(N, 4 * C, H, W)


def _reference_spp(x, pool_sizes=POOL_SIZES):
    """Pure-JAX reference mirroring the PyTorch module."""
    feats = []
    for k in reversed(pool_sizes):
        p = k // 2
        feats.append(
            jax.lax.reduce_window(
                x,
                -jnp.inf,
                jax.lax.max,
                window_dimensions=(1, 1, k, k),
                window_strides=(1, 1, 1, 1),
                padding=[(0, 0), (0, 0), (p, p), (p, p)],
            ))
    feats.append(x)
    return jnp.concatenate(feats, axis=1)


if __name__ == "__main__":
    key = jax.random.PRNGKey(0)
    N, C, H, W = 2, 4, 16, 16
    x = jax.random.normal(key, (N, C, H, W), dtype=jnp.float32)

    out = spatial_pyramid_pooling(x)
    out = jax.block_until_ready(out)

    ref = _reference_spp(x)
    assert out.shape == (N, 4 * C, H, W), out.shape
    assert jnp.allclose(out, ref), "mismatch vs reference SPP"

    print("KERNEL_OK")
</pallas_src>

<mosaic_0001>
module attributes {stable_mosaic.version = 11 : i64} {
  func.func @_spp_kernel(%arg0: i32, %arg1: i32, %arg2: memref<1x16x16x4xf32, #tpu.memory_space<vmem>>, %arg3: memref<4x16x16x4xf32, #tpu.memory_space<vmem>>, %arg4: memref<28x28x4xf32, #tpu.memory_space<vmem>>, %arg5: memref<24x28x4xf32, #tpu.memory_space<vmem>>, %arg6: memref<24x24x4xf32, #tpu.memory_space<vmem>>) attributes {dimension_semantics = [#tpu.dimension_semantics<parallel>, #tpu.dimension_semantics<parallel>], iteration_bounds = array<i64: 2, 1>, scalar_prefetch = 0 : i64, scratch_operands = 3 : i64, tpu.core_type = #tpu.core_type<tc>, window_params = [{transform_indices = @transform_0, window_bounds = array<i64: 1, 16, 16, 4>}, {transform_indices = @transform_1, window_bounds = array<i64: 4, 16, 16, 4>}]} {
    %cst = arith.constant -3.40282347E+38 : f32
    %0 = vector.broadcast %cst : f32 to vector<28x28x4xf32>
    %c0 = arith.constant 0 : index
    %c0_0 = arith.constant 0 : index
    %c0_1 = arith.constant 0 : index
    %1 = vector.load %arg4[%c0, %c0_0, %c0_1] : memref<28x28x4xf32, #tpu.memory_space<vmem>>, vector<28x28x4xf32>
    tpu.vector_store %arg4[%c0, %c0_0, %c0_1], %0 {strides = array<i32>} : memref<28x28x4xf32, #tpu.memory_space<vmem>>, vector<28x28x4xf32>,
    %c0_2 = arith.constant 0 : index
    %c0_3 = arith.constant 0 : index
    %c0_4 = arith.constant 0 : index
    %c0_5 = arith.constant 0 : index
    %2 = vector.load %arg2[%c0_2, %c0_3, %c0_4, %c0_5] : memref<1x16x16x4xf32, #tpu.memory_space<vmem>>, vector<1x16x16x4xf32>
    %3 = vector.shape_cast %2 : vector<1x16x16x4xf32> to vector<16x16x4xf32>
    %c6 = arith.constant 6 : index
    %c6_6 = arith.constant 6 : index
    %c0_7 = arith.constant 0 : index
    %4 = vector.load %arg4[%c6, %c6_6, %c0_7] : memref<28x28x4xf32, #tpu.memory_space<vmem>>, vector<16x16x4xf32>
    tpu.vector_store %arg4[%c6, %c6_6, %c0_7], %3 {strides = array<i32>} : memref<28x28x4xf32, #tpu.memory_space<vmem>>, vector<16x16x4xf32>,
    %c0_8 = arith.constant 0 : index
    %c0_9 = arith.constant 0 : index
    %c0_10 = arith.constant 0 : index
    %5 = vector.load %arg4[%c0_8, %c0_9, %c0_10] : memref<28x28x4xf32, #tpu.memory_space<vmem>>, vector<8x28x4xf32>
    %c1 = arith.constant 1 : index
    %c0_11 = arith.constant 0 : index
    %c0_12 = arith.constant 0 : index
    %6 = vector.load %arg4[%c1, %c0_11, %c0_12] : memref<28x28x4xf32, #tpu.memory_space<vmem>>, vector<8x28x4xf32>
    %7 = arith.maximumf %5, %6 : vector<8x28x4xf32>
    %c2 = arith.constant 2 : index
    %c0_13 = arith.constant 0 : index
    %c0_14 = arith.constant 0 : index
    %8 = vector.load %arg4[%c2, %c0_13, %c0_14] : memref<28x28x4xf32, #tpu.memory_space<vmem>>, vector<8x28x4xf32>
    %9 = arith.maximumf %7, %8 : vector<8x28x4xf32>
    %c3 = arith.constant 3 : index
    %c0_15 = arith.constant 0 : index
    %c0_16 = arith.constant 0 : index
    %10 = vector.load %arg4[%c3, %c0_15, %c0_16] : memref<28x28x4xf32, #tpu.memory_space<vmem>>, vector<8x28x4xf32>
    %11 = arith.maximumf %9, %10 : vector<8x28x4xf32>
    %c4 = arith.constant 4 : index
    %c0_17 = arith.constant 0 : index
    %c0_18 = arith.constant 0 : index
    %12 = vector.load %arg4[%c4, %c0_17, %c0_18] : memref<28x28x4xf32, #tpu.memory_space<vmem>>, vector<8x28x4xf32>
    %13 = arith.maximumf %11, %12 : vector<8x28x4xf32>
    %c0_19 = arith.constant 0 : index
    %c0_20 = arith.constant 0 : index
    %c0_21 = arith.constant 0 : index
    %14 = vector.load %arg5[%c0_19, %c0_20, %c0_21] : memref<24x28x4xf32, #tpu.memory_space<vmem>>, vector<8x28x4xf32>
    tpu.vector_store %arg5[%c0_19, %c0_20, %c0_21], %13 {strides = array<i32>} : memref<24x28x4xf32, #tpu.memory_space<vmem>>, vector<8x28x4xf32>,
    %c8 = arith.constant 8 : index
    %c0_22 = arith.constant 0 : index
    %c0_23 = arith.constant 0 : index
    %15 = vector.load %arg4[%c8, %c0_22, %c0_23] : memref<28x28x4xf32, #tpu.memory_space<vmem>>, vector<8x28x4xf32>
    %c9 = arith.constant 9 : index
    %c0_24 = arith.constant 0 : index
    %c0_25 = arith.constant 0 : index
    %16 = vector.load %arg4[%c9, %c0_24, %c0_25] : memref<28x28x4xf32, #tpu.memory_space<vmem>>, vector<8x28x4xf32>
    %17 = arith.maximumf %15, %16 : vector<8x28x4xf32>
    %c10 = arith.constant 10 : index
    %c0_26 = arith.constant 0 : index
    %c0_27 = arith.constant 0 : index
    %18 = vector.load %arg4[%c10, %c0_26, %c0_27] : memref<28x28x4xf32, #tpu.memory_space<vmem>>, vector<8x28x4xf32>
    %19 = arith.maximumf %17, %18 : vector<8x28x4xf32>
    %c11 = arith.constant 11 : index
    %c0_28 = arith.constant 0 : index
    %c0_29 = arith.constant 0 : index
    %20 = vector.load %arg4[%c11, %c0_28, %c0_29] : memref<28x28x4xf32, #tpu.memory_space<vmem>>, vector<8x28x4xf32>
    %21 = arith.maximumf %19, %20 : vector<8x28x4xf32>
    %c12 = arith.constant 12 : index
    %c0_30 = arith.constant 0 : index
    %c0_31 = arith.constant 0 : index
    %22 = vector.load %arg4[%c12, %c0_30, %c0_31] : memref<28x28x4xf32, #tpu.memory_space<vmem>>, vector<8x28x4xf32>
    %23 = arith.maximumf %21, %22 : vector<8x28x4xf32>
    %c8_32 = arith.constant 8 : index
    %c0_33 = arith.constant 0 : index
    %c0_34 = arith.constant 0 : index
    %24 = vector.load %arg5[%c8_32, %c0_33, %c0_34] : memref<24x28x4xf32, #tpu.memory_space<vmem>>, vector<8x28x4xf32>
    tpu.vector_store %arg5[%c8_32, %c0_33, %c0_34], %23 {strides = array<i32>} : memref<24x28x4xf32, #tpu.memory_space<vmem>>, vector<8x28x4xf32>,
    %c16 = arith.constant 16 : index
    %c0_35 = arith.constant 0 : index
    %c0_36 = arith.constant 0 : index
    %25 = vector.load %arg4[%c16, %c0_35, %c0_36] : memref<28x28x4xf32, #tpu.memory_space<vmem>>, vector<8x28x4xf32>
    %c17 = arith.constant 17 : index
    %c0_37 = arith.constant 0 : index
    %c0_38 = arith.constant 0 : index
    %26 = vector.load %arg4[%c17, %c0_37, %c0_38] : memref<28x28x4xf32, #tpu.memory_space<vmem>>, vector<8x28x4xf32>
    %27 = arith.maximumf %25, %26 : vector<8x28x4xf32>
    %c18 = arith.constant 18 : index
    %c0_39 = arith.constant 0 : index
    %c0_40 = arith.constant 0 : index
    %28 = vector.load %arg4[%c18, %c0_39, %c0_40] : memref<28x28x4xf32, #tpu.memory_space<vmem>>, vector<8x28x4xf32>
    %29 = arith.maximumf %27, %28 : vector<8x28x4xf32>
    %c19 = arith.constant 19 : index
    %c0_41 = arith.constant 0 : index
    %c0_42 = arith.constant 0 : index
    %30 = vector.load %arg4[%c19, %c0_41, %c0_42] : memref<28x28x4xf32, #tpu.memory_space<vmem>>, vector<8x28x4xf32>
    %31 = arith.maximumf %29, %30 : vector<8x28x4xf32>
    %c20 = arith.constant 20 : index
    %c0_43 = arith.constant 0 : index
    %c0_44 = arith.constant 0 : index
    %32 = vector.load %arg4[%c20, %c0_43, %c0_44] : memref<28x28x4xf32, #tpu.memory_space<vmem>>, vector<8x28x4xf32>
    %33 = arith.maximumf %31, %32 : vector<8x28x4xf32>
    %c16_45 = arith.constant 16 : index
    %c0_46 = arith.constant 0 : index
    %c0_47 = arith.constant 0 : index
    %34 = vector.load %arg5[%c16_45, %c0_46, %c0_47] : memref<24x28x4xf32, #tpu.memory_space<vmem>>, vector<8x28x4xf32>
    tpu.vector_store %arg5[%c16_45, %c0_46, %c0_47], %33 {strides = array<i32>} : memref<24x28x4xf32, #tpu.memory_space<vmem>>, vector<8x28x4xf32>,
    %c0_48 = arith.constant 0 : index
    %c0_49 = arith.constant 0 : index
    %c0_50 = arith.constant 0 : index
    %35 = vector.load %arg5[%c0_48, %c0_49, %c0_50] : memref<24x28x4xf32, #tpu.memory_space<vmem>>, vector<8x24x4xf32>
    %c0_51 = arith.constant 0 : index
    %c1_52 = arith.constant 1 : index
    %c0_53 = arith.constant 0 : index
    %36 = vector.load %arg5[%c0_51, %c1_52, %c0_53] : memref<24x28x4xf32, #tpu.memory_space<vmem>>, vector<8x24x4xf32>
    %37 = arith.maximumf %35, %36 : vector<8x24x4xf32>
    %c0_54 = arith.constant 0 : index
    %c2_55 = arith.constant 2 : index
    %c0_56 = arith.constant 0 : index
    %38 = vector.load %arg5[%c0_54, %c2_55, %c0_56] : memref<24x28x4xf32, #tpu.memory_space<vmem>>, vector<8x24x4xf32>
    %39 = arith.maximumf %37, %38 : vector<8x24x4xf32>
    %c0_57 = arith.constant 0 : index
    %c3_58 = arith.constant 3 : index
    %c0_59 = arith.constant 0 : index
    %40 = vector.load %arg5[%c0_57, %c3_58, %c0_59] : memref<24x28x4xf32, #tpu.memory_space<vmem>>, vector<8x24x4xf32>
    %41 = arith.maximumf %39, %40 : vector<8x24x4xf32>
    %c0_60 = arith.constant 0 : index
    %c4_61 = arith.constant 4 : index
    %c0_62 = arith.constant 0 : index
    %42 = vector.load %arg5[%c0_60, %c4_61, %c0_62] : memref<24x28x4xf32, #tpu.memory_space<vmem>>, vector<8x24x4xf32>
    %43 = arith.maximumf %41, %42 : vector<8x24x4xf32>
    %c0_63 = arith.constant 0 : index
    %c0_64 = arith.constant 0 : index
    %c0_65 = arith.constant 0 : index
    %44 = vector.load %arg6[%c0_63, %c0_64, %c0_65] : memref<24x24x4xf32, #tpu.memory_space<vmem>>, vector<8x24x4xf32>
    tpu.vector_store %arg6[%c0_63, %c0_64, %c0_65], %43 {strides = array<i32>} : memref<24x24x4xf32, #tpu.memory_space<vmem>>, vector<8x24x4xf32>,
    %c8_66 = arith.constant 8 : index
    %c0_67 = arith.constant 0 : index
    %c0_68 = arith.constant 0 : index
    %45 = vector.load %arg5[%c8_66, %c0_67, %c0_68] : memref<24x28x4xf32, #tpu.memory_space<vmem>>, vector<8x24x4xf32>
    %c8_69 = arith.constant 8 : index
    %c1_70 = arith.constant 1 : index
    %c0_71 = arith.constant 0 : index
    %46 = vector.load %arg5[%c8_69, %c1_70, %c0_71] : memref<24x28x4xf32, #tpu.memory_space<vmem>>, vector<8x24x4xf32>
    %47 = arith.maximumf %45, %46 : vector<8x24x4xf32>
    %c8_72 = arith.constant 8 : index
    %c2_73 = arith.constant 2 : index
    %c0_74 = arith.constant 0 : index
    %48 = vector.load %arg5[%c8_72, %c2_73, %c0_74] : memref<24x28x4xf32, #tpu.memory_space<vmem>>, vector<8x24x4xf32>
    %49 = arith.maximumf %47, %48 : vector<8x24x4xf32>
    %c8_75 = arith.constant 8 : index
    %c3_76 = arith.constant 3 : index
    %c0_77 = arith.constant 0 : index
    %50 = vector.load %arg5[%c8_75, %c3_76, %c0_77] : memref<24x28x4xf32, #tpu.memory_space<vmem>>, vector<8x24x4xf32>
    %51 = arith.maximumf %49, %50 : vector<8x24x4xf32>
    %c8_78 = arith.constant 8 : index
    %c4_79 = arith.constant 4 : index
    %c0_80 = arith.constant 0 : index
    %52 = vector.load %arg5[%c8_78, %c4_79, %c0_80] : memref<24x28x4xf32, #tpu.memory_space<vmem>>, vector<8x24x4xf32>
    %53 = arith.maximumf %51, %52 : vector<8x24x4xf32>
    %c8_81 = arith.constant 8 : index
    %c0_82 = arith.constant 0 : index
    %c0_83 = arith.constant 0 : index
    %54 = vector.load %arg6[%c8_81, %c0_82, %c0_83] : memref<24x24x4xf32, #tpu.memory_space<vmem>>, vector<8x24x4xf32>
    tpu.vector_store %arg6[%c8_81, %c0_82, %c0_83], %53 {strides = array<i32>} : memref<24x24x4xf32, #tpu.memory_space<vmem>>, vector<8x24x4xf32>,
    %c16_84 = arith.constant 16 : index
    %c0_85 = arith.constant 0 : index
    %c0_86 = arith.constant 0 : index
    %55 = vector.load %arg5[%c16_84, %c0_85, %c0_86] : memref<24x28x4xf32, #tpu.memory_space<vmem>>, vector<8x24x4xf32>
    %c16_87 = arith.constant 16 : index
    %c1_88 = arith.constant 1 : index
    %c0_89 = arith.constant 0 : index
    %56 = vector.load %arg5[%c16_87, %c1_88, %c0_89] : memref<24x28x4xf32, #tpu.memory_space<vmem>>, vector<8x24x4xf32>
    %57 = arith.maximumf %55, %56 : vector<8x24x4xf32>
    %c16_90 = arith.constant 16 : index
    %c2_91 = arith.constant 2 : index
    %c0_92 = arith.constant 0 : index
    %58 = vector.load %arg5[%c16_90, %c2_91, %c0_92] : memref<24x28x4xf32, #tpu.memory_space<vmem>>, vector<8x24x4xf32>
    %59 = arith.maximumf %57, %58 : vector<8x24x4xf32>
    %c16_93 = arith.constant 16 : index
    %c3_94 = arith.constant 3 : index
    %c0_95 = arith.constant 0 : index
    %60 = vector.load %arg5[%c16_93, %c3_94, %c0_95] : memref<24x28x4xf32, #tpu.memory_space<vmem>>, vector<8x24x4xf32>
    %61 = arith.maximumf %59, %60 : vector<8x24x4xf32>
    %c16_96 = arith.constant 16 : index
    %c4_97 = arith.constant 4 : index
    %c0_98 = arith.constant 0 : index
    %62 = vector.load %arg5[%c16_96, %c4_97, %c0_98] : memref<24x28x4xf32, #tpu.memory_space<vmem>>, vector<8x24x4xf32>
    %63 = arith.maximumf %61, %62 : vector<8x24x4xf32>
    %c16_99 = arith.constant 16 : index
    %c0_100 = arith.constant 0 : index
    %c0_101 = arith.constant 0 : index
    %64 = vector.load %arg6[%c16_99, %c0_100, %c0_101] : memref<24x24x4xf32, #tpu.memory_space<vmem>>, vector<8x24x4xf32>
    tpu.vector_store %arg6[%c16_99, %c0_100, %c0_101], %63 {strides = array<i32>} : memref<24x24x4xf32, #tpu.memory_space<vmem>>, vector<8x24x4xf32>,
    %c4_102 = arith.constant 4 : index
    %c4_103 = arith.constant 4 : index
    %c0_104 = arith.constant 0 : index
    %65 = vector.load %arg6[%c4_102, %c4_103, %c0_104] : memref<24x24x4xf32, #tpu.memory_space<vmem>>, vector<8x16x4xf32>
    %c2_105 = arith.constant 2 : index
    %c0_106 = arith.constant 0 : index
    %c0_107 = arith.constant 0 : index
    %c0_108 = arith.constant 0 : index
    %66 = vector.load %arg3[%c2_105, %c0_106, %c0_107, %c0_108] : memref<4x16x16x4xf32, #tpu.memory_space<vmem>>, vector<1x8x16x4xf32>
    %67 = vector.shape_cast %66 : vector<1x8x16x4xf32> to vector<8x16x4xf32>
    %68 = vector.shape_cast %65 : vector<8x16x4xf32> to vector<1x8x16x4xf32>
    tpu.vector_store %arg3[%c2_105, %c0_106, %c0_107, %c0_108], %68 {strides = array<i32>} : memref<4x16x16x4xf32, #tpu.memory_space<vmem>>, vector<1x8x16x4xf32>,
    %c2_109 = arith.constant 2 : index
    %c2_110 = arith.constant 2 : index
    %c0_111 = arith.constant 0 : index
    %69 = vector.load %arg6[%c2_109, %c2_110, %c0_111] : memref<24x24x4xf32, #tpu.memory_space<vmem>>, vector<8x16x4xf32>
    %c2_112 = arith.constant 2 : index
    %c6_113 = arith.constant 6 : index
    %c0_114 = arith.constant 0 : index
    %70 = vector.load %arg6[%c2_112, %c6_113, %c0_114] : memref<24x24x4xf32, #tpu.memory_space<vmem>>, vector<8x16x4xf32>
    %71 = arith.maximumf %69, %70 : vector<8x16x4xf32>
    %c6_115 = arith.constant 6 : index
    %c2_116 = arith.constant 2 : index
    %c0_117 = arith.constant 0 : index
    %72 = vector.load %arg6[%c6_115, %c2_116, %c0_117] : memref<24x24x4xf32, #tpu.memory_space<vmem>>, vector<8x16x4xf32>
    %73 = arith.maximumf %71, %72 : vector<8x16x4xf32>
    %c6_118 = arith.constant 6 : index
    %c6_119 = arith.constant 6 : index
    %c0_120 = arith.constant 0 : index
    %74 = vector.load %arg6[%c6_118, %c6_119, %c0_120] : memref<24x24x4xf32, #tpu.memory_space<vmem>>, vector<8x16x4xf32>
    %75 = arith.maximumf %73, %74 : vector<8x16x4xf32>
    %c1_121 = arith.constant 1 : index
    %c0_122 = arith.constant 0 : index
    %c0_123 = arith.constant 0 : index
    %c0_124 = arith.constant 0 : index
    %76 = vector.load %arg3[%c1_121, %c0_122, %c0_123, %c0_124] : memref<4x16x16x4xf32, #tpu.memory_space<vmem>>, vector<1x8x16x4xf32>
    %77 = vector.shape_cast %76 : vector<1x8x16x4xf32> to vector<8x16x4xf32>
    %78 = vector.shape_cast %75 : vector<8x16x4xf32> to vector<1x8x16x4xf32>
    tpu.vector_store %arg3[%c1_121, %c0_122, %c0_123, %c0_124], %78 {strides = array<i32>} : memref<4x16x16x4xf32, #tpu.memory_space<vmem>>, vector<1x8x16x4xf32>,
    %c0_125 = arith.constant 0 : index
    %c0_126 = arith.constant 0 : index
    %c0_127 = arith.constant 0 : index
    %79 = vector.load %arg6[%c0_125, %c0_126, %c0_127] : memref<24x24x4xf32, #tpu.memory_space<vmem>>, vector<8x16x4xf32>
    %c0_128 = arith.constant 0 : index
    %c4_129 = arith.constant 4 : index
    %c0_130 = arith.constant 0 : index
    %80 = vector.load %arg6[%c0_128, %c4_129, %c0_130] : memref<24x24x4xf32, #tpu.memory_space<vmem>>, vector<8x16x4xf32>
    %81 = arith.maximumf %79, %80 : vector<8x16x4xf32>
    %c0_131 = arith.constant 0 : index
    %c8_132 = arith.constant 8 : index
    %c0_133 = arith.constant 0 : index
    %82 = vector.load %arg6[%c0_131, %c8_132, %c0_133] : memref<24x24x4xf32, #tpu.memory_space<vmem>>, vector<8x16x4xf32>
    %83 = arith.maximumf %81, %82 : vector<8x16x4xf32>
    %c4_134 = arith.constant 4 : index
    %c0_135 = arith.constant 0 : index
    %c0_136 = arith.constant 0 : index
    %84 = vector.load %arg6[%c4_134, %c0_135, %c0_136] : memref<24x24x4xf32, #tpu.memory_space<vmem>>, vector<8x16x4xf32>
    %85 = arith.maximumf %83, %84 : vector<8x16x4xf32>
    %c4_137 = arith.constant 4 : index
    %c4_138 = arith.constant 4 : index
    %c0_139 = arith.constant 0 : index
    %86 = vector.load %arg6[%c4_137, %c4_138, %c0_139] : memref<24x24x4xf32, #tpu.memory_space<vmem>>, vector<8x16x4xf32>
    %87 = arith.maximumf %85, %86 : vector<8x16x4xf32>
    %c4_140 = arith.constant 4 : index
    %c8_141 = arith.constant 8 : index
    %c0_142 = arith.constant 0 : index
    %88 = vector.load %arg6[%c4_140, %c8_141, %c0_142] : memref<24x24x4xf32, #tpu.memory_space<vmem>>, vector<8x16x4xf32>
    %89 = arith.maximumf %87, %88 : vector<8x16x4xf32>
    %c8_143 = arith.constant 8 : index
    %c0_144 = arith.constant 0 : index
    %c0_145 = arith.constant 0 : index
    %90 = vector.load %arg6[%c8_143, %c0_144, %c0_145] : memref<24x24x4xf32, #tpu.memory_space<vmem>>, vector<8x16x4xf32>
    %91 = arith.maximumf %89, %90 : vector<8x16x4xf32>
    %c8_146 = arith.constant 8 : index
    %c4_147 = arith.constant 4 : index
    %c0_148 = arith.constant 0 : index
    %92 = vector.load %arg6[%c8_146, %c4_147, %c0_148] : memref<24x24x4xf32, #tpu.memory_space<vmem>>, vector<8x16x4xf32>
    %93 = arith.maximumf %91, %92 : vector<8x16x4xf32>
    %c8_149 = arith.constant 8 : index
    %c8_150 = arith.constant 8 : index
    %c0_151 = arith.constant 0 : index
    %94 = vector.load %arg6[%c8_149, %c8_150, %c0_151] : memref<24x24x4xf32, #tpu.memory_space<vmem>>, vector<8x16x4xf32>
    %95 = arith.maximumf %93, %94 : vector<8x16x4xf32>
    %c0_152 = arith.constant 0 : index
    %c0_153 = arith.constant 0 : index
    %c0_154 = arith.constant 0 : index
    %c0_155 = arith.constant 0 : index
    %96 = vector.load %arg3[%c0_152, %c0_153, %c0_154, %c0_155] : memref<4x16x16x4xf32, #tpu.memory_space<vmem>>, vector<1x8x16x4xf32>
    %97 = vector.shape_cast %96 : vector<1x8x16x4xf32> to vector<8x16x4xf32>
    %98 = vector.shape_cast %95 : vector<8x16x4xf32> to vector<1x8x16x4xf32>
    tpu.vector_store %arg3[%c0_152, %c0_153, %c0_154, %c0_155], %98 {strides = array<i32>} : memref<4x16x16x4xf32, #tpu.memory_space<vmem>>, vector<1x8x16x4xf32>,
    %c0_156 = arith.constant 0 : index
    %c0_157 = arith.constant 0 : index
    %c0_158 = arith.constant 0 : index
    %c0_159 = arith.constant 0 : index
    %99 = vector.load %arg2[%c0_156, %c0_157, %c0_158, %c0_159] : memref<1x16x16x4xf32, #tpu.memory_space<vmem>>, vector<1x8x16x4xf32>
    %100 = vector.shape_cast %99 : vector<1x8x16x4xf32> to vector<8x16x4xf32>
    %c3_160 = arith.constant 3 : index
    %c0_161 = arith.constant 0 : index
    %c0_162 = arith.constant 0 : index
    %c0_163 = arith.constant 0 : index
    %101 = vector.load %arg3[%c3_160, %c0_161, %c0_162, %c0_163] : memref<4x16x16x4xf32, #tpu.memory_space<vmem>>, vector<1x8x16x4xf32>
    %102 = vector.shape_cast %101 : vector<1x8x16x4xf32> to vector<8x16x4xf32>
    %103 = vector.shape_cast %100 : vector<8x16x4xf32> to vector<1x8x16x4xf32>
    tpu.vector_store %arg3[%c3_160, %c0_161, %c0_162, %c0_163], %103 {strides = array<i32>} : memref<4x16x16x4xf32, #tpu.memory_space<vmem>>, vector<1x8x16x4xf32>,
    %c12_164 = arith.constant 12 : index
    %c4_165 = arith.constant 4 : index
    %c0_166 = arith.constant 0 : index
    %104 = vector.load %arg6[%c12_164, %c4_165, %c0_166] : memref<24x24x4xf32, #tpu.memory_space<vmem>>, vector<8x16x4xf32>
    %c2_167 = arith.constant 2 : index
    %c8_168 = arith.constant 8 : index
    %c0_169 = arith.constant 0 : index
    %c0_170 = arith.constant 0 : index
    %105 = vector.load %arg3[%c2_167, %c8_168, %c0_169, %c0_170] : memref<4x16x16x4xf32, #tpu.memory_space<vmem>>, vector<1x8x16x4xf32>
    %106 = vector.shape_cast %105 : vector<1x8x16x4xf32> to vector<8x16x4xf32>
    %107 = vector.shape_cast %104 : vector<8x16x4xf32> to vector<1x8x16x4xf32>
    tpu.vector_store %arg3[%c2_167, %c8_168, %c0_169, %c0_170], %107 {strides = array<i32>} : memref<4x16x16x4xf32, #tpu.memory_space<vmem>>, vector<1x8x16x4xf32>,
    %c10_171 = arith.constant 10 : index
    %c2_172 = arith.constant 2 : index
    %c0_173 = arith.constant 0 : index
    %108 = vector.load %arg6[%c10_171, %c2_172, %c0_173] : memref<24x24x4xf32, #tpu.memory_space<vmem>>, vector<8x16x4xf32>
    %c10_174 = arith.constant 10 : index
    %c6_175 = arith.constant 6 : index
    %c0_176 = arith.constant 0 : index
    %109 = vector.load %arg6[%c10_174, %c6_175, %c0_176] : memref<24x24x4xf32, #tpu.memory_space<vmem>>, vector<8x16x4xf32>
    %110 = arith.maximumf %108, %109 : vector<8x16x4xf32>
    %c14 = arith.constant 14 : index
    %c2_177 = arith.constant 2 : index
    %c0_178 = arith.constant 0 : index
    %111 = vector.load %arg6[%c14, %c2_177, %c0_178] : memref<24x24x4xf32, #tpu.memory_space<vmem>>, vector<8x16x4xf32>
    %112 = arith.maximumf %110, %111 : vector<8x16x4xf32>
    %c14_179 = arith.constant 14 : index
    %c6_180 = arith.constant 6 : index
    %c0_181 = arith.constant 0 : index
    %113 = vector.load %arg6[%c14_179, %c6_180, %c0_181] : memref<24x24x4xf32, #tpu.memory_space<vmem>>, vector<8x16x4xf32>
    %114 = arith.maximumf %112, %113 : vector<8x16x4xf32>
    %c1_182 = arith.constant 1 : index
    %c8_183 = arith.constant 8 : index
    %c0_184 = arith.constant 0 : index
    %c0_185 = arith.constant 0 : index
    %115 = vector.load %arg3[%c1_182, %c8_183, %c0_184, %c0_185] : memref<4x16x16x4xf32, #tpu.memory_space<vmem>>, vector<1x8x16x4xf32>
    %116 = vector.shape_cast %115 : vector<1x8x16x4xf32> to vector<8x16x4xf32>
    %117 = vector.shape_cast %114 : vector<8x16x4xf32> to vector<1x8x16x4xf32>
    tpu.vector_store %arg3[%c1_182, %c8_183, %c0_184, %c0_185], %117 {strides = array<i32>} : memref<4x16x16x4xf32, #tpu.memory_space<vmem>>, vector<1x8x16x4xf32>,
    %c8_186 = arith.constant 8 : index
    %c0_187 = arith.constant 0 : index
    %c0_188 = arith.constant 0 : index
    %118 = vector.load %arg6[%c8_186, %c0_187, %c0_188] : memref<24x24x4xf32, #tpu.memory_space<vmem>>, vector<8x16x4xf32>
    %c8_189 = arith.constant 8 : index
    %c4_190 = arith.constant 4 : index
    %c0_191 = arith.constant 0 : index
    %119 = vector.load %arg6[%c8_189, %c4_190, %c0_191] : memref<24x24x4xf32, #tpu.memory_space<vmem>>, vector<8x16x4xf32>
    %120 = arith.maximumf %118, %119 : vector<8x16x4xf32>
    %c8_192 = arith.constant 8 : index
    %c8_193 = arith.constant 8 : index
    %c0_194 = arith.constant 0 : index
    %121 = vector.load %arg6[%c8_192, %c8_193, %c0_194] : memref<24x24x4xf32, #tpu.memory_space<vmem>>, vector<8x16x4xf32>
    %122 = arith.maximumf %120, %121 : vector<8x16x4xf32>
    %c12_195 = arith.constant 12 : index
    %c0_196 = arith.constant 0 : index
    %c0_197 = arith.constant 0 : index
    %123 = vector.load %arg6[%c12_195, %c0_196, %c0_197] : memref<24x24x4xf32, #tpu.memory_space<vmem>>, vector<8x16x4xf32>
    %124 = arith.maximumf %122, %123 : vector<8x16x4xf32>
    %c12_198 = arith.constant 12 : index
    %c4_199 = arith.constant 4 : index
    %c0_200 = arith.constant 0 : index
    %125 = vector.load %arg6[%c12_198, %c4_199, %c0_200] : memref<24x24x4xf32, #tpu.memory_space<vmem>>, vector<8x16x4xf32>
    %126 = arith.maximumf %124, %125 : vector<8x16x4xf32>
    %c12_201 = arith.constant 12 : index
    %c8_202 = arith.constant 8 : index
    %c0_203 = arith.constant 0 : index
    %127 = vector.load %arg6[%c12_201, %c8_202, %c0_203] : memref<24x24x4xf32, #tpu.memory_space<vmem>>, vector<8x16x4xf32>
    %128 = arith.maximumf %126, %127 : vector<8x16x4xf32>
    %c16_204 = arith.constant 16 : index
    %c0_205 = arith.constant 0 : index
    %c0_206 = arith.constant 0 : index
    %129 = vector.load %arg6[%c16_204, %c0_205, %c0_206] : memref<24x24x4xf32, #tpu.memory_space<vmem>>, vector<8x16x4xf32>
    %130 = arith.maximumf %128, %129 : vector<8x16x4xf32>
    %c16_207 = arith.constant 16 : index
    %c4_208 = arith.constant 4 : index
    %c0_209 = arith.constant 0 : index
    %131 = vector.load %arg6[%c16_207, %c4_208, %c0_209] : memref<24x24x4xf32, #tpu.memory_space<vmem>>, vector<8x16x4xf32>
    %132 = arith.maximumf %130, %131 : vector<8x16x4xf32>
    %c16_210 = arith.constant 16 : index
    %c8_211 = arith.constant 8 : index
    %c0_212 = arith.constant 0 : index
    %133 = vector.load %arg6[%c16_210, %c8_211, %c0_212] : memref<24x24x4xf32, #tpu.memory_space<vmem>>, vector<8x16x4xf32>
    %134 = arith.maximumf %132, %133 : vector<8x16x4xf32>
    %c0_213 = arith.constant 0 : index
    %c8_214 = arith.constant 8 : index
    %c0_215 = arith.constant 0 : index
    %c0_216 = arith.constant 0 : index
    %135 = vector.load %arg3[%c0_213, %c8_214, %c0_215, %c0_216] : memref<4x16x16x4xf32, #tpu.memory_space<vmem>>, vector<1x8x16x4xf32>
    %136 = vector.shape_cast %135 : vector<1x8x16x4xf32> to vector<8x16x4xf32>
    %137 = vector.shape_cast %134 : vector<8x16x4xf32> to vector<1x8x16x4xf32>
    tpu.vector_store %arg3[%c0_213, %c8_214, %c0_215, %c0_216], %137 {strides = array<i32>} : memref<4x16x16x4xf32, #tpu.memory_space<vmem>>, vector<1x8x16x4xf32>,
    %c0_217 = arith.constant 0 : index
    %c8_218 = arith.constant 8 : index
    %c0_219 = arith.constant 0 : index
    %c0_220 = arith.constant 0 : index
    %138 = vector.load %arg2[%c0_217, %c8_218, %c0_219, %c0_220] : memref<1x16x16x4xf32, #tpu.memory_space<vmem>>, vector<1x8x16x4xf32>
    %139 = vector.shape_cast %138 : vector<1x8x16x4xf32> to vector<8x16x4xf32>
    %c3_221 = arith.constant 3 : index
    %c8_222 = arith.constant 8 : index
    %c0_223 = arith.constant 0 : index
    %c0_224 = arith.constant 0 : index
    %140 = vector.load %arg3[%c3_221, %c8_222, %c0_223, %c0_224] : memref<4x16x16x4xf32, #tpu.memory_space<vmem>>, vector<1x8x16x4xf32>
    %141 = vector.shape_cast %140 : vector<1x8x16x4xf32> to vector<8x16x4xf32>
    %142 = vector.shape_cast %139 : vector<8x16x4xf32> to vector<1x8x16x4xf32>
    tpu.vector_store %arg3[%c3_221, %c8_222, %c0_223, %c0_224], %142 {strides = array<i32>} : memref<4x16x16x4xf32, #tpu.memory_space<vmem>>, vector<1x8x16x4xf32>,
    return
  }
  func.func @transform_0(%arg0: i32, %arg1: i32) -> (i32, i32, i32, i32) {
    %c0_i32 = arith.constant 0 : i32
    %c0_i32_0 = arith.constant 0 : i32
    %c0_i32_1 = arith.constant 0 : i32
    return %arg0, %c0_i32, %c0_i32_0, %arg1 : i32, i32, i32, i32
  }
  func.func @transform_1(%arg0: i32, %arg1: i32) -> (i32, i32, i32, i32) {
    %c0_i32 = arith.constant 0 : i32
    %c0_i32_0 = arith.constant 0 : i32
    %c0_i32_1 = arith.constant 0 : i32
    return %arg0, %c0_i32, %c0_i32_0, %arg1 : i32, i32, i32, i32
  }
}

</mosaic_0001>

<llo_original>
// kernel: tpu_custom_call.1
$region0: #{tpu_custom_call.1}
  #allocation0 [shape = 'u32[]', space=smem, size = 0x4, offset = 0x4, fixed_abs, tag = 'smem constant byte address 0x4 - core index']
  #allocation1 [shape = 'u32[144,128]{1,0:T(1,128)}', space=vmem, size = 0x12000, scoped, tag = 'internal scratch']
  #allocation2 [shape = 'f32[28,28,4]{2,1,0:T(8,128)}', space=vmem, size = 0x70000, scoped, tag = 'scratch operand']
  #allocation3 [shape = 'f32[24,28,4]{2,1,0:T(8,128)}', space=vmem, size = 0x60000, scoped, tag = 'scratch operand']
  #allocation4 [shape = 'f32[24,24,4]{2,1,0:T(8,128)}', space=vmem, size = 0x48000, scoped, tag = 'scratch operand']
  %s0 = inlined_call_operand.vmem [shape: f32[2,16,16,4], index: 0, kind: input, shape index: {}]
  %s1 = inlined_call_operand.vmem [shape: f32[8,16,16,4], index: 1, kind: output, shape index: {}]
  %s2 = sld [smem:[#allocation0]]
  $region37: #{tpu_custom_call.1} parent=0
    _
  %s4 = ssub.s32 1, %s2
  %s5 = scalar_select 0, %s4, %s2
  loop: start=0, step=1, limit=4
  $region2: #{tpu_custom_call.1} parent=0 // loop_pre_header
    _
  $region3: #{tpu_custom_call.1} parent=0 // loop_header
    %s7 = sphi 0, %s11
    %p8 = scmp.ge.s32.totalorder %s7, 4
    %s14 = sphi 0, %s26
    %s15 = sphi 0, %s22
    %s16 = sphi 0, %s14
    %s17 = sphi 0, %s15
    %s18 = sphi 0, %s16
    %s19 = sphi 0, %s17
    %s31 = sphi 0, %s33
    %s34 = sphi 0, %s31
    %s35 = sphi 0, %s34
    %s51 = sphi 0, %s35
    %s59 = sphi 0, %s61
    %s62 = sphi 0, %s59
    %s63 = sphi 0, %s62
    %s79 = sphi 0, %s63
  $region4: #{tpu_custom_call.1} parent=0 // loop_header_branch
    %10 = sbr.rel (%p8) target = $region8
  $region5: #{tpu_custom_call.1} parent=0 // loop_body
    %s12 = ssub.s32 %s7, 1
    %s13 = ssub.s32 %s7, 2
    %s20 = sadd.s32 1, %s15
    %p21 = scmp.ge.s32.totalorder %s20, 1
    %s22 = scalar_select %p21, 0, %s20
    %s23 = sadd.s32 1, %s14
    %s24 = scalar_select %p21, %s23, %s14
    %p25 = scmp.ge.s32.totalorder %s24, 2
    %s26 = scalar_select %p25, 0, %s24
    %s27 = ssub.s32 %s14, %s26
    %s28 = ssub.s32 %s15, %s22
    %s29 = sor.u32 %s27, %s28
    %p30 = scmp.eq.s32.totalorder %s29, 0
    %s32 = sadd.s32 %s31, 1
    %s33 = scalar_select %p30, %s31, %s32
    %p36 = pneg %p30
    %p37 = scmp.eq.s32.totalorder %s7, 1
    %p38 = por %p36, %p37
    %p39 = scmp.ne.s32.totalorder %s31, %s34
    %p40 = scmp.eq.s32.totalorder %s7, 0
    %p41 = por %p39, %p40
    %p42 = scmp.ne.s32.totalorder %s31, %s34
    %p43 = scmp.eq.s32.totalorder %s12, 1
    %p44 = por %p42, %p43
    %p45 = scmp.ne.s32.totalorder %s34, %s35
    %p46 = scmp.eq.s32.totalorder %s12, 0
    %p47 = por %p45, %p46
    %p48 = scmp.ne.s32.totalorder %s34, %s35
    %p49 = scmp.eq.s32.totalorder %s13, 1
    %p50 = por %p48, %p49
    %p52 = scmp.ne.s32.totalorder %s35, %s51
    %p53 = scmp.eq.s32.totalorder %s13, 0
    %p54 = por %p52, %p53
    %s55 = ssub.s32 %s14, %s26
    %s56 = ssub.s32 %s15, %s22
    %s57 = sor.u32 %s55, %s56
    %p58 = scmp.eq.s32.totalorder %s57, 0
    %s60 = sadd.s32 %s59, 1
    %s61 = scalar_select %p58, %s59, %s60
    %p64 = pneg %p58
    %p65 = scmp.eq.s32.totalorder %s7, 1
    %p66 = por %p64, %p65
    %p67 = scmp.ne.s32.totalorder %s59, %s62
    %p68 = scmp.eq.s32.totalorder %s7, 0
    %p69 = por %p67, %p68
    %p70 = scmp.ne.s32.totalorder %s59, %s62
    %p71 = scmp.eq.s32.totalorder %s12, 1
    %p72 = por %p70, %p71
    %p73 = scmp.ne.s32.totalorder %s62, %s63
    %p74 = scmp.eq.s32.totalorder %s12, 0
    %p75 = por %p73, %p74
    %p76 = scmp.ne.s32.totalorder %s62, %s63
    %p77 = scmp.eq.s32.totalorder %s13, 1
    %p78 = por %p76, %p77
    %p80 = scmp.ne.s32.totalorder %s63, %s79
    %p81 = scmp.eq.s32.totalorder %s13, 0
    %p82 = por %p80, %p81
    %p83 = scmp.le.s32.totalorder 1, %s7
    %p84 = scmp.lt.s32.totalorder %s7, 3
    %p85 = pnand %p83, %p84
    %p86 = pneg %p85
    // Predicated region
    $region9: #{tpu_custom_call.1} parent=5 // pred_check
      _
    $region10: #{tpu_custom_call.1} parent=5 // pred_check_branch
      %88 = sbr.rel (%p85) target = $region12
    $region11: #{tpu_custom_call.1} parent=5 // pred_region
      %s89 = ssub.s32 %s7, 1
    $region12: #{tpu_custom_call.1} parent=5 // pred_fallthru
      _
    %p90 = scmp.lt.s32.totalorder %s7, 2
    // Predicated region
    $region13: #{tpu_custom_call.1} parent=5 // pred_check
      %p91 = pneg %p90
    $region14: #{tpu_custom_call.1} parent=5 // pred_check_branch
      %93 = sbr.rel (%p91) target = $region16
    $region15: #{tpu_custom_call.1} parent=5 // pred_region
      // Predicated region
      $region17: #{tpu_custom_call.1} parent=15 // pred_check
        %p94 = pneg %p41
      $region18: #{tpu_custom_call.1} parent=15 // pred_check_branch
        %96 = sbr.rel (%p94) target = $region20
      $region19: #{tpu_custom_call.1} parent=15 // pred_region
        %p97 = scmp.lt.s32.totalorder %s14, 1
        %s98 = scalar_select %p97, %s14, 1
        %p99 = scmp.lt.s32.totalorder %s15, 0
        %s100 = scalar_select %p99, %s15, 0
        %s101 = smul.addr %s98, 32
        %s102 = sadd.s32 %s100, %s101
        %s103 = smul.addr %s102, 8
        %s104 = scalar_lea.vmem %s0, %s103
      $region20: #{tpu_custom_call.1} parent=15 // pred_fallthru
        _
    $region16: #{tpu_custom_call.1} parent=5 // pred_fallthru
      _
    %p105 = scmp.le.s32.totalorder 1, %s7
    %p106 = scmp.lt.s32.totalorder %s7, 3
    %p107 = pnand %p105, %p106
    %p108 = pneg %p107
    // Predicated region
    $region21: #{tpu_custom_call.1} parent=5 // pred_check
      _
    $region22: #{tpu_custom_call.1} parent=5 // pred_check_branch
      %110 = sbr.rel (%p107) target = $region24
    $region23: #{tpu_custom_call.1} parent=5 // pred_region
      %s111 = ssub.s32 %s7, 1
      %p112 = scmp.lt.s32.totalorder %s16, 1
      %s113 = scalar_select %p112, %s16, 1
      %p114 = scmp.lt.s32.totalorder %s17, 0
      %s115 = scalar_select %p114, %s17, 0
      %s116 = smul.addr %s113, 32
      %s117 = sadd.s32 %s115, %s116
      %s118 = smul.addr %s117, 8
      %s119 = scalar_lea.vmem %s0, %s118
      %p120 = pneg %p47
      %p121 = pneg %p44
      %p122 = pneg %p75
      %p123 = pneg %p72
      %s124 = smul.u32 4, %s16
      %p125 = scmp.lt.s32.totalorder %s124, 7
      %s126 = scalar_select %p125, %s124, 7
      %p127 = scmp.lt.s32.totalorder %s17, 0
      %s128 = scalar_select %p127, %s17, 0
      %s129 = smul.addr %s126, 32
      %s130 = sadd.s32 %s128, %s129
      %s131 = smul.addr %s130, 8
      %s132 = scalar_lea.vmem %s1, %s131
      %p133 = scmp.lt.s32.totalorder %s16, 1
      %s134 = scalar_select %p133, %s16, 1
      %p135 = scmp.lt.s32.totalorder %s17, 0
      %s136 = scalar_select %p135, %s17, 0
      %s137 = smul.addr %s134, 32
      %s138 = sadd.s32 %s136, %s137
      %s139 = smul.addr %s138, 8
      %s140 = scalar_lea.vmem %s0, %s139
      %s141 = smul.u32 4, %s16
      %p142 = scmp.lt.s32.totalorder %s141, 7
      %s143 = scalar_select %p142, %s141, 7
      %p144 = scmp.lt.s32.totalorder %s17, 0
      %s145 = scalar_select %p144, %s17, 0
      %s146 = smul.addr %s143, 32
      %s147 = sadd.s32 %s145, %s146
      %s148 = smul.addr %s147, 8
      %s149 = scalar_lea.vmem %s1, %s148
      %s150 = smul.u32 4, %s16
      %vm151 = vcmask 31744
      %152 = vst.msk [vmem:[#allocation2] sm:$0xff] %vm151, -3.4028235e+38
      %153 = vst.msk [vmem:[#allocation2 + $0x8] sm:$0xff] %vm151, -3.4028235e+38
      %154 = vst.msk [vmem:[#allocation2 + $0x10] sm:$0xff] %vm151, -3.4028235e+38
      %vm155 = vcmask 27648
      %156 = vst.msk [vmem:[#allocation2 + $0x18] sm:$0xf] %vm155, -3.4028235e+38
      %157 = vst.msk [vmem:[#allocation2 + $0x20] sm:$0xff] %vm151, -3.4028235e+38
      %158 = vst.msk [vmem:[#allocation2 + $0x28] sm:$0xff] %vm151, -3.4028235e+38
      %159 = vst.msk [vmem:[#allocation2 + $0x30] sm:$0xff] %vm151, -3.4028235e+38
      %160 = vst.msk [vmem:[#allocation2 + $0x38] sm:$0xf] %vm155, -3.4028235e+38
      %161 = vst.msk [vmem:[#allocation2 + $0x40] sm:$0xff] %vm151, -3.4028235e+38
      %162 = vst.msk [vmem:[#allocation2 + $0x48] sm:$0xff] %vm151, -3.4028235e+38
      %163 = vst.msk [vmem:[#allocation2 + $0x50] sm:$0xff] %vm151, -3.4028235e+38
      %164 = vst.msk [vmem:[#allocation2 + $0x58] sm:$0xf] %vm155, -3.4028235e+38
      %165 = vst.msk [vmem:[#allocation2 + $0x60] sm:$0xff] %vm151, -3.4028235e+38
      %166 = vst.msk [vmem:[#allocation2 + $0x68] sm:$0xff] %vm151, -3.4028235e+38
      %167 = vst.msk [vmem:[#allocation2 + $0x70] sm:$0xff] %vm151, -3.4028235e+38
      %168 = vst.msk [vmem:[#allocation2 + $0x78] sm:$0xf] %vm155, -3.4028235e+38
      %169 = vst.msk [vmem:[#allocation2 + $0x80] sm:$0xff] %vm151, -3.4028235e+38
      %170 = vst.msk [vmem:[#allocation2 + $0x88] sm:$0xff] %vm151, -3.4028235e+38
      %171 = vst.msk [vmem:[#allocation2 + $0x90] sm:$0xff] %vm151, -3.4028235e+38
      %172 = vst.msk [vmem:[#allocation2 + $0x98] sm:$0xf] %vm155, -3.4028235e+38
      %173 = vst.msk [vmem:[#allocation2 + $0xa0] sm:$0xff] %vm151, -3.4028235e+38
      %174 = vst.msk [vmem:[#allocation2 + $0xa8] sm:$0xff] %vm151, -3.4028235e+38
      %175 = vst.msk [vmem:[#allocation2 + $0xb0] sm:$0xff] %vm151, -3.4028235e+38
      %176 = vst.msk [vmem:[#allocation2 + $0xb8] sm:$0xf] %vm155, -3.4028235e+38
      %177 = vst.msk [vmem:[#allocation2 + $0xc0] sm:$0xff] %vm151, -3.4028235e+38
      %178 = vst.msk [vmem:[#allocation2 + $0xc8] sm:$0xff] %vm151, -3.4028235e+38
      %179 = vst.msk [vmem:[#allocation2 + $0xd0] sm:$0xff] %vm151, -3.4028235e+38
      %180 = vst.msk [vmem:[#allocation2 + $0xd8] sm:$0xf] %vm155, -3.4028235e+38
      %181 = vst.msk [vmem:[#allocation2 + $0xe0] sm:$0xff] %vm151, -3.4028235e+38
      %182 = vst.msk [vmem:[#allocation2 + $0xe8] sm:$0xff] %vm151, -3.4028235e+38
      %183 = vst.msk [vmem:[#allocation2 + $0xf0] sm:$0xff] %vm151, -3.4028235e+38
      %184 = vst.msk [vmem:[#allocation2 + $0xf8] sm:$0xf] %vm155, -3.4028235e+38
      %185 = vst.msk [vmem:[#allocation2 + $0x100] sm:$0xff] %vm151, -3.4028235e+38
      %186 = vst.msk [vmem:[#allocation2 + $0x108] sm:$0xff] %vm151, -3.4028235e+38
      %187 = vst.msk [vmem:[#allocation2 + $0x110] sm:$0xff] %vm151, -3.4028235e+38
      %188 = vst.msk [vmem:[#allocation2 + $0x118] sm:$0xf] %vm155, -3.4028235e+38
      %189 = vst.msk [vmem:[#allocation2 + $0x120] sm:$0xff] %vm151, -3.4028235e+38
      %190 = vst.msk [vmem:[#allocation2 + $0x128] sm:$0xff] %vm151, -3.4028235e+38
      %191 = vst.msk [vmem:[#allocation2 + $0x130] sm:$0xff] %vm151, -3.4028235e+38
      %192 = vst.msk [vmem:[#allocation2 + $0x138] sm:$0xf] %vm155, -3.4028235e+38
      %193 = vst.msk [vmem:[#allocation2 + $0x140] sm:$0xff] %vm151, -3.4028235e+38
      %194 = vst.msk [vmem:[#allocation2 + $0x148] sm:$0xff] %vm151, -3.4028235e+38
      %195 = vst.msk [vmem:[#allocation2 + $0x150] sm:$0xff] %vm151, -3.4028235e+38
      %196 = vst.msk [vmem:[#allocation2 + $0x158] sm:$0xf] %vm155, -3.4028235e+38
      %197 = vst.msk [vmem:[#allocation2 + $0x160] sm:$0xff] %vm151, -3.4028235e+38
      %198 = vst.msk [vmem:[#allocation2 + $0x168] sm:$0xff] %vm151, -3.4028235e+38
      %199 = vst.msk [vmem:[#allocation2 + $0x170] sm:$0xff] %vm151, -3.4028235e+38
      %200 = vst.msk [vmem:[#allocation2 + $0x178] sm:$0xf] %vm155, -3.4028235e+38
      %201 = vst.msk [vmem:[#allocation2 + $0x180] sm:$0xff] %vm151, -3.4028235e+38
      %202 = vst.msk [vmem:[#allocation2 + $0x188] sm:$0xff] %vm151, -3.4028235e+38
      %203 = vst.msk [vmem:[#allocation2 + $0x190] sm:$0xff] %vm151, -3.4028235e+38
      %204 = vst.msk [vmem:[#allocation2 + $0x198] sm:$0xf] %vm155, -3.4028235e+38
      %205 = vst.msk [vmem:[#allocation2 + $0x1a0] sm:$0xff] %vm151, -3.4028235e+38
      %206 = vst.msk [vmem:[#allocation2 + $0x1a8] sm:$0xff] %vm151, -3.4028235e+38
      %207 = vst.msk [vmem:[#allocation2 + $0x1b0] sm:$0xff] %vm151, -3.4028235e+38
      %208 = vst.msk [vmem:[#allocation2 + $0x1b8] sm:$0xf] %vm155, -3.4028235e+38
      %209 = vst.msk [vmem:[#allocation2 + $0x1c0] sm:$0xff] %vm151, -3.4028235e+38
      %210 = vst.msk [vmem:[#allocation2 + $0x1c8] sm:$0xff] %vm151, -3.4028235e+38
      %211 = vst.msk [vmem:[#allocation2 + $0x1d0] sm:$0xff] %vm151, -3.4028235e+38
      %212 = vst.msk [vmem:[#allocation2 + $0x1d8] sm:$0xf] %vm155, -3.4028235e+38
      %213 = vst.msk [vmem:[#allocation2 + $0x1e0] sm:$0xff] %vm151, -3.4028235e+38
      %214 = vst.msk [vmem:[#allocation2 + $0x1e8] sm:$0xff] %vm151, -3.4028235e+38
      %215 = vst.msk [vmem:[#allocation2 + $0x1f0] sm:$0xff] %vm151, -3.4028235e+38
      %216 = vst.msk [vmem:[#allocation2 + $0x1f8] sm:$0xf] %vm155, -3.4028235e+38
      %217 = vst.msk [vmem:[#allocation2 + $0x200] sm:$0xff] %vm151, -3.4028235e+38
      %218 = vst.msk [vmem:[#allocation2 + $0x208] sm:$0xff] %vm151, -3.4028235e+38
      %219 = vst.msk [vmem:[#allocation2 + $0x210] sm:$0xff] %vm151, -3.4028235e+38
      %220 = vst.msk [vmem:[#allocation2 + $0x218] sm:$0xf] %vm155, -3.4028235e+38
      %221 = vst.msk [vmem:[#allocation2 + $0x220] sm:$0xff] %vm151, -3.4028235e+38
      %222 = vst.msk [vmem:[#allocation2 + $0x228] sm:$0xff] %vm151, -3.4028235e+38
      %223 = vst.msk [vmem:[#allocation2 + $0x230] sm:$0xff] %vm151, -3.4028235e+38
      %224 = vst.msk [vmem:[#allocation2 + $0x238] sm:$0xf] %vm155, -3.4028235e+38
      %225 = vst.msk [vmem:[#allocation2 + $0x240] sm:$0xff] %vm151, -3.4028235e+38
      %226 = vst.msk [vmem:[#allocation2 + $0x248] sm:$0xff] %vm151, -3.4028235e+38
      %227 = vst.msk [vmem:[#allocation2 + $0x250] sm:$0xff] %vm151, -3.4028235e+38
      %228 = vst.msk [vmem:[#allocation2 + $0x258] sm:$0xf] %vm155, -3.4028235e+38
      %229 = vst.msk [vmem:[#allocation2 + $0x260] sm:$0xff] %vm151, -3.4028235e+38
      %230 = vst.msk [vmem:[#allocation2 + $0x268] sm:$0xff] %vm151, -3.4028235e+38
      %231 = vst.msk [vmem:[#allocation2 + $0x270] sm:$0xff] %vm151, -3.4028235e+38
      %232 = vst.msk [vmem:[#allocation2 + $0x278] sm:$0xf] %vm155, -3.4028235e+38
      %233 = vst.msk [vmem:[#allocation2 + $0x280] sm:$0xff] %vm151, -3.4028235e+38
      %234 = vst.msk [vmem:[#allocation2 + $0x288] sm:$0xff] %vm151, -3.4028235e+38
      %235 = vst.msk [vmem:[#allocation2 + $0x290] sm:$0xff] %vm151, -3.4028235e+38
      %236 = vst.msk [vmem:[#allocation2 + $0x298] sm:$0xf] %vm155, -3.4028235e+38
      %237 = vst.msk [vmem:[#allocation2 + $0x2a0] sm:$0xff] %vm151, -3.4028235e+38
      %238 = vst.msk [vmem:[#allocation2 + $0x2a8] sm:$0xff] %vm151, -3.4028235e+38
      %239 = vst.msk [vmem:[#allocation2 + $0x2b0] sm:$0xff] %vm151, -3.4028235e+38
      %240 = vst.msk [vmem:[#allocation2 + $0x2b8] sm:$0xf] %vm155, -3.4028235e+38
      %241 = vst.msk [vmem:[#allocation2 + $0x2c0] sm:$0xff] %vm151, -3.4028235e+38
      %242 = vst.msk [vmem:[#allocation2 + $0x2c8] sm:$0xff] %vm151, -3.4028235e+38
      %243 = vst.msk [vmem:[#allocation2 + $0x2d0] sm:$0xff] %vm151, -3.4028235e+38
      %244 = vst.msk [vmem:[#allocation2 + $0x2d8] sm:$0xf] %vm155, -3.4028235e+38
      %245 = vst.msk [vmem:[#allocation2 + $0x2e0] sm:$0xff] %vm151, -3.4028235e+38
      %246 = vst.msk [vmem:[#allocation2 + $0x2e8] sm:$0xff] %vm151, -3.4028235e+38
      %247 = vst.msk [vmem:[#allocation2 + $0x2f0] sm:$0xff] %vm151, -3.4028235e+38
      %248 = vst.msk [vmem:[#allocation2 + $0x2f8] sm:$0xf] %vm155, -3.4028235e+38
      %249 = vst.msk [vmem:[#allocation2 + $0x300] sm:$0xff] %vm151, -3.4028235e+38
      %250 = vst.msk [vmem:[#allocation2 + $0x308] sm:$0xff] %vm151, -3.4028235e+38
      %251 = vst.msk [vmem:[#allocation2 + $0x310] sm:$0xff] %vm151, -3.4028235e+38
      %252 = vst.msk [vmem:[#allocation2 + $0x318] sm:$0xf] %vm155, -3.4028235e+38
      %253 = vst.msk [vmem:[#allocation2 + $0x320] sm:$0xff] %vm151, -3.4028235e+38
      %254 = vst.msk [vmem:[#allocation2 + $0x328] sm:$0xff] %vm151, -3.4028235e+38
      %255 = vst.msk [vmem:[#allocation2 + $0x330] sm:$0xff] %vm151, -3.4028235e+38
      %256 = vst.msk [vmem:[#allocation2 + $0x338] sm:$0xf] %vm155, -3.4028235e+38
      %257 = vst.msk [vmem:[#allocation2 + $0x340] sm:$0xff] %vm151, -3.4028235e+38
      %258 = vst.msk [vmem:[#allocation2 + $0x348] sm:$0xff] %vm151, -3.4028235e+38
      %259 = vst.msk [vmem:[#allocation2 + $0x350] sm:$0xff] %vm151, -3.4028235e+38
      %260 = vst.msk [vmem:[#allocation2 + $0x358] sm:$0xf] %vm155, -3.4028235e+38
      %261 = vst.msk [vmem:[#allocation2 + $0x360] sm:$0xff] %vm151, -3.4028235e+38
      %262 = vst.msk [vmem:[#allocation2 + $0x368] sm:$0xff] %vm151, -3.4028235e+38
      %263 = vst.msk [vmem:[#allocation2 + $0x370] sm:$0xff] %vm151, -3.4028235e+38
      %264 = vst.msk [vmem:[#allocation2 + $0x378] sm:$0xf] %vm155, -3.4028235e+38
      %v265 = vld [vmem:[%s140] sm:$0xff]
      %v266 = vld [vmem:[%s140 + $0x8] sm:$0xff]
      %v267 = vld [vmem:[%s140 + $0x10] sm:$0xff]
      %v268 = vld [vmem:[%s140 + $0x18] sm:$0xff]
      %v269 = vld [vmem:[%s140 + $0x20] sm:$0xff]
      %v270 = vld [vmem:[%s140 + $0x28] sm:$0xff]
      %v271 = vld [vmem:[%s140 + $0x30] sm:$0xff]
      %v272 = vld [vmem:[%s140 + $0x38] sm:$0xff]
      %v273 = vld [vmem:[%s140 + $0x40] sm:$0xff]
      %v274 = vld [vmem:[%s140 + $0x48] sm:$0xff]
      %v275 = vld [vmem:[%s140 + $0x50] sm:$0xff]
      %v276 = vld [vmem:[%s140 + $0x58] sm:$0xff]
      %v277 = vld [vmem:[%s140 + $0x60] sm:$0xff]
      %v278 = vld [vmem:[%s140 + $0x68] sm:$0xff]
      %v279 = vld [vmem:[%s140 + $0x70] sm:$0xff]
      %v280 = vld [vmem:[%s140 + $0x78] sm:$0xff]
      %v281 = vld [vmem:[%s140 + $0x80] sm:$0xff]
      %v282 = vld [vmem:[%s140 + $0x88] sm:$0xff]
      %v283 = vld [vmem:[%s140 + $0x90] sm:$0xff]
      %v284 = vld [vmem:[%s140 + $0x98] sm:$0xff]
      %v285 = vld [vmem:[%s140 + $0xa0] sm:$0xff]
      %v286 = vld [vmem:[%s140 + $0xa8] sm:$0xff]
      %v287 = vld [vmem:[%s140 + $0xb0] sm:$0xff]
      %v288 = vld [vmem:[%s140 + $0xb8] sm:$0xff]
      %v289 = vld [vmem:[%s140 + $0xc0] sm:$0xff]
      %v290 = vld [vmem:[%s140 + $0xc8] sm:$0xff]
      %v291 = vld [vmem:[%s140 + $0xd0] sm:$0xff]
      %v292 = vld [vmem:[%s140 + $0xd8] sm:$0xff]
      %v293 = vld [vmem:[%s140 + $0xe0] sm:$0xff]
      %v294 = vld [vmem:[%s140 + $0xe8] sm:$0xff]
      %v295 = vld [vmem:[%s140 + $0xf0] sm:$0xff]
      %v296 = vld [vmem:[%s140 + $0xf8] sm:$0xff]
      %s297 = scalar_lea.vmem [#allocation2], 192
      %298 = vst.msk [vmem:[%s297 + $0x6] sm:$0xff] %vm151, %v265
      %299 = vst.msk [vmem:[%s297 + $0xe] sm:$0xff] %vm151, %v266
      %300 = vst.msk [vmem:[%s297 + $0x26] sm:$0xff] %vm151, %v267
      %301 = vst.msk [vmem:[%s297 + $0x2e] sm:$0xff] %vm151, %v268
      %302 = vst.msk [vmem:[%s297 + $0x46] sm:$0xff] %vm151, %v269
      %303 = vst.msk [vmem:[%s297 + $0x4e] sm:$0xff] %vm151, %v270
      %304 = vst.msk [vmem:[%s297 + $0x66] sm:$0xff] %vm151, %v271
      %305 = vst.msk [vmem:[%s297 + $0x6e] sm:$0xff] %vm151, %v272
      %306 = vst.msk [vmem:[%s297 + $0x86] sm:$0xff] %vm151, %v273
      %307 = vst.msk [vmem:[%s297 + $0x8e] sm:$0xff] %vm151, %v274
      %308 = vst.msk [vmem:[%s297 + $0xa6] sm:$0xff] %vm151, %v275
      %309 = vst.msk [vmem:[%s297 + $0xae] sm:$0xff] %vm151, %v276
      %310 = vst.msk [vmem:[%s297 + $0xc6] sm:$0xff] %vm151, %v277
      %311 = vst.msk [vmem:[%s297 + $0xce] sm:$0xff] %vm151, %v278
      %312 = vst.msk [vmem:[%s297 + $0xe6] sm:$0xff] %vm151, %v279
      %313 = vst.msk [vmem:[%s297 + $0xee] sm:$0xff] %vm151, %v280
      %314 = vst.msk [vmem:[%s297 + $0x106] sm:$0xff] %vm151, %v281
      %315 = vst.msk [vmem:[%s297 + $0x10e] sm:$0xff] %vm151, %v282
      %316 = vst.msk [vmem:[%s297 + $0x126] sm:$0xff] %vm151, %v283
      %317 = vst.msk [vmem:[%s297 + $0x12e] sm:$0xff] %vm151, %v284
      %318 = vst.msk [vmem:[%s297 + $0x146] sm:$0xff] %vm151, %v285
      %319 = vst.msk [vmem:[%s297 + $0x14e] sm:$0xff] %vm151, %v286
      %320 = vst.msk [vmem:[%s297 + $0x166] sm:$0xff] %vm151, %v287
      %321 = vst.msk [vmem:[%s297 + $0x16e] sm:$0xff] %vm151, %v288
      %322 = vst.msk [vmem:[%s297 + $0x186] sm:$0xff] %vm151, %v289
      %323 = vst.msk [vmem:[%s297 + $0x18e] sm:$0xff] %vm151, %v290
      %324 = vst.msk [vmem:[%s297 + $0x1a6] sm:$0xff] %vm151, %v291
      %325 = vst.msk [vmem:[%s297 + $0x1ae] sm:$0xff] %vm151, %v292
      %326 = vst.msk [vmem:[%s297 + $0x1c6] sm:$0xff] %vm151, %v293
      %327 = vst.msk [vmem:[%s297 + $0x1ce] sm:$0xff] %vm151, %v294
      %328 = vst.msk [vmem:[%s297 + $0x1e6] sm:$0xff] %vm151, %v295
      %329 = vst.msk [vmem:[%s297 + $0x1ee] sm:$0xff] %vm151, %v296
      %v330 = vld [vmem:[#allocation2] sm:$0xff]
      %v331 = vld [vmem:[#allocation2 + $0x8] sm:$0xff]
      %v332 = vld [vmem:[#allocation2 + $0x10] sm:$0xff]
      %v333 = vld [vmem:[#allocation2 + $0x18] sm:$0xf]
      %v334 = vld [vmem:[#allocation2 + $0x20] sm:$0xff]
      %v335 = vld [vmem:[#allocation2 + $0x28] sm:$0xff]
      %v336 = vld [vmem:[#allocation2 + $0x30] sm:$0xff]
      %v337 = vld [vmem:[#allocation2 + $0x38] sm:$0xf]
      %v338 = vld [vmem:[#allocation2 + $0x40] sm:$0xff]
      %v339 = vld [vmem:[#allocation2 + $0x48] sm:$0xff]
      %v340 = vld [vmem:[#allocation2 + $0x50] sm:$0xff]
      %v341 = vld [vmem:[#allocation2 + $0x58] sm:$0xf]
      %v342 = vld [vmem:[#allocation2 + $0x60] sm:$0xff]
      %v343 = vld [vmem:[#allocation2 + $0x68] sm:$0xff]
      %v344 = vld [vmem:[#allocation2 + $0x70] sm:$0xff]
      %v345 = vld [vmem:[#allocation2 + $0x78] sm:$0xf]
      %v346 = vld [vmem:[#allocation2 + $0x80] sm:$0xff]
      %v347 = vld [vmem:[#allocation2 + $0x88] sm:$0xff]
      %v348 = vld [vmem:[#allocation2 + $0x90] sm:$0xff]
      %v349 = vld [vmem:[#allocation2 + $0x98] sm:$0xf]
      %v350 = vld [vmem:[#allocation2 + $0xa0] sm:$0xff]
      %v351 = vld [vmem:[#allocation2 + $0xa8] sm:$0xff]
      %v352 = vld [vmem:[#allocation2 + $0xb0] sm:$0xff]
      %v353 = vld [vmem:[#allocation2 + $0xb8] sm:$0xf]
      %v354 = vld [vmem:[#allocation2 + $0xc0] sm:$0xff]
      %v355 = vld [vmem:[#allocation2 + $0xc8] sm:$0xff]
      %v356 = vld [vmem:[#allocation2 + $0xd0] sm:$0xff]
      %v357 = vld [vmem:[#allocation2 + $0xd8] sm:$0xf]
      %v358 = vld [vmem:[#allocation2 + $0xe0] sm:$0xff]
      %v359 = vld [vmem:[#allocation2 + $0xe8] sm:$0xff]
      %v360 = vld [vmem:[#allocation2 + $0xf0] sm:$0xff]
      %v361 = vld [vmem:[#allocation2 + $0xf8] sm:$0xf]
      %s362 = scalar_lea.vmem [#allocation2], 32
      %v363 = vld [vmem:[%s362] sm:$0xff]
      %v364 = vld [vmem:[%s362 + $0x8] sm:$0xff]
      %v365 = vld [vmem:[%s362 + $0x10] sm:$0xff]
      %v366 = vld [vmem:[%s362 + $0x18] sm:$0xf]
      %v367 = vld [vmem:[%s362 + $0x20] sm:$0xff]
      %v368 = vld [vmem:[%s362 + $0x28] sm:$0xff]
      %v369 = vld [vmem:[%s362 + $0x30] sm:$0xff]
      %v370 = vld [vmem:[%s362 + $0x38] sm:$0xf]
      %v371 = vld [vmem:[%s362 + $0x40] sm:$0xff]
      %v372 = vld [vmem:[%s362 + $0x48] sm:$0xff]
      %v373 = vld [vmem:[%s362 + $0x50] sm:$0xff]
      %v374 = vld [vmem:[%s362 + $0x58] sm:$0xf]
      %v375 = vld [vmem:[%s362 + $0x60] sm:$0xff]
      %v376 = vld [vmem:[%s362 + $0x68] sm:$0xff]
      %v377 = vld [vmem:[%s362 + $0x70] sm:$0xff]
      %v378 = vld [vmem:[%s362 + $0x78] sm:$0xf]
      %v379 = vld [vmem:[%s362 + $0x80] sm:$0xff]
      %v380 = vld [vmem:[%s362 + $0x88] sm:$0xff]
      %v381 = vld [vmem:[%s362 + $0x90] sm:$0xff]
      %v382 = vld [vmem:[%s362 + $0x98] sm:$0xf]
      %v383 = vld [vmem:[%s362 + $0xa0] sm:$0xff]
      %v384 = vld [vmem:[%s362 + $0xa8] sm:$0xff]
      %v385 = vld [vmem:[%s362 + $0xb0] sm:$0xff]
      %v386 = vld [vmem:[%s362 + $0xb8] sm:$0xf]
      %v387 = vld [vmem:[%s362 + $0xc0] sm:$0xff]
      %v388 = vld [vmem:[%s362 + $0xc8] sm:$0xff]
      %v389 = vld [vmem:[%s362 + $0xd0] sm:$0xff]
      %v390 = vld [vmem:[%s362 + $0xd8] sm:$0xf]
      %v391 = vld [vmem:[%s362 + $0xe0] sm:$0xff]
      %v392 = vld [vmem:[%s362 + $0xe8] sm:$0xff]
      %v393 = vld [vmem:[%s362 + $0xf0] sm:$0xff]
      %v394 = vld [vmem:[%s362 + $0xf8] sm:$0xf]
      %v395 = vmax.f32 %v330, %v363
      %v396 = vmax.f32 %v331, %v364
      %v397 = vmax.f32 %v332, %v365
      %v398 = vmax.f32 %v333, %v366
      %v399 = vmax.f32 %v334, %v367
      %v400 = vmax.f32 %v335, %v368
      %v401 = vmax.f32 %v336, %v369
      %v402 = vmax.f32 %v337, %v370
      %v403 = vmax.f32 %v338, %v371
      %v404 = vmax.f32 %v339, %v372
      %v405 = vmax.f32 %v340, %v373
      %v406 = vmax.f32 %v341, %v374
      %v407 = vmax.f32 %v342, %v375
      %v408 = vmax.f32 %v343, %v376
      %v409 = vmax.f32 %v344, %v377
      %v410 = vmax.f32 %v345, %v378
      %v411 = vmax.f32 %v346, %v379
      %v412 = vmax.f32 %v347, %v380
      %v413 = vmax.f32 %v348, %v381
      %v414 = vmax.f32 %v349, %v382
      %v415 = vmax.f32 %v350, %v383
      %v416 = vmax.f32 %v351, %v384
      %v417 = vmax.f32 %v352, %v385
      %v418 = vmax.f32 %v353, %v386
      %v419 = vmax.f32 %v354, %v387
      %v420 = vmax.f32 %v355, %v388
      %v421 = vmax.f32 %v356, %v389
      %v422 = vmax.f32 %v357, %v390
      %v423 = vmax.f32 %v358, %v391
      %v424 = vmax.f32 %v359, %v392
      %v425 = vmax.f32 %v360, %v393
      %v426 = vmax.f32 %v361, %v394
      %s427 = scalar_lea.vmem [#allocation2], 64
      %v428 = vld [vmem:[%s427] sm:$0xff]
      %v429 = vld [vmem:[%s427 + $0x8] sm:$0xff]
      %v430 = vld [vmem:[%s427 + $0x10] sm:$0xff]
      %v431 = vld [vmem:[%s427 + $0x18] sm:$0xf]
      %v432 = vld [vmem:[%s427 + $0x20] sm:$0xff]
      %v433 = vld [vmem:[%s427 + $0x28] sm:$0xff]
      %v434 = vld [vmem:[%s427 + $0x30] sm:$0xff]
      %v435 = vld [vmem:[%s427 + $0x38] sm:$0xf]
      %v436 = vld [vmem:[%s427 + $0x40] sm:$0xff]
      %v437 = vld [vmem:[%s427 + $0x48] sm:$0xff]
      %v438 = vld [vmem:[%s427 + $0x50] sm:$0xff]
      %v439 = vld [vmem:[%s427 + $0x58] sm:$0xf]
      %v440 = vld [vmem:[%s427 + $0x60] sm:$0xff]
      %v441 = vld [vmem:[%s427 + $0x68] sm:$0xff]
      %v442 = vld [vmem:[%s427 + $0x70] sm:$0xff]
      %v443 = vld [vmem:[%s427 + $0x78] sm:$0xf]
      %v444 = vld [vmem:[%s427 + $0x80] sm:$0xff]
      %v445 = vld [vmem:[%s427 + $0x88] sm:$0xff]
      %v446 = vld [vmem:[%s427 + $0x90] sm:$0xff]
      %v447 = vld [vmem:[%s427 + $0x98] sm:$0xf]
      %v448 = vld [vmem:[%s427 + $0xa0] sm:$0xff]
      %v449 = vld [vmem:[%s427 + $0xa8] sm:$0xff]
      %v450 = vld [vmem:[%s427 + $0xb0] sm:$0xff]
      %v451 = vld [vmem:[%s427 + $0xb8] sm:$0xf]
      %v452 = vld [vmem:[%s427 + $0xc0] sm:$0xff]
      %v453 = vld [vmem:[%s427 + $0xc8] sm:$0xff]
      %v454 = vld [vmem:[%s427 + $0xd0] sm:$0xff]
      %v455 = vld [vmem:[%s427 + $0xd8] sm:$0xf]
      %v456 = vld [vmem:[%s427 + $0xe0] sm:$0xff]
      %v457 = vld [vmem:[%s427 + $0xe8] sm:$0xff]
      %v458 = vld [vmem:[%s427 + $0xf0] sm:$0xff]
      %v459 = vld [vmem:[%s427 + $0xf8] sm:$0xf]
      %v460 = vmax.f32 %v395, %v428
      %v461 = vmax.f32 %v396, %v429
      %v462 = vmax.f32 %v397, %v430
      %v463 = vmax.f32 %v398, %v431
      %v464 = vmax.f32 %v399, %v432
      %v465 = vmax.f32 %v400, %v433
      %v466 = vmax.f32 %v401, %v434
      %v467 = vmax.f32 %v402, %v435
      %v468 = vmax.f32 %v403, %v436
      %v469 = vmax.f32 %v404, %v437
      %v470 = vmax.f32 %v405, %v438
      %v471 = vmax.f32 %v406, %v439
      %v472 = vmax.f32 %v407, %v440
      %v473 = vmax.f32 %v408, %v441
      %v474 = vmax.f32 %v409, %v442
      %v475 = vmax.f32 %v410, %v443
      %v476 = vmax.f32 %v411, %v444
      %v477 = vmax.f32 %v412, %v445
      %v478 = vmax.f32 %v413, %v446
      %v479 = vmax.f32 %v414, %v447
      %v480 = vmax.f32 %v415, %v448
      %v481 = vmax.f32 %v416, %v449
      %v482 = vmax.f32 %v417, %v450
      %v483 = vmax.f32 %v418, %v451
      %v484 = vmax.f32 %v419, %v452
      %v485 = vmax.f32 %v420, %v453
      %v486 = vmax.f32 %v421, %v454
      %v487 = vmax.f32 %v422, %v455
      %v488 = vmax.f32 %v423, %v456
      %v489 = vmax.f32 %v424, %v457
      %v490 = vmax.f32 %v425, %v458
      %v491 = vmax.f32 %v426, %v459
      %s492 = scalar_lea.vmem [#allocation2], 96
      %v493 = vld [vmem:[%s492] sm:$0xff]
      %v494 = vld [vmem:[%s492 + $0x8] sm:$0xff]
      %v495 = vld [vmem:[%s492 + $0x10] sm:$0xff]
      %v496 = vld [vmem:[%s492 + $0x18] sm:$0xf]
      %v497 = vld [vmem:[%s492 + $0x20] sm:$0xff]
      %v498 = vld [vmem:[%s492 + $0x28] sm:$0xff]
      %v499 = vld [vmem:[%s492 + $0x30] sm:$0xff]
      %v500 = vld [vmem:[%s492 + $0x38] sm:$0xf]
      %v501 = vld [vmem:[%s492 + $0x40] sm:$0xff]
      %v502 = vld [vmem:[%s492 + $0x48] sm:$0xff]
      %v503 = vld [vmem:[%s492 + $0x50] sm:$0xff]
      %v504 = vld [vmem:[%s492 + $0x58] sm:$0xf]
      %v505 = vld [vmem:[%s492 + $0x60] sm:$0xff]
      %v506 = vld [vmem:[%s492 + $0x68] sm:$0xff]
      %v507 = vld [vmem:[%s492 + $0x70] sm:$0xff]
      %v508 = vld [vmem:[%s492 + $0x78] sm:$0xf]
      %v509 = vld [vmem:[%s492 + $0x80] sm:$0xff]
      %v510 = vld [vmem:[%s492 + $0x88] sm:$0xff]
      %v511 = vld [vmem:[%s492 + $0x90] sm:$0xff]
      %v512 = vld [vmem:[%s492 + $0x98] sm:$0xf]
      %v513 = vld [vmem:[%s492 + $0xa0] sm:$0xff]
      %v514 = vld [vmem:[%s492 + $0xa8] sm:$0xff]
      %v515 = vld [vmem:[%s492 + $0xb0] sm:$0xff]
      %v516 = vld [vmem:[%s492 + $0xb8] sm:$0xf]
      %v517 = vld [vmem:[%s492 + $0xc0] sm:$0xff]
      %v518 = vld [vmem:[%s492 + $0xc8] sm:$0xff]
      %v519 = vld [vmem:[%s492 + $0xd0] sm:$0xff]
      %v520 = vld [vmem:[%s492 + $0xd8] sm:$0xf]
      %v521 = vld [vmem:[%s492 + $0xe0] sm:$0xff]
      %v522 = vld [vmem:[%s492 + $0xe8] sm:$0xff]
      %v523 = vld [vmem:[%s492 + $0xf0] sm:$0xff]
      %v524 = vld [vmem:[%s492 + $0xf8] sm:$0xf]
      %v525 = vmax.f32 %v460, %v493
      %v526 = vmax.f32 %v461, %v494
      %v527 = vmax.f32 %v462, %v495
      %v528 = vmax.f32 %v463, %v496
      %v529 = vmax.f32 %v464, %v497
      %v530 = vmax.f32 %v465, %v498
      %v531 = vmax.f32 %v466, %v499
      %v532 = vmax.f32 %v467, %v500
      %v533 = vmax.f32 %v468, %v501
      %v534 = vmax.f32 %v469, %v502
      %v535 = vmax.f32 %v470, %v503
      %v536 = vmax.f32 %v471, %v504
      %v537 = vmax.f32 %v472, %v505
      %v538 = vmax.f32 %v473, %v506
      %v539 = vmax.f32 %v474, %v507
      %v540 = vmax.f32 %v475, %v508
      %v541 = vmax.f32 %v476, %v509
      %v542 = vmax.f32 %v477, %v510
      %v543 = vmax.f32 %v478, %v511
      %v544 = vmax.f32 %v479, %v512
      %v545 = vmax.f32 %v480, %v513
      %v546 = vmax.f32 %v481, %v514
      %v547 = vmax.f32 %v482, %v515
      %v548 = vmax.f32 %v483, %v516
      %v549 = vmax.f32 %v484, %v517
      %v550 = vmax.f32 %v485, %v518
      %v551 = vmax.f32 %v486, %v519
      %v552 = vmax.f32 %v487, %v520
      %v553 = vmax.f32 %v488, %v521
      %v554 = vmax.f32 %v489, %v522
      %v555 = vmax.f32 %v490, %v523
      %v556 = vmax.f32 %v491, %v524
      %s557 = scalar_lea.vmem [#allocation2], 128
      %v558 = vld [vmem:[%s557] sm:$0xff]
      %v559 = vld [vmem:[%s557 + $0x8] sm:$0xff]
      %v560 = vld [vmem:[%s557 + $0x10] sm:$0xff]
      %v561 = vld [vmem:[%s557 + $0x18] sm:$0xf]
      %v562 = vld [vmem:[%s557 + $0x20] sm:$0xff]
      %v563 = vld [vmem:[%s557 + $0x28] sm:$0xff]
      %v564 = vld [vmem:[%s557 + $0x30] sm:$0xff]
      %v565 = vld [vmem:[%s557 + $0x38] sm:$0xf]
      %v566 = vld [vmem:[%s557 + $0x40] sm:$0xff]
      %v567 = vld [vmem:[%s557 + $0x48] sm:$0xff]
      %v568 = vld [vmem:[%s557 + $0x50] sm:$0xff]
      %v569 = vld [vmem:[%s557 + $0x58] sm:$0xf]
      %v570 = vld [vmem:[%s557 + $0x60] sm:$0xff]
      %v571 = vld [vmem:[%s557 + $0x68] sm:$0xff]
      %v572 = vld [vmem:[%s557 + $0x70] sm:$0xff]
      %v573 = vld [vmem:[%s557 + $0x78] sm:$0xf]
      %v574 = vld [vmem:[%s557 + $0x80] sm:$0xff]
      %v575 = vld [vmem:[%s557 + $0x88] sm:$0xff]
      %v576 = vld [vmem:[%s557 + $0x90] sm:$0xff]
      %v577 = vld [vmem:[%s557 + $0x98] sm:$0xf]
      %v578 = vld [vmem:[%s557 + $0xa0] sm:$0xff]
      %v579 = vld [vmem:[%s557 + $0xa8] sm:$0xff]
      %v580 = vld [vmem:[%s557 + $0xb0] sm:$0xff]
      %v581 = vld [vmem:[%s557 + $0xb8] sm:$0xf]
      %v582 = vld [vmem:[%s557 + $0xc0] sm:$0xff]
      %v583 = vld [vmem:[%s557 + $0xc8] sm:$0xff]
      %v584 = vld [vmem:[%s557 + $0xd0] sm:$0xff]
      %v585 = vld [vmem:[%s557 + $0xd8] sm:$0xf]
      %v586 = vld [vmem:[%s557 + $0xe0] sm:$0xff]
      %v587 = vld [vmem:[%s557 + $0xe8] sm:$0xff]
      %v588 = vld [vmem:[%s557 + $0xf0] sm:$0xff]
      %v589 = vld [vmem:[%s557 + $0xf8] sm:$0xf]
      %v590 = vmax.f32 %v525, %v558
      %v591 = vmax.f32 %v526, %v559
      %v592 = vmax.f32 %v527, %v560
      %v593 = vmax.f32 %v528, %v561
      %v594 = vmax.f32 %v529, %v562
      %v595 = vmax.f32 %v530, %v563
      %v596 = vmax.f32 %v531, %v564
      %v597 = vmax.f32 %v532, %v565
      %v598 = vmax.f32 %v533, %v566
      %v599 = vmax.f32 %v534, %v567
      %v600 = vmax.f32 %v535, %v568
      %v601 = vmax.f32 %v536, %v569
      %v602 = vmax.f32 %v537, %v570
      %v603 = vmax.f32 %v538, %v571
      %v604 = vmax.f32 %v539, %v572
      %v605 = vmax.f32 %v540, %v573
      %v606 = vmax.f32 %v541, %v574
      %v607 = vmax.f32 %v542, %v575
      %v608 = vmax.f32 %v543, %v576
      %v609 = vmax.f32 %v544, %v577
      %v610 = vmax.f32 %v545, %v578
      %v611 = vmax.f32 %v546, %v579
      %v612 = vmax.f32 %v547, %v580
      %v613 = vmax.f32 %v548, %v581
      %v614 = vmax.f32 %v549, %v582
      %v615 = vmax.f32 %v550, %v583
      %v616 = vmax.f32 %v551, %v584
      %v617 = vmax.f32 %v552, %v585
      %v618 = vmax.f32 %v553, %v586
      %v619 = vmax.f32 %v554, %v587
      %v620 = vmax.f32 %v555, %v588
      %v621 = vmax.f32 %v556, %v589
      %622 = vst.msk [vmem:[#allocation3] sm:$0xff] %vm151, %v590
      %623 = vst.msk [vmem:[#allocation3 + $0x8] sm:$0xff] %vm151, %v591
      %624 = vst.msk [vmem:[#allocation3 + $0x10] sm:$0xff] %vm151, %v592
      %625 = vst.msk [vmem:[#allocation3 + $0x18] sm:$0xf] %vm155, %v593
      %626 = vst.msk [vmem:[#allocation3 + $0x20] sm:$0xff] %vm151, %v594
      %627 = vst.msk [vmem:[#allocation3 + $0x28] sm:$0xff] %vm151, %v595
      %628 = vst.msk [vmem:[#allocation3 + $0x30] sm:$0xff] %vm151, %v596
      %629 = vst.msk [vmem:[#allocation3 + $0x38] sm:$0xf] %vm155, %v597
      %630 = vst.msk [vmem:[#allocation3 + $0x40] sm:$0xff] %vm151, %v598
      %631 = vst.msk [vmem:[#allocation3 + $0x48] sm:$0xff] %vm151, %v599
      %632 = vst.msk [vmem:[#allocation3 + $0x50] sm:$0xff] %vm151, %v600
      %633 = vst.msk [vmem:[#allocation3 + $0x58] sm:$0xf] %vm155, %v601
      %634 = vst.msk [vmem:[#allocation3 + $0x60] sm:$0xff] %vm151, %v602
      %635 = vst.msk [vmem:[#allocation3 + $0x68] sm:$0xff] %vm151, %v603
      %636 = vst.msk [vmem:[#allocation3 + $0x70] sm:$0xff] %vm151, %v604
      %637 = vst.msk [vmem:[#allocation3 + $0x78] sm:$0xf] %vm155, %v605
      %638 = vst.msk [vmem:[#allocation3 + $0x80] sm:$0xff] %vm151, %v606
      %639 = vst.msk [vmem:[#allocation3 + $0x88] sm:$0xff] %vm151, %v607
      %640 = vst.msk [vmem:[#allocation3 + $0x90] sm:$0xff] %vm151, %v608
      %641 = vst.msk [vmem:[#allocation3 + $0x98] sm:$0xf] %vm155, %v609
      %642 = vst.msk [vmem:[#allocation3 + $0xa0] sm:$0xff] %vm151, %v610
      %643 = vst.msk [vmem:[#allocation3 + $0xa8] sm:$0xff] %vm151, %v611
      %644 = vst.msk [vmem:[#allocation3 + $0xb0] sm:$0xff] %vm151, %v612
      %645 = vst.msk [vmem:[#allocation3 + $0xb8] sm:$0xf] %vm155, %v613
      %646 = vst.msk [vmem:[#allocation3 + $0xc0] sm:$0xff] %vm151, %v614
      %647 = vst.msk [vmem:[#allocation3 + $0xc8] sm:$0xff] %vm151, %v615
      %648 = vst.msk [vmem:[#allocation3 + $0xd0] sm:$0xff] %vm151, %v616
      %649 = vst.msk [vmem:[#allocation3 + $0xd8] sm:$0xf] %vm155, %v617
      %650 = vst.msk [vmem:[#allocation3 + $0xe0] sm:$0xff] %vm151, %v618
      %651 = vst.msk [vmem:[#allocation3 + $0xe8] sm:$0xff] %vm151, %v619
      %652 = vst.msk [vmem:[#allocation3 + $0xf0] sm:$0xff] %vm151, %v620
      %653 = vst.msk [vmem:[#allocation3 + $0xf8] sm:$0xf] %vm155, %v621
      %s654 = scalar_lea.vmem [#allocation2], 256
      %v655 = vld [vmem:[%s654] sm:$0xff]
      %v656 = vld [vmem:[%s654 + $0x8] sm:$0xff]
      %v657 = vld [vmem:[%s654 + $0x10] sm:$0xff]
      %v658 = vld [vmem:[%s654 + $0x18] sm:$0xf]
      %v659 = vld [vmem:[%s654 + $0x20] sm:$0xff]
      %v660 = vld [vmem:[%s654 + $0x28] sm:$0xff]
      %v661 = vld [vmem:[%s654 + $0x30] sm:$0xff]
      %v662 = vld [vmem:[%s654 + $0x38] sm:$0xf]
      %v663 = vld [vmem:[%s654 + $0x40] sm:$0xff]
      %v664 = vld [vmem:[%s654 + $0x48] sm:$0xff]
      %v665 = vld [vmem:[%s654 + $0x50] sm:$0xff]
      %v666 = vld [vmem:[%s654 + $0x58] sm:$0xf]
      %v667 = vld [vmem:[%s654 + $0x60] sm:$0xff]
      %v668 = vld [vmem:[%s654 + $0x68] sm:$0xff]
      %v669 = vld [vmem:[%s654 + $0x70] sm:$0xff]
      %v670 = vld [vmem:[%s654 + $0x78] sm:$0xf]
      %v671 = vld [vmem:[%s654 + $0x80] sm:$0xff]
      %v672 = vld [vmem:[%s654 + $0x88] sm:$0xff]
      %v673 = vld [vmem:[%s654 + $0x90] sm:$0xff]
      %v674 = vld [vmem:[%s654 + $0x98] sm:$0xf]
      %v675 = vld [vmem:[%s654 + $0xa0] sm:$0xff]
      %v676 = vld [vmem:[%s654 + $0xa8] sm:$0xff]
      %v677 = vld [vmem:[%s654 + $0xb0] sm:$0xff]
      %v678 = vld [vmem:[%s654 + $0xb8] sm:$0xf]
      %v679 = vld [vmem:[%s654 + $0xc0] sm:$0xff]
      %v680 = vld [vmem:[%s654 + $0xc8] sm:$0xff]
      %v681 = vld [vmem:[%s654 + $0xd0] sm:$0xff]
      %v682 = vld [vmem:[%s654 + $0xd8] sm:$0xf]
      %v683 = vld [vmem:[%s654 + $0xe0] sm:$0xff]
      %v684 = vld [vmem:[%s654 + $0xe8] sm:$0xff]
      %v685 = vld [vmem:[%s654 + $0xf0] sm:$0xff]
      %v686 = vld [vmem:[%s654 + $0xf8] sm:$0xf]
      %s687 = scalar_lea.vmem [#allocation2], 288
      %v688 = vld [vmem:[%s687] sm:$0xff]
      %v689 = vld [vmem:[%s687 + $0x8] sm:$0xff]
      %v690 = vld [vmem:[%s687 + $0x10] sm:$0xff]
      %v691 = vld [vmem:[%s687 + $0x18] sm:$0xf]
      %v692 = vld [vmem:[%s687 + $0x20] sm:$0xff]
      %v693 = vld [vmem:[%s687 + $0x28] sm:$0xff]
      %v694 = vld [vmem:[%s687 + $0x30] sm:$0xff]
      %v695 = vld [vmem:[%s687 + $0x38] sm:$0xf]
      %v696 = vld [vmem:[%s687 + $0x40] sm:$0xff]
      %v697 = vld [vmem:[%s687 + $0x48] sm:$0xff]
      %v698 = vld [vmem:[%s687 + $0x50] sm:$0xff]
      %v699 = vld [vmem:[%s687 + $0x58] sm:$0xf]
      %v700 = vld [vmem:[%s687 + $0x60] sm:$0xff]
      %v701 = vld [vmem:[%s687 + $0x68] sm:$0xff]
      %v702 = vld [vmem:[%s687 + $0x70] sm:$0xff]
      %v703 = vld [vmem:[%s687 + $0x78] sm:$0xf]
      %v704 = vld [vmem:[%s687 + $0x80] sm:$0xff]
      %v705 = vld [vmem:[%s687 + $0x88] sm:$0xff]
      %v706 = vld [vmem:[%s687 + $0x90] sm:$0xff]
      %v707 = vld [vmem:[%s687 + $0x98] sm:$0xf]
      %v708 = vld [vmem:[%s687 + $0xa0] sm:$0xff]
      %v709 = vld [vmem:[%s687 + $0xa8] sm:$0xff]
      %v710 = vld [vmem:[%s687 + $0xb0] sm:$0xff]
      %v711 = vld [vmem:[%s687 + $0xb8] sm:$0xf]
      %v712 = vld [vmem:[%s687 + $0xc0] sm:$0xff]
      %v713 = vld [vmem:[%s687 + $0xc8] sm:$0xff]
      %v714 = vld [vmem:[%s687 + $0xd0] sm:$0xff]
      %v715 = vld [vmem:[%s687 + $0xd8] sm:$0xf]
      %v716 = vld [vmem:[%s687 + $0xe0] sm:$0xff]
      %v717 = vld [vmem:[%s687 + $0xe8] sm:$0xff]
      %v718 = vld [vmem:[%s687 + $0xf0] sm:$0xff]
      %v719 = vld [vmem:[%s687 + $0xf8] sm:$0xf]
      %v720 = vmax.f32 %v655, %v688
      %v721 = vmax.f32 %v656, %v689
      %v722 = vmax.f32 %v657, %v690
      %v723 = vmax.f32 %v658, %v691
      %v724 = vmax.f32 %v659, %v692
      %v725 = vmax.f32 %v660, %v693
      %v726 = vmax.f32 %v661, %v694
      %v727 = vmax.f32 %v662, %v695
      %v728 = vmax.f32 %v663, %v696
      %v729 = vmax.f32 %v664, %v697
      %v730 = vmax.f32 %v665, %v698
      %v731 = vmax.f32 %v666, %v699
      %v732 = vmax.f32 %v667, %v700
      %v733 = vmax.f32 %v668, %v701
      %v734 = vmax.f32 %v669, %v702
      %v735 = vmax.f32 %v670, %v703
      %v736 = vmax.f32 %v671, %v704
      %v737 = vmax.f32 %v672, %v705
      %v738 = vmax.f32 %v673, %v706
      %v739 = vmax.f32 %v674, %v707
      %v740 = vmax.f32 %v675, %v708
      %v741 = vmax.f32 %v676, %v709
      %v742 = vmax.f32 %v677, %v710
      %v743 = vmax.f32 %v678, %v711
      %v744 = vmax.f32 %v679, %v712
      %v745 = vmax.f32 %v680, %v713
      %v746 = vmax.f32 %v681, %v714
      %v747 = vmax.f32 %v682, %v715
      %v748 = vmax.f32 %v683, %v716
      %v749 = vmax.f32 %v684, %v717
      %v750 = vmax.f32 %v685, %v718
      %v751 = vmax.f32 %v686, %v719
      %s752 = scalar_lea.vmem [#allocation2], 320
      %v753 = vld [vmem:[%s752] sm:$0xff]
      %v754 = vld [vmem:[%s752 + $0x8] sm:$0xff]
      %v755 = vld [vmem:[%s752 + $0x10] sm:$0xff]
      %v756 = vld [vmem:[%s752 + $0x18] sm:$0xf]
      %v757 = vld [vmem:[%s752 + $0x20] sm:$0xff]
      %v758 = vld [vmem:[%s752 + $0x28] sm:$0xff]
      %v759 = vld [vmem:[%s752 + $0x30] sm:$0xff]
      %v760 = vld [vmem:[%s752 + $0x38] sm:$0xf]
      %v761 = vld [vmem:[%s752 + $0x40] sm:$0xff]
      %v762 = vld [vmem:[%s752 + $0x48] sm:$0xff]
      %v763 = vld [vmem:[%s752 + $0x50] sm:$0xff]
      %v764 = vld [vmem:[%s752 + $0x58] sm:$0xf]
      %v765 = vld [vmem:[%s752 + $0x60] sm:$0xff]
      %v766 = vld [vmem:[%s752 + $0x68] sm:$0xff]
      %v767 = vld [vmem:[%s752 + $0x70] sm:$0xff]
      %v768 = vld [vmem:[%s752 + $0x78] sm:$0xf]
      %v769 = vld [vmem:[%s752 + $0x80] sm:$0xff]
      %v770 = vld [vmem:[%s752 + $0x88] sm:$0xff]
      %v771 = vld [vmem:[%s752 + $0x90] sm:$0xff]
      %v772 = vld [vmem:[%s752 + $0x98] sm:$0xf]
      %v773 = vld [vmem:[%s752 + $0xa0] sm:$0xff]
      %v774 = vld [vmem:[%s752 + $0xa8] sm:$0xff]
      %v775 = vld [vmem:[%s752 + $0xb0] sm:$0xff]
      %v776 = vld [vmem:[%s752 + $0xb8] sm:$0xf]
      %v777 = vld [vmem:[%s752 + $0xc0] sm:$0xff]
      %v778 = vld [vmem:[%s752 + $0xc8] sm:$0xff]
      %v779 = vld [vmem:[%s752 + $0xd0] sm:$0xff]
      %v780 = vld [vmem:[%s752 + $0xd8] sm:$0xf]
      %v781 = vld [vmem:[%s752 + $0xe0] sm:$0xff]
      %v782 = vld [vmem:[%s752 + $0xe8] sm:$0xff]
      %v783 = vld [vmem:[%s752 + $0xf0] sm:$0xff]
      %v784 = vld [vmem:[%s752 + $0xf8] sm:$0xf]
      %v785 = vmax.f32 %v720, %v753
      %v786 = vmax.f32 %v721, %v754
      %v787 = vmax.f32 %v722, %v755
      %v788 = vmax.f32 %v723, %v756
      %v789 = vmax.f32 %v724, %v757
      %v790 = vmax.f32 %v725, %v758
      %v791 = vmax.f32 %v726, %v759
      %v792 = vmax.f32 %v727, %v760
      %v793 = vmax.f32 %v728, %v761
      %v794 = vmax.f32 %v729, %v762
      %v795 = vmax.f32 %v730, %v763
      %v796 = vmax.f32 %v731, %v764
      %v797 = vmax.f32 %v732, %v765
      %v798 = vmax.f32 %v733, %v766
      %v799 = vmax.f32 %v734, %v767
      %v800 = vmax.f32 %v735, %v768
      %v801 = vmax.f32 %v736, %v769
      %v802 = vmax.f32 %v737, %v770
      %v803 = vmax.f32 %v738, %v771
      %v804 = vmax.f32 %v739, %v772
      %v805 = vmax.f32 %v740, %v773
      %v806 = vmax.f32 %v741, %v774
      %v807 = vmax.f32 %v742, %v775
      %v808 = vmax.f32 %v743, %v776
      %v809 = vmax.f32 %v744, %v777
      %v810 = vmax.f32 %v745, %v778
      %v811 = vmax.f32 %v746, %v779
      %v812 = vmax.f32 %v747, %v780
      %v813 = vmax.f32 %v748, %v781
      %v814 = vmax.f32 %v749, %v782
      %v815 = vmax.f32 %v750, %v783
      %v816 = vmax.f32 %v751, %v784
      %s817 = scalar_lea.vmem [#allocation2], 352
      %v818 = vld [vmem:[%s817] sm:$0xff]
      %v819 = vld [vmem:[%s817 + $0x8] sm:$0xff]
      %v820 = vld [vmem:[%s817 + $0x10] sm:$0xff]
      %v821 = vld [vmem:[%s817 + $0x18] sm:$0xf]
      %v822 = vld [vmem:[%s817 + $0x20] sm:$0xff]
      %v823 = vld [vmem:[%s817 + $0x28] sm:$0xff]
      %v824 = vld [vmem:[%s817 + $0x30] sm:$0xff]
      %v825 = vld [vmem:[%s817 + $0x38] sm:$0xf]
      %v826 = vld [vmem:[%s817 + $0x40] sm:$0xff]
      %v827 = vld [vmem:[%s817 + $0x48] sm:$0xff]
      %v828 = vld [vmem:[%s817 + $0x50] sm:$0xff]
      %v829 = vld [vmem:[%s817 + $0x58] sm:$0xf]
      %v830 = vld [vmem:[%s817 + $0x60] sm:$0xff]
      %v831 = vld [vmem:[%s817 + $0x68] sm:$0xff]
      %v832 = vld [vmem:[%s817 + $0x70] sm:$0xff]
      %v833 = vld [vmem:[%s817 + $0x78] sm:$0xf]
      %v834 = vld [vmem:[%s817 + $0x80] sm:$0xff]
      %v835 = vld [vmem:[%s817 + $0x88] sm:$0xff]
      %v836 = vld [vmem:[%s817 + $0x90] sm:$0xff]
      %v837 = vld [vmem:[%s817 + $0x98] sm:$0xf]
      %v838 = vld [vmem:[%s817 + $0xa0] sm:$0xff]
      %v839 = vld [vmem:[%s817 + $0xa8] sm:$0xff]
      %v840 = vld [vmem:[%s817 + $0xb0] sm:$0xff]
      %v841 = vld [vmem:[%s817 + $0xb8] sm:$0xf]
      %v842 = vld [vmem:[%s817 + $0xc0] sm:$0xff]
      %v843 = vld [vmem:[%s817 + $0xc8] sm:$0xff]
      %v844 = vld [vmem:[%s817 + $0xd0] sm:$0xff]
      %v845 = vld [vmem:[%s817 + $0xd8] sm:$0xf]
      %v846 = vld [vmem:[%s817 + $0xe0] sm:$0xff]
      %v847 = vld [vmem:[%s817 + $0xe8] sm:$0xff]
      %v848 = vld [vmem:[%s817 + $0xf0] sm:$0xff]
      %v849 = vld [vmem:[%s817 + $0xf8] sm:$0xf]
      %v850 = vmax.f32 %v785, %v818
      %v851 = vmax.f32 %v786, %v819
      %v852 = vmax.f32 %v787, %v820
      %v853 = vmax.f32 %v788, %v821
      %v854 = vmax.f32 %v789, %v822
      %v855 = vmax.f32 %v790, %v823
      %v856 = vmax.f32 %v791, %v824
      %v857 = vmax.f32 %v792, %v825
      %v858 = vmax.f32 %v793, %v826
      %v859 = vmax.f32 %v794, %v827
      %v860 = vmax.f32 %v795, %v828
      %v861 = vmax.f32 %v796, %v829
      %v862 = vmax.f32 %v797, %v830
      %v863 = vmax.f32 %v798, %v831
      %v864 = vmax.f32 %v799, %v832
      %v865 = vmax.f32 %v800, %v833
      %v866 = vmax.f32 %v801, %v834
      %v867 = vmax.f32 %v802, %v835
      %v868 = vmax.f32 %v803, %v836
      %v869 = vmax.f32 %v804, %v837
      %v870 = vmax.f32 %v805, %v838
      %v871 = vmax.f32 %v806, %v839
      %v872 = vmax.f32 %v807, %v840
      %v873 = vmax.f32 %v808, %v841
      %v874 = vmax.f32 %v809, %v842
      %v875 = vmax.f32 %v810, %v843
      %v876 = vmax.f32 %v811, %v844
      %v877 = vmax.f32 %v812, %v845
      %v878 = vmax.f32 %v813, %v846
      %v879 = vmax.f32 %v814, %v847
      %v880 = vmax.f32 %v815, %v848
      %v881 = vmax.f32 %v816, %v849
      %s882 = scalar_lea.vmem [#allocation2], 384
      %v883 = vld [vmem:[%s882] sm:$0xff]
      %v884 = vld [vmem:[%s882 + $0x8] sm:$0xff]
      %v885 = vld [vmem:[%s882 + $0x10] sm:$0xff]
      %v886 = vld [vmem:[%s882 + $0x18] sm:$0xf]
      %v887 = vld [vmem:[%s882 + $0x20] sm:$0xff]
      %v888 = vld [vmem:[%s882 + $0x28] sm:$0xff]
      %v889 = vld [vmem:[%s882 + $0x30] sm:$0xff]
      %v890 = vld [vmem:[%s882 + $0x38] sm:$0xf]
      %v891 = vld [vmem:[%s882 + $0x40] sm:$0xff]
      %v892 = vld [vmem:[%s882 + $0x48] sm:$0xff]
      %v893 = vld [vmem:[%s882 + $0x50] sm:$0xff]
      %v894 = vld [vmem:[%s882 + $0x58] sm:$0xf]
      %v895 = vld [vmem:[%s882 + $0x60] sm:$0xff]
      %v896 = vld [vmem:[%s882 + $0x68] sm:$0xff]
      %v897 = vld [vmem:[%s882 + $0x70] sm:$0xff]
      %v898 = vld [vmem:[%s882 + $0x78] sm:$0xf]
      %v899 = vld [vmem:[%s882 + $0x80] sm:$0xff]
      %v900 = vld [vmem:[%s882 + $0x88] sm:$0xff]
      %v901 = vld [vmem:[%s882 + $0x90] sm:$0xff]
      %v902 = vld [vmem:[%s882 + $0x98] sm:$0xf]
      %v903 = vld [vmem:[%s882 + $0xa0] sm:$0xff]
      %v904 = vld [vmem:[%s882 + $0xa8] sm:$0xff]
      %v905 = vld [vmem:[%s882 + $0xb0] sm:$0xff]
      %v906 = vld [vmem:[%s882 + $0xb8] sm:$0xf]
      %v907 = vld [vmem:[%s882 + $0xc0] sm:$0xff]
      %v908 = vld [vmem:[%s882 + $0xc8] sm:$0xff]
      %v909 = vld [vmem:[%s882 + $0xd0] sm:$0xff]
      %v910 = vld [vmem:[%s882 + $0xd8] sm:$0xf]
      %v911 = vld [vmem:[%s882 + $0xe0] sm:$0xff]
      %v912 = vld [vmem:[%s882 + $0xe8] sm:$0xff]
      %v913 = vld [vmem:[%s882 + $0xf0] sm:$0xff]
      %v914 = vld [vmem:[%s882 + $0xf8] sm:$0xf]
      %v915 = vmax.f32 %v850, %v883
      %v916 = vmax.f32 %v851, %v884
      %v917 = vmax.f32 %v852, %v885
      %v918 = vmax.f32 %v853, %v886
      %v919 = vmax.f32 %v854, %v887
      %v920 = vmax.f32 %v855, %v888
      %v921 = vmax.f32 %v856, %v889
      %v922 = vmax.f32 %v857, %v890
      %v923 = vmax.f32 %v858, %v891
      %v924 = vmax.f32 %v859, %v892
      %v925 = vmax.f32 %v860, %v893
      %v926 = vmax.f32 %v861, %v894
      %v927 = vmax.f32 %v862, %v895
      %v928 = vmax.f32 %v863, %v896
      %v929 = vmax.f32 %v864, %v897
      %v930 = vmax.f32 %v865, %v898
      %v931 = vmax.f32 %v866, %v899
      %v932 = vmax.f32 %v867, %v900
      %v933 = vmax.f32 %v868, %v901
      %v934 = vmax.f32 %v869, %v902
      %v935 = vmax.f32 %v870, %v903
      %v936 = vmax.f32 %v871, %v904
      %v937 = vmax.f32 %v872, %v905
      %v938 = vmax.f32 %v873, %v906
      %v939 = vmax.f32 %v874, %v907
      %v940 = vmax.f32 %v875, %v908
      %v941 = vmax.f32 %v876, %v909
      %v942 = vmax.f32 %v877, %v910
      %v943 = vmax.f32 %v878, %v911
      %v944 = vmax.f32 %v879, %v912
      %v945 = vmax.f32 %v880, %v913
      %v946 = vmax.f32 %v881, %v914
      %s947 = scalar_lea.vmem [#allocation3], 256
      %948 = vst.msk [vmem:[%s947] sm:$0xff] %vm151, %v915
      %949 = vst.msk [vmem:[%s947 + $0x8] sm:$0xff] %vm151, %v916
      %950 = vst.msk [vmem:[%s947 + $0x10] sm:$0xff] %vm151, %v917
      %951 = vst.msk [vmem:[%s947 + $0x18] sm:$0xf] %vm155, %v918
      %952 = vst.msk [vmem:[%s947 + $0x20] sm:$0xff] %vm151, %v919
      %953 = vst.msk [vmem:[%s947 + $0x28] sm:$0xff] %vm151, %v920
      %954 = vst.msk [vmem:[%s947 + $0x30] sm:$0xff] %vm151, %v921
      %955 = vst.msk [vmem:[%s947 + $0x38] sm:$0xf] %vm155, %v922
      %956 = vst.msk [vmem:[%s947 + $0x40] sm:$0xff] %vm151, %v923
      %957 = vst.msk [vmem:[%s947 + $0x48] sm:$0xff] %vm151, %v924
      %958 = vst.msk [vmem:[%s947 + $0x50] sm:$0xff] %vm151, %v925
      %959 = vst.msk [vmem:[%s947 + $0x58] sm:$0xf] %vm155, %v926
      %960 = vst.msk [vmem:[%s947 + $0x60] sm:$0xff] %vm151, %v927
      %961 = vst.msk [vmem:[%s947 + $0x68] sm:$0xff] %vm151, %v928
      %962 = vst.msk [vmem:[%s947 + $0x70] sm:$0xff] %vm151, %v929
      %963 = vst.msk [vmem:[%s947 + $0x78] sm:$0xf] %vm155, %v930
      %964 = vst.msk [vmem:[%s947 + $0x80] sm:$0xff] %vm151, %v931
      %965 = vst.msk [vmem:[%s947 + $0x88] sm:$0xff] %vm151, %v932
      %966 = vst.msk [vmem:[%s947 + $0x90] sm:$0xff] %vm151, %v933
      %967 = vst.msk [vmem:[%s947 + $0x98] sm:$0xf] %vm155, %v934
      %968 = vst.msk [vmem:[%s947 + $0xa0] sm:$0xff] %vm151, %v935
      %969 = vst.msk [vmem:[%s947 + $0xa8] sm:$0xff] %vm151, %v936
      %970 = vst.msk [vmem:[%s947 + $0xb0] sm:$0xff] %vm151, %v937
      %971 = vst.msk [vmem:[%s947 + $0xb8] sm:$0xf] %vm155, %v938
      %972 = vst.msk [vmem:[%s947 + $0xc0] sm:$0xff] %vm151, %v939
      %973 = vst.msk [vmem:[%s947 + $0xc8] sm:$0xff] %vm151, %v940
      %974 = vst.msk [vmem:[%s947 + $0xd0] sm:$0xff] %vm151, %v941
      %975 = vst.msk [vmem:[%s947 + $0xd8] sm:$0xf] %vm155, %v942
      %976 = vst.msk [vmem:[%s947 + $0xe0] sm:$0xff] %vm151, %v943
      %977 = vst.msk [vmem:[%s947 + $0xe8] sm:$0xff] %vm151, %v944
      %978 = vst.msk [vmem:[%s947 + $0xf0] sm:$0xff] %vm151, %v945
      %979 = vst.msk [vmem:[%s947 + $0xf8] sm:$0xf] %vm155, %v946
      %s980 = scalar_lea.vmem [#allocation2], 512
      %v981 = vld [vmem:[%s980] sm:$0xff]
      %v982 = vld [vmem:[%s980 + $0x8] sm:$0xff]
      %v983 = vld [vmem:[%s980 + $0x10] sm:$0xff]
      %v984 = vld [vmem:[%s980 + $0x18] sm:$0xf]
      %v985 = vld [vmem:[%s980 + $0x20] sm:$0xff]
      %v986 = vld [vmem:[%s980 + $0x28] sm:$0xff]
      %v987 = vld [vmem:[%s980 + $0x30] sm:$0xff]
      %v988 = vld [vmem:[%s980 + $0x38] sm:$0xf]
      %v989 = vld [vmem:[%s980 + $0x40] sm:$0xff]
      %v990 = vld [vmem:[%s980 + $0x48] sm:$0xff]
      %v991 = vld [vmem:[%s980 + $0x50] sm:$0xff]
      %v992 = vld [vmem:[%s980 + $0x58] sm:$0xf]
      %v993 = vld [vmem:[%s980 + $0x60] sm:$0xff]
      %v994 = vld [vmem:[%s980 + $0x68] sm:$0xff]
      %v995 = vld [vmem:[%s980 + $0x70] sm:$0xff]
      %v996 = vld [vmem:[%s980 + $0x78] sm:$0xf]
      %v997 = vld [vmem:[%s980 + $0x80] sm:$0xff]
      %v998 = vld [vmem:[%s980 + $0x88] sm:$0xff]
      %v999 = vld [vmem:[%s980 + $0x90] sm:$0xff]
      %v1000 = vld [vmem:[%s980 + $0x98] sm:$0xf]
      %v1001 = vld [vmem:[%s980 + $0xa0] sm:$0xff]
      %v1002 = vld [vmem:[%s980 + $0xa8] sm:$0xff]
      %v1003 = vld [vmem:[%s980 + $0xb0] sm:$0xff]
      %v1004 = vld [vmem:[%s980 + $0xb8] sm:$0xf]
      %v1005 = vld [vmem:[%s980 + $0xc0] sm:$0xff]
      %v1006 = vld [vmem:[%s980 + $0xc8] sm:$0xff]
      %v1007 = vld [vmem:[%s980 + $0xd0] sm:$0xff]
      %v1008 = vld [vmem:[%s980 + $0xd8] sm:$0xf]
      %v1009 = vld [vmem:[%s980 + $0xe0] sm:$0xff]
      %v1010 = vld [vmem:[%s980 + $0xe8] sm:$0xff]
      %v1011 = vld [vmem:[%s980 + $0xf0] sm:$0xff]
      %v1012 = vld [vmem:[%s980 + $0xf8] sm:$0xf]
      %s1013 = scalar_lea.vmem [#allocation2], 544
      %v1014 = vld [vmem:[%s1013] sm:$0xff]
      %v1015 = vld [vmem:[%s1013 + $0x8] sm:$0xff]
      %v1016 = vld [vmem:[%s1013 + $0x10] sm:$0xff]
      %v1017 = vld [vmem:[%s1013 + $0x18] sm:$0xf]
      %v1018 = vld [vmem:[%s1013 + $0x20] sm:$0xff]
      %v1019 = vld [vmem:[%s1013 + $0x28] sm:$0xff]
      %v1020 = vld [vmem:[%s1013 + $0x30] sm:$0xff]
      %v1021 = vld [vmem:[%s1013 + $0x38] sm:$0xf]
      %v1022 = vld [vmem:[%s1013 + $0x40] sm:$0xff]
      %v1023 = vld [vmem:[%s1013 + $0x48] sm:$0xff]
      %v1024 = vld [vmem:[%s1013 + $0x50] sm:$0xff]
      %v1025 = vld [vmem:[%s1013 + $0x58] sm:$0xf]
      %v1026 = vld [vmem:[%s1013 + $0x60] sm:$0xff]
      %v1027 = vld [vmem:[%s1013 + $0x68] sm:$0xff]
      %v1028 = vld [vmem:[%s1013 + $0x70] sm:$0xff]
      %v1029 = vld [vmem:[%s1013 + $0x78] sm:$0xf]
      %v1030 = vld [vmem:[%s1013 + $0x80] sm:$0xff]
      %v1031 = vld [vmem:[%s1013 + $0x88] sm:$0xff]
      %v1032 = vld [vmem:[%s1013 + $0x90] sm:$0xff]
      %v1033 = vld [vmem:[%s1013 + $0x98] sm:$0xf]
      %v1034 = vld [vmem:[%s1013 + $0xa0] sm:$0xff]
      %v1035 = vld [vmem:[%s1013 + $0xa8] sm:$0xff]
      %v1036 = vld [vmem:[%s1013 + $0xb0] sm:$0xff]
      %v1037 = vld [vmem:[%s1013 + $0xb8] sm:$0xf]
      %v1038 = vld [vmem:[%s1013 + $0xc0] sm:$0xff]
      %v1039 = vld [vmem:[%s1013 + $0xc8] sm:$0xff]
      %v1040 = vld [vmem:[%s1013 + $0xd0] sm:$0xff]
      %v1041 = vld [vmem:[%s1013 + $0xd8] sm:$0xf]
      %v1042 = vld [vmem:[%s1013 + $0xe0] sm:$0xff]
      %v1043 = vld [vmem:[%s1013 + $0xe8] sm:$0xff]
      %v1044 = vld [vmem:[%s1013 + $0xf0] sm:$0xff]
      %v1045 = vld [vmem:[%s1013 + $0xf8] sm:$0xf]
      %v1046 = vmax.f32 %v981, %v1014
      %v1047 = vmax.f32 %v982, %v1015
      %v1048 = vmax.f32 %v983, %v1016
      %v1049 = vmax.f32 %v984, %v1017
      %v1050 = vmax.f32 %v985, %v1018
      %v1051 = vmax.f32 %v986, %v1019
      %v1052 = vmax.f32 %v987, %v1020
      %v1053 = vmax.f32 %v988, %v1021
      %v1054 = vmax.f32 %v989, %v1022
      %v1055 = vmax.f32 %v990, %v1023
      %v1056 = vmax.f32 %v991, %v1024
      %v1057 = vmax.f32 %v992, %v1025
      %v1058 = vmax.f32 %v993, %v1026
      %v1059 = vmax.f32 %v994, %v1027
      %v1060 = vmax.f32 %v995, %v1028
      %v1061 = vmax.f32 %v996, %v1029
      %v1062 = vmax.f32 %v997, %v1030
      %v1063 = vmax.f32 %v998, %v1031
      %v1064 = vmax.f32 %v999, %v1032
      %v1065 = vmax.f32 %v1000, %v1033
      %v1066 = vmax.f32 %v1001, %v1034
      %v1067 = vmax.f32 %v1002, %v1035
      %v1068 = vmax.f32 %v1003, %v1036
      %v1069 = vmax.f32 %v1004, %v1037
      %v1070 = vmax.f32 %v1005, %v1038
      %v1071 = vmax.f32 %v1006, %v1039
      %v1072 = vmax.f32 %v1007, %v1040
      %v1073 = vmax.f32 %v1008, %v1041
      %v1074 = vmax.f32 %v1009, %v1042
      %v1075 = vmax.f32 %v1010, %v1043
      %v1076 = vmax.f32 %v1011, %v1044
      %v1077 = vmax.f32 %v1012, %v1045
      %s1078 = scalar_lea.vmem [#allocation2], 576
      %v1079 = vld [vmem:[%s1078] sm:$0xff]
      %v1080 = vld [vmem:[%s1078 + $0x8] sm:$0xff]
      %v1081 = vld [vmem:[%s1078 + $0x10] sm:$0xff]
      %v1082 = vld [vmem:[%s1078 + $0x18] sm:$0xf]
      %v1083 = vld [vmem:[%s1078 + $0x20] sm:$0xff]
      %v1084 = vld [vmem:[%s1078 + $0x28] sm:$0xff]
      %v1085 = vld [vmem:[%s1078 + $0x30] sm:$0xff]
      %v1086 = vld [vmem:[%s1078 + $0x38] sm:$0xf]
      %v1087 = vld [vmem:[%s1078 + $0x40] sm:$0xff]
      %v1088 = vld [vmem:[%s1078 + $0x48] sm:$0xff]
      %v1089 = vld [vmem:[%s1078 + $0x50] sm:$0xff]
      %v1090 = vld [vmem:[%s1078 + $0x58] sm:$0xf]
      %v1091 = vld [vmem:[%s1078 + $0x60] sm:$0xff]
      %v1092 = vld [vmem:[%s1078 + $0x68] sm:$0xff]
      %v1093 = vld [vmem:[%s1078 + $0x70] sm:$0xff]
      %v1094 = vld [vmem:[%s1078 + $0x78] sm:$0xf]
      %v1095 = vld [vmem:[%s1078 + $0x80] sm:$0xff]
      %v1096 = vld [vmem:[%s1078 + $0x88] sm:$0xff]
      %v1097 = vld [vmem:[%s1078 + $0x90] sm:$0xff]
      %v1098 = vld [vmem:[%s1078 + $0x98] sm:$0xf]
      %v1099 = vld [vmem:[%s1078 + $0xa0] sm:$0xff]
      %v1100 = vld [vmem:[%s1078 + $0xa8] sm:$0xff]
      %v1101 = vld [vmem:[%s1078 + $0xb0] sm:$0xff]
      %v1102 = vld [vmem:[%s1078 + $0xb8] sm:$0xf]
      %v1103 = vld [vmem:[%s1078 + $0xc0] sm:$0xff]
      %v1104 = vld [vmem:[%s1078 + $0xc8] sm:$0xff]
      %v1105 = vld [vmem:[%s1078 + $0xd0] sm:$0xff]
      %v1106 = vld [vmem:[%s1078 + $0xd8] sm:$0xf]
      %v1107 = vld [vmem:[%s1078 + $0xe0] sm:$0xff]
      %v1108 = vld [vmem:[%s1078 + $0xe8] sm:$0xff]
      %v1109 = vld [vmem:[%s1078 + $0xf0] sm:$0xff]
      %v1110 = vld [vmem:[%s1078 + $0xf8] sm:$0xf]
      %v1111 = vmax.f32 %v1046, %v1079
      %v1112 = vmax.f32 %v1047, %v1080
      %v1113 = vmax.f32 %v1048, %v1081
      %v1114 = vmax.f32 %v1049, %v1082
      %v1115 = vmax.f32 %v1050, %v1083
      %v1116 = vmax.f32 %v1051, %v1084
      %v1117 = vmax.f32 %v1052, %v1085
      %v1118 = vmax.f32 %v1053, %v1086
      %v1119 = vmax.f32 %v1054, %v1087
      %v1120 = vmax.f32 %v1055, %v1088
      %v1121 = vmax.f32 %v1056, %v1089
      %v1122 = vmax.f32 %v1057, %v1090
      %v1123 = vmax.f32 %v1058, %v1091
      %v1124 = vmax.f32 %v1059, %v1092
      %v1125 = vmax.f32 %v1060, %v1093
      %v1126 = vmax.f32 %v1061, %v1094
      %v1127 = vmax.f32 %v1062, %v1095
      %v1128 = vmax.f32 %v1063, %v1096
      %v1129 = vmax.f32 %v1064, %v1097
      %v1130 = vmax.f32 %v1065, %v1098
      %v1131 = vmax.f32 %v1066, %v1099
      %v1132 = vmax.f32 %v1067, %v1100
      %v1133 = vmax.f32 %v1068, %v1101
      %v1134 = vmax.f32 %v1069, %v1102
      %v1135 = vmax.f32 %v1070, %v1103
      %v1136 = vmax.f32 %v1071, %v1104
      %v1137 = vmax.f32 %v1072, %v1105
      %v1138 = vmax.f32 %v1073, %v1106
      %v1139 = vmax.f32 %v1074, %v1107
      %v1140 = vmax.f32 %v1075, %v1108
      %v1141 = vmax.f32 %v1076, %v1109
      %v1142 = vmax.f32 %v1077, %v1110
      %s1143 = scalar_lea.vmem [#allocation2], 608
      %v1144 = vld [vmem:[%s1143] sm:$0xff]
      %v1145 = vld [vmem:[%s1143 + $0x8] sm:$0xff]
      %v1146 = vld [vmem:[%s1143 + $0x10] sm:$0xff]
      %v1147 = vld [vmem:[%s1143 + $0x18] sm:$0xf]
      %v1148 = vld [vmem:[%s1143 + $0x20] sm:$0xff]
      %v1149 = vld [vmem:[%s1143 + $0x28] sm:$0xff]
      %v1150 = vld [vmem:[%s1143 + $0x30] sm:$0xff]
      %v1151 = vld [vmem:[%s1143 + $0x38] sm:$0xf]
      %v1152 = vld [vmem:[%s1143 + $0x40] sm:$0xff]
      %v1153 = vld [vmem:[%s1143 + $0x48] sm:$0xff]
      %v1154 = vld [vmem:[%s1143 + $0x50] sm:$0xff]
      %v1155 = vld [vmem:[%s1143 + $0x58] sm:$0xf]
      %v1156 = vld [vmem:[%s1143 + $0x60] sm:$0xff]
      %v1157 = vld [vmem:[%s1143 + $0x68] sm:$0xff]
      %v1158 = vld [vmem:[%s1143 + $0x70] sm:$0xff]
      %v1159 = vld [vmem:[%s1143 + $0x78] sm:$0xf]
      %v1160 = vld [vmem:[%s1143 + $0x80] sm:$0xff]
      %v1161 = vld [vmem:[%s1143 + $0x88] sm:$0xff]
      %v1162 = vld [vmem:[%s1143 + $0x90] sm:$0xff]
      %v1163 = vld [vmem:[%s1143 + $0x98] sm:$0xf]
      %v1164 = vld [vmem:[%s1143 + $0xa0] sm:$0xff]
      %v1165 = vld [vmem:[%s1143 + $0xa8] sm:$0xff]
      %v1166 = vld [vmem:[%s1143 + $0xb0] sm:$0xff]
      %v1167 = vld [vmem:[%s1143 + $0xb8] sm:$0xf]
      %v1168 = vld [vmem:[%s1143 + $0xc0] sm:$0xff]
      %v1169 = vld [vmem:[%s1143 + $0xc8] sm:$0xff]
      %v1170 = vld [vmem:[%s1143 + $0xd0] sm:$0xff]
      %v1171 = vld [vmem:[%s1143 + $0xd8] sm:$0xf]
      %v1172 = vld [vmem:[%s1143 + $0xe0] sm:$0xff]
      %v1173 = vld [vmem:[%s1143 + $0xe8] sm:$0xff]
      %v1174 = vld [vmem:[%s1143 + $0xf0] sm:$0xff]
      %v1175 = vld [vmem:[%s1143 + $0xf8] sm:$0xf]
      %v1176 = vmax.f32 %v1111, %v1144
      %v1177 = vmax.f32 %v1112, %v1145
      %v1178 = vmax.f32 %v1113, %v1146
      %v1179 = vmax.f32 %v1114, %v1147
      %v1180 = vmax.f32 %v1115, %v1148
      %v1181 = vmax.f32 %v1116, %v1149
      %v1182 = vmax.f32 %v1117, %v1150
      %v1183 = vmax.f32 %v1118, %v1151
      %v1184 = vmax.f32 %v1119, %v1152
      %v1185 = vmax.f32 %v1120, %v1153
      %v1186 = vmax.f32 %v1121, %v1154
      %v1187 = vmax.f32 %v1122, %v1155
      %v1188 = vmax.f32 %v1123, %v1156
      %v1189 = vmax.f32 %v1124, %v1157
      %v1190 = vmax.f32 %v1125, %v1158
      %v1191 = vmax.f32 %v1126, %v1159
      %v1192 = vmax.f32 %v1127, %v1160
      %v1193 = vmax.f32 %v1128, %v1161
      %v1194 = vmax.f32 %v1129, %v1162
      %v1195 = vmax.f32 %v1130, %v1163
      %v1196 = vmax.f32 %v1131, %v1164
      %v1197 = vmax.f32 %v1132, %v1165
      %v1198 = vmax.f32 %v1133, %v1166
      %v1199 = vmax.f32 %v1134, %v1167
      %v1200 = vmax.f32 %v1135, %v1168
      %v1201 = vmax.f32 %v1136, %v1169
      %v1202 = vmax.f32 %v1137, %v1170
      %v1203 = vmax.f32 %v1138, %v1171
      %v1204 = vmax.f32 %v1139, %v1172
      %v1205 = vmax.f32 %v1140, %v1173
      %v1206 = vmax.f32 %v1141, %v1174
      %v1207 = vmax.f32 %v1142, %v1175
      %s1208 = scalar_lea.vmem [#allocation2], 640
      %v1209 = vld [vmem:[%s1208] sm:$0xff]
      %v1210 = vld [vmem:[%s1208 + $0x8] sm:$0xff]
      %v1211 = vld [vmem:[%s1208 + $0x10] sm:$0xff]
      %v1212 = vld [vmem:[%s1208 + $0x18] sm:$0xf]
      %v1213 = vld [vmem:[%s1208 + $0x20] sm:$0xff]
      %v1214 = vld [vmem:[%s1208 + $0x28] sm:$0xff]
      %v1215 = vld [vmem:[%s1208 + $0x30] sm:$0xff]
      %v1216 = vld [vmem:[%s1208 + $0x38] sm:$0xf]
      %v1217 = vld [vmem:[%s1208 + $0x40] sm:$0xff]
      %v1218 = vld [vmem:[%s1208 + $0x48] sm:$0xff]
      %v1219 = vld [vmem:[%s1208 + $0x50] sm:$0xff]
      %v1220 = vld [vmem:[%s1208 + $0x58] sm:$0xf]
      %v1221 = vld [vmem:[%s1208 + $0x60] sm:$0xff]
      %v1222 = vld [vmem:[%s1208 + $0x68] sm:$0xff]
      %v1223 = vld [vmem:[%s1208 + $0x70] sm:$0xff]
      %v1224 = vld [vmem:[%s1208 + $0x78] sm:$0xf]
      %v1225 = vld [vmem:[%s1208 + $0x80] sm:$0xff]
      %v1226 = vld [vmem:[%s1208 + $0x88] sm:$0xff]
      %v1227 = vld [vmem:[%s1208 + $0x90] sm:$0xff]
      %v1228 = vld [vmem:[%s1208 + $0x98] sm:$0xf]
      %v1229 = vld [vmem:[%s1208 + $0xa0] sm:$0xff]
      %v1230 = vld [vmem:[%s1208 + $0xa8] sm:$0xff]
      %v1231 = vld [vmem:[%s1208 + $0xb0] sm:$0xff]
      %v1232 = vld [vmem:[%s1208 + $0xb8] sm:$0xf]
      %v1233 = vld [vmem:[%s1208 + $0xc0] sm:$0xff]
      %v1234 = vld [vmem:[%s1208 + $0xc8] sm:$0xff]
      %v1235 = vld [vmem:[%s1208 + $0xd0] sm:$0xff]
      %v1236 = vld [vmem:[%s1208 + $0xd8] sm:$0xf]
      %v1237 = vld [vmem:[%s1208 + $0xe0] sm:$0xff]
      %v1238 = vld [vmem:[%s1208 + $0xe8] sm:$0xff]
      %v1239 = vld [vmem:[%s1208 + $0xf0] sm:$0xff]
      %v1240 = vld [vmem:[%s1208 + $0xf8] sm:$0xf]
      %v1241 = vmax.f32 %v1176, %v1209
      %v1242 = vmax.f32 %v1177, %v1210
      %v1243 = vmax.f32 %v1178, %v1211
      %v1244 = vmax.f32 %v1179, %v1212
      %v1245 = vmax.f32 %v1180, %v1213
      %v1246 = vmax.f32 %v1181, %v1214
      %v1247 = vmax.f32 %v1182, %v1215
      %v1248 = vmax.f32 %v1183, %v1216
      %v1249 = vmax.f32 %v1184, %v1217
      %v1250 = vmax.f32 %v1185, %v1218
      %v1251 = vmax.f32 %v1186, %v1219
      %v1252 = vmax.f32 %v1187, %v1220
      %v1253 = vmax.f32 %v1188, %v1221
      %v1254 = vmax.f32 %v1189, %v1222
      %v1255 = vmax.f32 %v1190, %v1223
      %v1256 = vmax.f32 %v1191, %v1224
      %v1257 = vmax.f32 %v1192, %v1225
      %v1258 = vmax.f32 %v1193, %v1226
      %v1259 = vmax.f32 %v1194, %v1227
      %v1260 = vmax.f32 %v1195, %v1228
      %v1261 = vmax.f32 %v1196, %v1229
      %v1262 = vmax.f32 %v1197, %v1230
      %v1263 = vmax.f32 %v1198, %v1231
      %v1264 = vmax.f32 %v1199, %v1232
      %v1265 = vmax.f32 %v1200, %v1233
      %v1266 = vmax.f32 %v1201, %v1234
      %v1267 = vmax.f32 %v1202, %v1235
      %v1268 = vmax.f32 %v1203, %v1236
      %v1269 = vmax.f32 %v1204, %v1237
      %v1270 = vmax.f32 %v1205, %v1238
      %v1271 = vmax.f32 %v1206, %v1239
      %v1272 = vmax.f32 %v1207, %v1240
      %s1273 = scalar_lea.vmem [#allocation3], 512
      %1274 = vst.msk [vmem:[%s1273] sm:$0xff] %vm151, %v1241
      %1275 = vst.msk [vmem:[%s1273 + $0x8] sm:$0xff] %vm151, %v1242
      %1276 = vst.msk [vmem:[%s1273 + $0x10] sm:$0xff] %vm151, %v1243
      %1277 = vst.msk [vmem:[%s1273 + $0x18] sm:$0xf] %vm155, %v1244
      %1278 = vst.msk [vmem:[%s1273 + $0x20] sm:$0xff] %vm151, %v1245
      %1279 = vst.msk [vmem:[%s1273 + $0x28] sm:$0xff] %vm151, %v1246
      %1280 = vst.msk [vmem:[%s1273 + $0x30] sm:$0xff] %vm151, %v1247
      %1281 = vst.msk [vmem:[%s1273 + $0x38] sm:$0xf] %vm155, %v1248
      %1282 = vst.msk [vmem:[%s1273 + $0x40] sm:$0xff] %vm151, %v1249
      %1283 = vst.msk [vmem:[%s1273 + $0x48] sm:$0xff] %vm151, %v1250
      %1284 = vst.msk [vmem:[%s1273 + $0x50] sm:$0xff] %vm151, %v1251
      %1285 = vst.msk [vmem:[%s1273 + $0x58] sm:$0xf] %vm155, %v1252
      %1286 = vst.msk [vmem:[%s1273 + $0x60] sm:$0xff] %vm151, %v1253
      %1287 = vst.msk [vmem:[%s1273 + $0x68] sm:$0xff] %vm151, %v1254
      %1288 = vst.msk [vmem:[%s1273 + $0x70] sm:$0xff] %vm151, %v1255
      %1289 = vst.msk [vmem:[%s1273 + $0x78] sm:$0xf] %vm155, %v1256
      %1290 = vst.msk [vmem:[%s1273 + $0x80] sm:$0xff] %vm151, %v1257
      %1291 = vst.msk [vmem:[%s1273 + $0x88] sm:$0xff] %vm151, %v1258
      %1292 = vst.msk [vmem:[%s1273 + $0x90] sm:$0xff] %vm151, %v1259
      %1293 = vst.msk [vmem:[%s1273 + $0x98] sm:$0xf] %vm155, %v1260
      %1294 = vst.msk [vmem:[%s1273 + $0xa0] sm:$0xff] %vm151, %v1261
      %1295 = vst.msk [vmem:[%s1273 + $0xa8] sm:$0xff] %vm151, %v1262
      %1296 = vst.msk [vmem:[%s1273 + $0xb0] sm:$0xff] %vm151, %v1263
      %1297 = vst.msk [vmem:[%s1273 + $0xb8] sm:$0xf] %vm155, %v1264
      %1298 = vst.msk [vmem:[%s1273 + $0xc0] sm:$0xff] %vm151, %v1265
      %1299 = vst.msk [vmem:[%s1273 + $0xc8] sm:$0xff] %vm151, %v1266
      %1300 = vst.msk [vmem:[%s1273 + $0xd0] sm:$0xff] %vm151, %v1267
      %1301 = vst.msk [vmem:[%s1273 + $0xd8] sm:$0xf] %vm155, %v1268
      %1302 = vst.msk [vmem:[%s1273 + $0xe0] sm:$0xff] %vm151, %v1269
      %1303 = vst.msk [vmem:[%s1273 + $0xe8] sm:$0xff] %vm151, %v1270
      %1304 = vst.msk [vmem:[%s1273 + $0xf0] sm:$0xff] %vm151, %v1271
      %1305 = vst.msk [vmem:[%s1273 + $0xf8] sm:$0xf] %vm155, %v1272
      %v1306 = vld [vmem:[#allocation3] sm:$0xff]
      %v1307 = vld [vmem:[#allocation3 + $0x8] sm:$0xff]
      %v1308 = vld [vmem:[#allocation3 + $0x10] sm:$0xff]
      %v1309 = vld [vmem:[#allocation3 + $0x20] sm:$0xff]
      %v1310 = vld [vmem:[#allocation3 + $0x28] sm:$0xff]
      %v1311 = vld [vmem:[#allocation3 + $0x30] sm:$0xff]
      %v1312 = vld [vmem:[#allocation3 + $0x40] sm:$0xff]
      %v1313 = vld [vmem:[#allocation3 + $0x48] sm:$0xff]
      %v1314 = vld [vmem:[#allocation3 + $0x50] sm:$0xff]
      %v1315 = vld [vmem:[#allocation3 + $0x60] sm:$0xff]
      %v1316 = vld [vmem:[#allocation3 + $0x68] sm:$0xff]
      %v1317 = vld [vmem:[#allocation3 + $0x70] sm:$0xff]
      %v1318 = vld [vmem:[#allocation3 + $0x80] sm:$0xff]
      %v1319 = vld [vmem:[#allocation3 + $0x88] sm:$0xff]
      %v1320 = vld [vmem:[#allocation3 + $0x90] sm:$0xff]
      %v1321 = vld [vmem:[#allocation3 + $0xa0] sm:$0xff]
      %v1322 = vld [vmem:[#allocation3 + $0xa8] sm:$0xff]
      %v1323 = vld [vmem:[#allocation3 + $0xb0] sm:$0xff]
      %v1324 = vld [vmem:[#allocation3 + $0xc0] sm:$0xff]
      %v1325 = vld [vmem:[#allocation3 + $0xc8] sm:$0xff]
      %v1326 = vld [vmem:[#allocation3 + $0xd0] sm:$0xff]
      %v1327 = vld [vmem:[#allocation3 + $0xe0] sm:$0xff]
      %v1328 = vld [vmem:[#allocation3 + $0xe8] sm:$0xff]
      %v1329 = vld [vmem:[#allocation3 + $0xf0] sm:$0xff]
      %v1330 = vld [vmem:[#allocation3 + $0x1] sm:$0xff]
      %v1331 = vld [vmem:[#allocation3 + $0x9] sm:$0xff]
      %v1332 = vld [vmem:[#allocation3 + $0x11] sm:$0xff]
      %v1333 = vld [vmem:[#allocation3 + $0x21] sm:$0xff]
      %v1334 = vld [vmem:[#allocation3 + $0x29] sm:$0xff]
      %v1335 = vld [vmem:[#allocation3 + $0x31] sm:$0xff]
      %v1336 = vld [vmem:[#allocation3 + $0x41] sm:$0xff]
      %v1337 = vld [vmem:[#allocation3 + $0x49] sm:$0xff]
      %v1338 = vld [vmem:[#allocation3 + $0x51] sm:$0xff]
      %v1339 = vld [vmem:[#allocation3 + $0x61] sm:$0xff]
      %v1340 = vld [vmem:[#allocation3 + $0x69] sm:$0xff]
      %v1341 = vld [vmem:[#allocation3 + $0x71] sm:$0xff]
      %v1342 = vld [vmem:[#allocation3 + $0x81] sm:$0xff]
      %v1343 = vld [vmem:[#allocation3 + $0x89] sm:$0xff]
      %v1344 = vld [vmem:[#allocation3 + $0x91] sm:$0xff]
      %v1345 = vld [vmem:[#allocation3 + $0xa1] sm:$0xff]
      %v1346 = vld [vmem:[#allocation3 + $0xa9] sm:$0xff]
      %v1347 = vld [vmem:[#allocation3 + $0xb1] sm:$0xff]
      %v1348 = vld [vmem:[#allocation3 + $0xc1] sm:$0xff]
      %v1349 = vld [vmem:[#allocation3 + $0xc9] sm:$0xff]
      %v1350 = vld [vmem:[#allocation3 + $0xd1] sm:$0xff]
      %v1351 = vld [vmem:[#allocation3 + $0xe1] sm:$0xff]
      %v1352 = vld [vmem:[#allocation3 + $0xe9] sm:$0xff]
      %v1353 = vld [vmem:[#allocation3 + $0xf1] sm:$0xff]
      %v1354 = vmax.f32 %v1306, %v1330
      %v1355 = vmax.f32 %v1307, %v1331
      %v1356 = vmax.f32 %v1308, %v1332
      %v1357 = vmax.f32 %v1309, %v1333
      %v1358 = vmax.f32 %v1310, %v1334
      %v1359 = vmax.f32 %v1311, %v1335
      %v1360 = vmax.f32 %v1312, %v1336
      %v1361 = vmax.f32 %v1313, %v1337
      %v1362 = vmax.f32 %v1314, %v1338
      %v1363 = vmax.f32 %v1315, %v1339
      %v1364 = vmax.f32 %v1316, %v1340
      %v1365 = vmax.f32 %v1317, %v1341
      %v1366 = vmax.f32 %v1318, %v1342
      %v1367 = vmax.f32 %v1319, %v1343
      %v1368 = vmax.f32 %v1320, %v1344
      %v1369 = vmax.f32 %v1321, %v1345
      %v1370 = vmax.f32 %v1322, %v1346
      %v1371 = vmax.f32 %v1323, %v1347
      %v1372 = vmax.f32 %v1324, %v1348
      %v1373 = vmax.f32 %v1325, %v1349
      %v1374 = vmax.f32 %v1326, %v1350
      %v1375 = vmax.f32 %v1327, %v1351
      %v1376 = vmax.f32 %v1328, %v1352
      %v1377 = vmax.f32 %v1329, %v1353
      %v1378 = vld [vmem:[#allocation3 + $0x2] sm:$0xff]
      %v1379 = vld [vmem:[#allocation3 + $0xa] sm:$0xff]
      %v1380 = vld [vmem:[#allocation3 + $0x12] sm:$0xff]
      %v1381 = vld [vmem:[#allocation3 + $0x22] sm:$0xff]
      %v1382 = vld [vmem:[#allocation3 + $0x2a] sm:$0xff]
      %v1383 = vld [vmem:[#allocation3 + $0x32] sm:$0xff]
      %v1384 = vld [vmem:[#allocation3 + $0x42] sm:$0xff]
      %v1385 = vld [vmem:[#allocation3 + $0x4a] sm:$0xff]
      %v1386 = vld [vmem:[#allocation3 + $0x52] sm:$0xff]
      %v1387 = vld [vmem:[#allocation3 + $0x62] sm:$0xff]
      %v1388 = vld [vmem:[#allocation3 + $0x6a] sm:$0xff]
      %v1389 = vld [vmem:[#allocation3 + $0x72] sm:$0xff]
      %v1390 = vld [vmem:[#allocation3 + $0x82] sm:$0xff]
      %v1391 = vld [vmem:[#allocation3 + $0x8a] sm:$0xff]
      %v1392 = vld [vmem:[#allocation3 + $0x92] sm:$0xff]
      %v1393 = vld [vmem:[#allocation3 + $0xa2] sm:$0xff]
      %v1394 = vld [vmem:[#allocation3 + $0xaa] sm:$0xff]
      %v1395 = vld [vmem:[#allocation3 + $0xb2] sm:$0xff]
      %v1396 = vld [vmem:[#allocation3 + $0xc2] sm:$0xff]
      %v1397 = vld [vmem:[#allocation3 + $0xca] sm:$0xff]
      %v1398 = vld [vmem:[#allocation3 + $0xd2] sm:$0xff]
      %v1399 = vld [vmem:[#allocation3 + $0xe2] sm:$0xff]
      %v1400 = vld [vmem:[#allocation3 + $0xea] sm:$0xff]
      %v1401 = vld [vmem:[#allocation3 + $0xf2] sm:$0xff]
      %v1402 = vmax.f32 %v1354, %v1378
      %v1403 = vmax.f32 %v1355, %v1379
      %v1404 = vmax.f32 %v1356, %v1380
      %v1405 = vmax.f32 %v1357, %v1381
      %v1406 = vmax.f32 %v1358, %v1382
      %v1407 = vmax.f32 %v1359, %v1383
      %v1408 = vmax.f32 %v1360, %v1384
      %v1409 = vmax.f32 %v1361, %v1385
      %v1410 = vmax.f32 %v1362, %v1386
      %v1411 = vmax.f32 %v1363, %v1387
      %v1412 = vmax.f32 %v1364, %v1388
      %v1413 = vmax.f32 %v1365, %v1389
      %v1414 = vmax.f32 %v1366, %v1390
      %v1415 = vmax.f32 %v1367, %v1391
      %v1416 = vmax.f32 %v1368, %v1392
      %v1417 = vmax.f32 %v1369, %v1393
      %v1418 = vmax.f32 %v1370, %v1394
      %v1419 = vmax.f32 %v1371, %v1395
      %v1420 = vmax.f32 %v1372, %v1396
      %v1421 = vmax.f32 %v1373, %v1397
      %v1422 = vmax.f32 %v1374, %v1398
      %v1423 = vmax.f32 %v1375, %v1399
      %v1424 = vmax.f32 %v1376, %v1400
      %v1425 = vmax.f32 %v1377, %v1401
      %v1426 = vld [vmem:[#allocation3 + $0x3] sm:$0xff]
      %v1427 = vld [vmem:[#allocation3 + $0xb] sm:$0xff]
      %v1428 = vld [vmem:[#allocation3 + $0x13] sm:$0xff]
      %v1429 = vld [vmem:[#allocation3 + $0x23] sm:$0xff]
      %v1430 = vld [vmem:[#allocation3 + $0x2b] sm:$0xff]
      %v1431 = vld [vmem:[#allocation3 + $0x33] sm:$0xff]
      %v1432 = vld [vmem:[#allocation3 + $0x43] sm:$0xff]
      %v1433 = vld [vmem:[#allocation3 + $0x4b] sm:$0xff]
      %v1434 = vld [vmem:[#allocation3 + $0x53] sm:$0xff]
      %v1435 = vld [vmem:[#allocation3 + $0x63] sm:$0xff]
      %v1436 = vld [vmem:[#allocation3 + $0x6b] sm:$0xff]
      %v1437 = vld [vmem:[#allocation3 + $0x73] sm:$0xff]
      %v1438 = vld [vmem:[#allocation3 + $0x83] sm:$0xff]
      %v1439 = vld [vmem:[#allocation3 + $0x8b] sm:$0xff]
      %v1440 = vld [vmem:[#allocation3 + $0x93] sm:$0xff]
      %v1441 = vld [vmem:[#allocation3 + $0xa3] sm:$0xff]
      %v1442 = vld [vmem:[#allocation3 + $0xab] sm:$0xff]
      %v1443 = vld [vmem:[#allocation3 + $0xb3] sm:$0xff]
      %v1444 = vld [vmem:[#allocation3 + $0xc3] sm:$0xff]
      %v1445 = vld [vmem:[#allocation3 + $0xcb] sm:$0xff]
      %v1446 = vld [vmem:[#allocation3 + $0xd3] sm:$0xff]
      %v1447 = vld [vmem:[#allocation3 + $0xe3] sm:$0xff]
      %v1448 = vld [vmem:[#allocation3 + $0xeb] sm:$0xff]
      %v1449 = vld [vmem:[#allocation3 + $0xf3] sm:$0xff]
      %v1450 = vmax.f32 %v1402, %v1426
      %v1451 = vmax.f32 %v1403, %v1427
      %v1452 = vmax.f32 %v1404, %v1428
      %v1453 = vmax.f32 %v1405, %v1429
      %v1454 = vmax.f32 %v1406, %v1430
      %v1455 = vmax.f32 %v1407, %v1431
      %v1456 = vmax.f32 %v1408, %v1432
      %v1457 = vmax.f32 %v1409, %v1433
      %v1458 = vmax.f32 %v1410, %v1434
      %v1459 = vmax.f32 %v1411, %v1435
      %v1460 = vmax.f32 %v1412, %v1436
      %v1461 = vmax.f32 %v1413, %v1437
      %v1462 = vmax.f32 %v1414, %v1438
      %v1463 = vmax.f32 %v1415, %v1439
      %v1464 = vmax.f32 %v1416, %v1440
      %v1465 = vmax.f32 %v1417, %v1441
      %v1466 = vmax.f32 %v1418, %v1442
      %v1467 = vmax.f32 %v1419, %v1443
      %v1468 = vmax.f32 %v1420, %v1444
      %v1469 = vmax.f32 %v1421, %v1445
      %v1470 = vmax.f32 %v1422, %v1446
      %v1471 = vmax.f32 %v1423, %v1447
      %v1472 = vmax.f32 %v1424, %v1448
      %v1473 = vmax.f32 %v1425, %v1449
      %v1474 = vld [vmem:[#allocation3 + $0x4] sm:$0xff]
      %v1475 = vld [vmem:[#allocation3 + $0xc] sm:$0xff]
      %v1476 = vld [vmem:[#allocation3 + $0x14] sm:$0xff]
      %v1477 = vld [vmem:[#allocation3 + $0x24] sm:$0xff]
      %v1478 = vld [vmem:[#allocation3 + $0x2c] sm:$0xff]
      %v1479 = vld [vmem:[#allocation3 + $0x34] sm:$0xff]
      %v1480 = vld [vmem:[#allocation3 + $0x44] sm:$0xff]
      %v1481 = vld [vmem:[#allocation3 + $0x4c] sm:$0xff]
      %v1482 = vld [vmem:[#allocation3 + $0x54] sm:$0xff]
      %v1483 = vld [vmem:[#allocation3 + $0x64] sm:$0xff]
      %v1484 = vld [vmem:[#allocation3 + $0x6c] sm:$0xff]
      %v1485 = vld [vmem:[#allocation3 + $0x74] sm:$0xff]
      %v1486 = vld [vmem:[#allocation3 + $0x84] sm:$0xff]
      %v1487 = vld [vmem:[#allocation3 + $0x8c] sm:$0xff]
      %v1488 = vld [vmem:[#allocation3 + $0x94] sm:$0xff]
      %v1489 = vld [vmem:[#allocation3 + $0xa4] sm:$0xff]
      %v1490 = vld [vmem:[#allocation3 + $0xac] sm:$0xff]
      %v1491 = vld [vmem:[#allocation3 + $0xb4] sm:$0xff]
      %v1492 = vld [vmem:[#allocation3 + $0xc4] sm:$0xff]
      %v1493 = vld [vmem:[#allocation3 + $0xcc] sm:$0xff]
      %v1494 = vld [vmem:[#allocation3 + $0xd4] sm:$0xff]
      %v1495 = vld [vmem:[#allocation3 + $0xe4] sm:$0xff]
      %v1496 = vld [vmem:[#allocation3 + $0xec] sm:$0xff]
      %v1497 = vld [vmem:[#allocation3 + $0xf4] sm:$0xff]
      %v1498 = vmax.f32 %v1450, %v1474
      %v1499 = vmax.f32 %v1451, %v1475
      %v1500 = vmax.f32 %v1452, %v1476
      %v1501 = vmax.f32 %v1453, %v1477
      %v1502 = vmax.f32 %v1454, %v1478
      %v1503 = vmax.f32 %v1455, %v1479
      %v1504 = vmax.f32 %v1456, %v1480
      %v1505 = vmax.f32 %v1457, %v1481
      %v1506 = vmax.f32 %v1458, %v1482
      %v1507 = vmax.f32 %v1459, %v1483
      %v1508 = vmax.f32 %v1460, %v1484
      %v1509 = vmax.f32 %v1461, %v1485
      %v1510 = vmax.f32 %v1462, %v1486
      %v1511 = vmax.f32 %v1463, %v1487
      %v1512 = vmax.f32 %v1464, %v1488
      %v1513 = vmax.f32 %v1465, %v1489
      %v1514 = vmax.f32 %v1466, %v1490
      %v1515 = vmax.f32 %v1467, %v1491
      %v1516 = vmax.f32 %v1468, %v1492
      %v1517 = vmax.f32 %v1469, %v1493
      %v1518 = vmax.f32 %v1470, %v1494
      %v1519 = vmax.f32 %v1471, %v1495
      %v1520 = vmax.f32 %v1472, %v1496
      %v1521 = vmax.f32 %v1473, %v1497
      %1522 = vst.msk [vmem:[#allocation4] sm:$0xff] %vm151, %v1498
      %1523 = vst.msk [vmem:[#allocation4 + $0x8] sm:$0xff] %vm151, %v1499
      %1524 = vst.msk [vmem:[#allocation4 + $0x10] sm:$0xff] %vm151, %v1500
      %1525 = vst.msk [vmem:[#allocation4 + $0x18] sm:$0xff] %vm151, %v1501
      %1526 = vst.msk [vmem:[#allocation4 + $0x20] sm:$0xff] %vm151, %v1502
      %1527 = vst.msk [vmem:[#allocation4 + $0x28] sm:$0xff] %vm151, %v1503
      %1528 = vst.msk [vmem:[#allocation4 + $0x30] sm:$0xff] %vm151, %v1504
      %1529 = vst.msk [vmem:[#allocation4 + $0x38] sm:$0xff] %vm151, %v1505
      %1530 = vst.msk [vmem:[#allocation4 + $0x40] sm:$0xff] %vm151, %v1506
      %1531 = vst.msk [vmem:[#allocation4 + $0x48] sm:$0xff] %vm151, %v1507
      %1532 = vst.msk [vmem:[#allocation4 + $0x50] sm:$0xff] %vm151, %v1508
      %1533 = vst.msk [vmem:[#allocation4 + $0x58] sm:$0xff] %vm151, %v1509
      %1534 = vst.msk [vmem:[#allocation4 + $0x60] sm:$0xff] %vm151, %v1510
      %1535 = vst.msk [vmem:[#allocation4 + $0x68] sm:$0xff] %vm151, %v1511
      %1536 = vst.msk [vmem:[#allocation4 + $0x70] sm:$0xff] %vm151, %v1512
      %1537 = vst.msk [vmem:[#allocation4 + $0x78] sm:$0xff] %vm151, %v1513
      %1538 = vst.msk [vmem:[#allocation4 + $0x80] sm:$0xff] %vm151, %v1514
      %1539 = vst.msk [vmem:[#allocation4 + $0x88] sm:$0xff] %vm151, %v1515
      %1540 = vst.msk [vmem:[#allocation4 + $0x90] sm:$0xff] %vm151, %v1516
      %1541 = vst.msk [vmem:[#allocation4 + $0x98] sm:$0xff] %vm151, %v1517
      %1542 = vst.msk [vmem:[#allocation4 + $0xa0] sm:$0xff] %vm151, %v1518
      %1543 = vst.msk [vmem:[#allocation4 + $0xa8] sm:$0xff] %vm151, %v1519
      %1544 = vst.msk [vmem:[#allocation4 + $0xb0] sm:$0xff] %vm151, %v1520
      %1545 = vst.msk [vmem:[#allocation4 + $0xb8] sm:$0xff] %vm151, %v1521
      %v1546 = vld [vmem:[%s947] sm:$0xff]
      %v1547 = vld [vmem:[%s947 + $0x8] sm:$0xff]
      %v1548 = vld [vmem:[%s947 + $0x10] sm:$0xff]
      %v1549 = vld [vmem:[%s947 + $0x20] sm:$0xff]
      %v1550 = vld [vmem:[%s947 + $0x28] sm:$0xff]
      %v1551 = vld [vmem:[%s947 + $0x30] sm:$0xff]
      %v1552 = vld [vmem:[%s947 + $0x40] sm:$0xff]
      %v1553 = vld [vmem:[%s947 + $0x48] sm:$0xff]
      %v1554 = vld [vmem:[%s947 + $0x50] sm:$0xff]
      %v1555 = vld [vmem:[%s947 + $0x60] sm:$0xff]
      %v1556 = vld [vmem:[%s947 + $0x68] sm:$0xff]
      %v1557 = vld [vmem:[%s947 + $0x70] sm:$0xff]
      %v1558 = vld [vmem:[%s947 + $0x80] sm:$0xff]
      %v1559 = vld [vmem:[%s947 + $0x88] sm:$0xff]
      %v1560 = vld [vmem:[%s947 + $0x90] sm:$0xff]
      %v1561 = vld [vmem:[%s947 + $0xa0] sm:$0xff]
      %v1562 = vld [vmem:[%s947 + $0xa8] sm:$0xff]
      %v1563 = vld [vmem:[%s947 + $0xb0] sm:$0xff]
      %v1564 = vld [vmem:[%s947 + $0xc0] sm:$0xff]
      %v1565 = vld [vmem:[%s947 + $0xc8] sm:$0xff]
      %v1566 = vld [vmem:[%s947 + $0xd0] sm:$0xff]
      %v1567 = vld [vmem:[%s947 + $0xe0] sm:$0xff]
      %v1568 = vld [vmem:[%s947 + $0xe8] sm:$0xff]
      %v1569 = vld [vmem:[%s947 + $0xf0] sm:$0xff]
      %v1570 = vld [vmem:[%s947 + $0x1] sm:$0xff]
      %v1571 = vld [vmem:[%s947 + $0x9] sm:$0xff]
      %v1572 = vld [vmem:[%s947 + $0x11] sm:$0xff]
      %v1573 = vld [vmem:[%s947 + $0x21] sm:$0xff]
      %v1574 = vld [vmem:[%s947 + $0x29] sm:$0xff]
      %v1575 = vld [vmem:[%s947 + $0x31] sm:$0xff]
      %v1576 = vld [vmem:[%s947 + $0x41] sm:$0xff]
      %v1577 = vld [vmem:[%s947 + $0x49] sm:$0xff]
      %v1578 = vld [vmem:[%s947 + $0x51] sm:$0xff]
      %v1579 = vld [vmem:[%s947 + $0x61] sm:$0xff]
      %v1580 = vld [vmem:[%s947 + $0x69] sm:$0xff]
      %v1581 = vld [vmem:[%s947 + $0x71] sm:$0xff]
      %v1582 = vld [vmem:[%s947 + $0x81] sm:$0xff]
      %v1583 = vld [vmem:[%s947 + $0x89] sm:$0xff]
      %v1584 = vld [vmem:[%s947 + $0x91] sm:$0xff]
      %v1585 = vld [vmem:[%s947 + $0xa1] sm:$0xff]
      %v1586 = vld [vmem:[%s947 + $0xa9] sm:$0xff]
      %v1587 = vld [vmem:[%s947 + $0xb1] sm:$0xff]
      %v1588 = vld [vmem:[%s947 + $0xc1] sm:$0xff]
      %v1589 = vld [vmem:[%s947 + $0xc9] sm:$0xff]
      %v1590 = vld [vmem:[%s947 + $0xd1] sm:$0xff]
      %v1591 = vld [vmem:[%s947 + $0xe1] sm:$0xff]
      %v1592 = vld [vmem:[%s947 + $0xe9] sm:$0xff]
      %v1593 = vld [vmem:[%s947 + $0xf1] sm:$0xff]
      %v1594 = vmax.f32 %v1546, %v1570
      %v1595 = vmax.f32 %v1547, %v1571
      %v1596 = vmax.f32 %v1548, %v1572
      %v1597 = vmax.f32 %v1549, %v1573
      %v1598 = vmax.f32 %v1550, %v1574
      %v1599 = vmax.f32 %v1551, %v1575
      %v1600 = vmax.f32 %v1552, %v1576
      %v1601 = vmax.f32 %v1553, %v1577
      %v1602 = vmax.f32 %v1554, %v1578
      %v1603 = vmax.f32 %v1555, %v1579
      %v1604 = vmax.f32 %v1556, %v1580
      %v1605 = vmax.f32 %v1557, %v1581
      %v1606 = vmax.f32 %v1558, %v1582
      %v1607 = vmax.f32 %v1559, %v1583
      %v1608 = vmax.f32 %v1560, %v1584
      %v1609 = vmax.f32 %v1561, %v1585
      %v1610 = vmax.f32 %v1562, %v1586
      %v1611 = vmax.f32 %v1563, %v1587
      %v1612 = vmax.f32 %v1564, %v1588
      %v1613 = vmax.f32 %v1565, %v1589
      %v1614 = vmax.f32 %v1566, %v1590
      %v1615 = vmax.f32 %v1567, %v1591
      %v1616 = vmax.f32 %v1568, %v1592
      %v1617 = vmax.f32 %v1569, %v1593
      %v1618 = vld [vmem:[%s947 + $0x2] sm:$0xff]
      %v1619 = vld [vmem:[%s947 + $0xa] sm:$0xff]
      %v1620 = vld [vmem:[%s947 + $0x12] sm:$0xff]
      %v1621 = vld [vmem:[%s947 + $0x22] sm:$0xff]
      %v1622 = vld [vmem:[%s947 + $0x2a] sm:$0xff]
      %v1623 = vld [vmem:[%s947 + $0x32] sm:$0xff]
      %v1624 = vld [vmem:[%s947 + $0x42] sm:$0xff]
      %v1625 = vld [vmem:[%s947 + $0x4a] sm:$0xff]
      %v1626 = vld [vmem:[%s947 + $0x52] sm:$0xff]
      %v1627 = vld [vmem:[%s947 + $0x62] sm:$0xff]
      %v1628 = vld [vmem:[%s947 + $0x6a] sm:$0xff]
      %v1629 = vld [vmem:[%s947 + $0x72] sm:$0xff]
      %v1630 = vld [vmem:[%s947 + $0x82] sm:$0xff]
      %v1631 = vld [vmem:[%s947 + $0x8a] sm:$0xff]
      %v1632 = vld [vmem:[%s947 + $0x92] sm:$0xff]
      %v1633 = vld [vmem:[%s947 + $0xa2] sm:$0xff]
      %v1634 = vld [vmem:[%s947 + $0xaa] sm:$0xff]
      %v1635 = vld [vmem:[%s947 + $0xb2] sm:$0xff]
      %v1636 = vld [vmem:[%s947 + $0xc2] sm:$0xff]
      %v1637 = vld [vmem:[%s947 + $0xca] sm:$0xff]
      %v1638 = vld [vmem:[%s947 + $0xd2] sm:$0xff]
      %v1639 = vld [vmem:[%s947 + $0xe2] sm:$0xff]
      %v1640 = vld [vmem:[%s947 + $0xea] sm:$0xff]
      %v1641 = vld [vmem:[%s947 + $0xf2] sm:$0xff]
      %v1642 = vmax.f32 %v1594, %v1618
      %v1643 = vmax.f32 %v1595, %v1619
      %v1644 = vmax.f32 %v1596, %v1620
      %v1645 = vmax.f32 %v1597, %v1621
      %v1646 = vmax.f32 %v1598, %v1622
      %v1647 = vmax.f32 %v1599, %v1623
      %v1648 = vmax.f32 %v1600, %v1624
      %v1649 = vmax.f32 %v1601, %v1625
      %v1650 = vmax.f32 %v1602, %v1626
      %v1651 = vmax.f32 %v1603, %v1627
      %v1652 = vmax.f32 %v1604, %v1628
      %v1653 = vmax.f32 %v1605, %v1629
      %v1654 = vmax.f32 %v1606, %v1630
      %v1655 = vmax.f32 %v1607, %v1631
      %v1656 = vmax.f32 %v1608, %v1632
      %v1657 = vmax.f32 %v1609, %v1633
      %v1658 = vmax.f32 %v1610, %v1634
      %v1659 = vmax.f32 %v1611, %v1635
      %v1660 = vmax.f32 %v1612, %v1636
      %v1661 = vmax.f32 %v1613, %v1637
      %v1662 = vmax.f32 %v1614, %v1638
      %v1663 = vmax.f32 %v1615, %v1639
      %v1664 = vmax.f32 %v1616, %v1640
      %v1665 = vmax.f32 %v1617, %v1641
      %v1666 = vld [vmem:[%s947 + $0x3] sm:$0xff]
      %v1667 = vld [vmem:[%s947 + $0xb] sm:$0xff]
      %v1668 = vld [vmem:[%s947 + $0x13] sm:$0xff]
      %v1669 = vld [vmem:[%s947 + $0x23] sm:$0xff]
      %v1670 = vld [vmem:[%s947 + $0x2b] sm:$0xff]
      %v1671 = vld [vmem:[%s947 + $0x33] sm:$0xff]
      %v1672 = vld [vmem:[%s947 + $0x43] sm:$0xff]
      %v1673 = vld [vmem:[%s947 + $0x4b] sm:$0xff]
      %v1674 = vld [vmem:[%s947 + $0x53] sm:$0xff]
      %v1675 = vld [vmem:[%s947 + $0x63] sm:$0xff]
      %v1676 = vld [vmem:[%s947 + $0x6b] sm:$0xff]
      %v1677 = vld [vmem:[%s947 + $0x73] sm:$0xff]
      %v1678 = vld [vmem:[%s947 + $0x83] sm:$0xff]
      %v1679 = vld [vmem:[%s947 + $0x8b] sm:$0xff]
      %v1680 = vld [vmem:[%s947 + $0x93] sm:$0xff]
      %v1681 = vld [vmem:[%s947 + $0xa3] sm:$0xff]
      %v1682 = vld [vmem:[%s947 + $0xab] sm:$0xff]
      %v1683 = vld [vmem:[%s947 + $0xb3] sm:$0xff]
      %v1684 = vld [vmem:[%s947 + $0xc3] sm:$0xff]
      %v1685 = vld [vmem:[%s947 + $0xcb] sm:$0xff]
      %v1686 = vld [vmem:[%s947 + $0xd3] sm:$0xff]
      %v1687 = vld [vmem:[%s947 + $0xe3] sm:$0xff]
      %v1688 = vld [vmem:[%s947 + $0xeb] sm:$0xff]
      %v1689 = vld [vmem:[%s947 + $0xf3] sm:$0xff]
      %v1690 = vmax.f32 %v1642, %v1666
      %v1691 = vmax.f32 %v1643, %v1667
      %v1692 = vmax.f32 %v1644, %v1668
      %v1693 = vmax.f32 %v1645, %v1669
      %v1694 = vmax.f32 %v1646, %v1670
      %v1695 = vmax.f32 %v1647, %v1671
      %v1696 = vmax.f32 %v1648, %v1672
      %v1697 = vmax.f32 %v1649, %v1673
      %v1698 = vmax.f32 %v1650, %v1674
      %v1699 = vmax.f32 %v1651, %v1675
      %v1700 = vmax.f32 %v1652, %v1676
      %v1701 = vmax.f32 %v1653, %v1677
      %v1702 = vmax.f32 %v1654, %v1678
      %v1703 = vmax.f32 %v1655, %v1679
      %v1704 = vmax.f32 %v1656, %v1680
      %v1705 = vmax.f32 %v1657, %v1681
      %v1706 = vmax.f32 %v1658, %v1682
      %v1707 = vmax.f32 %v1659, %v1683
      %v1708 = vmax.f32 %v1660, %v1684
      %v1709 = vmax.f32 %v1661, %v1685
      %v1710 = vmax.f32 %v1662, %v1686
      %v1711 = vmax.f32 %v1663, %v1687
      %v1712 = vmax.f32 %v1664, %v1688
      %v1713 = vmax.f32 %v1665, %v1689
      %v1714 = vld [vmem:[%s947 + $0x4] sm:$0xff]
      %v1715 = vld [vmem:[%s947 + $0xc] sm:$0xff]
      %v1716 = vld [vmem:[%s947 + $0x14] sm:$0xff]
      %v1717 = vld [vmem:[%s947 + $0x24] sm:$0xff]
      %v1718 = vld [vmem:[%s947 + $0x2c] sm:$0xff]
      %v1719 = vld [vmem:[%s947 + $0x34] sm:$0xff]
      %v1720 = vld [vmem:[%s947 + $0x44] sm:$0xff]
      %v1721 = vld [vmem:[%s947 + $0x4c] sm:$0xff]
      %v1722 = vld [vmem:[%s947 + $0x54] sm:$0xff]
      %v1723 = vld [vmem:[%s947 + $0x64] sm:$0xff]
      %v1724 = vld [vmem:[%s947 + $0x6c] sm:$0xff]
      %v1725 = vld [vmem:[%s947 + $0x74] sm:$0xff]
      %v1726 = vld [vmem:[%s947 + $0x84] sm:$0xff]
      %v1727 = vld [vmem:[%s947 + $0x8c] sm:$0xff]
      %v1728 = vld [vmem:[%s947 + $0x94] sm:$0xff]
      %v1729 = vld [vmem:[%s947 + $0xa4] sm:$0xff]
      %v1730 = vld [vmem:[%s947 + $0xac] sm:$0xff]
      %v1731 = vld [vmem:[%s947 + $0xb4] sm:$0xff]
      %v1732 = vld [vmem:[%s947 + $0xc4] sm:$0xff]
      %v1733 = vld [vmem:[%s947 + $0xcc] sm:$0xff]
      %v1734 = vld [vmem:[%s947 + $0xd4] sm:$0xff]
      %v1735 = vld [vmem:[%s947 + $0xe4] sm:$0xff]
      %v1736 = vld [vmem:[%s947 + $0xec] sm:$0xff]
      %v1737 = vld [vmem:[%s947 + $0xf4] sm:$0xff]
      %v1738 = vmax.f32 %v1690, %v1714
      %v1739 = vmax.f32 %v1691, %v1715
      %v1740 = vmax.f32 %v1692, %v1716
      %v1741 = vmax.f32 %v1693, %v1717
      %v1742 = vmax.f32 %v1694, %v1718
      %v1743 = vmax.f32 %v1695, %v1719
      %v1744 = vmax.f32 %v1696, %v1720
      %v1745 = vmax.f32 %v1697, %v1721
      %v1746 = vmax.f32 %v1698, %v1722
      %v1747 = vmax.f32 %v1699, %v1723
      %v1748 = vmax.f32 %v1700, %v1724
      %v1749 = vmax.f32 %v1701, %v1725
      %v1750 = vmax.f32 %v1702, %v1726
      %v1751 = vmax.f32 %v1703, %v1727
      %v1752 = vmax.f32 %v1704, %v1728
      %v1753 = vmax.f32 %v1705, %v1729
      %v1754 = vmax.f32 %v1706, %v1730
      %v1755 = vmax.f32 %v1707, %v1731
      %v1756 = vmax.f32 %v1708, %v1732
      %v1757 = vmax.f32 %v1709, %v1733
      %v1758 = vmax.f32 %v1710, %v1734
      %v1759 = vmax.f32 %v1711, %v1735
      %v1760 = vmax.f32 %v1712, %v1736
      %v1761 = vmax.f32 %v1713, %v1737
      %s1762 = scalar_lea.vmem [#allocation4], 192
      %1763 = vst.msk [vmem:[%s1762] sm:$0xff] %vm151, %v1738
      %1764 = vst.msk [vmem:[%s1762 + $0x8] sm:$0xff] %vm151, %v1739
      %1765 = vst.msk [vmem:[%s1762 + $0x10] sm:$0xff] %vm151, %v1740
      %1766 = vst.msk [vmem:[%s1762 + $0x18] sm:$0xff] %vm151, %v1741
      %1767 = vst.msk [vmem:[%s1762 + $0x20] sm:$0xff] %vm151, %v1742
      %1768 = vst.msk [vmem:[%s1762 + $0x28] sm:$0xff] %vm151, %v1743
      %1769 = vst.msk [vmem:[%s1762 + $0x30] sm:$0xff] %vm151, %v1744
      %1770 = vst.msk [vmem:[%s1762 + $0x38] sm:$0xff] %vm151, %v1745
      %1771 = vst.msk [vmem:[%s1762 + $0x40] sm:$0xff] %vm151, %v1746
      %1772 = vst.msk [vmem:[%s1762 + $0x48] sm:$0xff] %vm151, %v1747
      %1773 = vst.msk [vmem:[%s1762 + $0x50] sm:$0xff] %vm151, %v1748
      %1774 = vst.msk [vmem:[%s1762 + $0x58] sm:$0xff] %vm151, %v1749
      %1775 = vst.msk [vmem:[%s1762 + $0x60] sm:$0xff] %vm151, %v1750
      %1776 = vst.msk [vmem:[%s1762 + $0x68] sm:$0xff] %vm151, %v1751
      %1777 = vst.msk [vmem:[%s1762 + $0x70] sm:$0xff] %vm151, %v1752
      %1778 = vst.msk [vmem:[%s1762 + $0x78] sm:$0xff] %vm151, %v1753
      %1779 = vst.msk [vmem:[%s1762 + $0x80] sm:$0xff] %vm151, %v1754
      %1780 = vst.msk [vmem:[%s1762 + $0x88] sm:$0xff] %vm151, %v1755
      %1781 = vst.msk [vmem:[%s1762 + $0x90] sm:$0xff] %vm151, %v1756
      %1782 = vst.msk [vmem:[%s1762 + $0x98] sm:$0xff] %vm151, %v1757
      %1783 = vst.msk [vmem:[%s1762 + $0xa0] sm:$0xff] %vm151, %v1758
      %1784 = vst.msk [vmem:[%s1762 + $0xa8] sm:$0xff] %vm151, %v1759
      %1785 = vst.msk [vmem:[%s1762 + $0xb0] sm:$0xff] %vm151, %v1760
      %1786 = vst.msk [vmem:[%s1762 + $0xb8] sm:$0xff] %vm151, %v1761
      %v1787 = vld [vmem:[%s1273] sm:$0xff]
      %v1788 = vld [vmem:[%s1273 + $0x8] sm:$0xff]
      %v1789 = vld [vmem:[%s1273 + $0x10] sm:$0xff]
      %v1790 = vld [vmem:[%s1273 + $0x20] sm:$0xff]
      %v1791 = vld [vmem:[%s1273 + $0x28] sm:$0xff]
      %v1792 = vld [vmem:[%s1273 + $0x30] sm:$0xff]
      %v1793 = vld [vmem:[%s1273 + $0x40] sm:$0xff]
      %v1794 = vld [vmem:[%s1273 + $0x48] sm:$0xff]
      %v1795 = vld [vmem:[%s1273 + $0x50] sm:$0xff]
      %v1796 = vld [vmem:[%s1273 + $0x60] sm:$0xff]
      %v1797 = vld [vmem:[%s1273 + $0x68] sm:$0xff]
      %v1798 = vld [vmem:[%s1273 + $0x70] sm:$0xff]
      %v1799 = vld [vmem:[%s1273 + $0x80] sm:$0xff]
      %v1800 = vld [vmem:[%s1273 + $0x88] sm:$0xff]
      %v1801 = vld [vmem:[%s1273 + $0x90] sm:$0xff]
      %v1802 = vld [vmem:[%s1273 + $0xa0] sm:$0xff]
      %v1803 = vld [vmem:[%s1273 + $0xa8] sm:$0xff]
      %v1804 = vld [vmem:[%s1273 + $0xb0] sm:$0xff]
      %v1805 = vld [vmem:[%s1273 + $0xc0] sm:$0xff]
      %v1806 = vld [vmem:[%s1273 + $0xc8] sm:$0xff]
      %v1807 = vld [vmem:[%s1273 + $0xd0] sm:$0xff]
      %v1808 = vld [vmem:[%s1273 + $0xe0] sm:$0xff]
      %v1809 = vld [vmem:[%s1273 + $0xe8] sm:$0xff]
      %v1810 = vld [vmem:[%s1273 + $0xf0] sm:$0xff]
      %v1811 = vld [vmem:[%s1273 + $0x1] sm:$0xff]
      %v1812 = vld [vmem:[%s1273 + $0x9] sm:$0xff]
      %v1813 = vld [vmem:[%s1273 + $0x11] sm:$0xff]
      %v1814 = vld [vmem:[%s1273 + $0x21] sm:$0xff]
      %v1815 = vld [vmem:[%s1273 + $0x29] sm:$0xff]
      %v1816 = vld [vmem:[%s1273 + $0x31] sm:$0xff]
      %v1817 = vld [vmem:[%s1273 + $0x41] sm:$0xff]
      %v1818 = vld [vmem:[%s1273 + $0x49] sm:$0xff]
      %v1819 = vld [vmem:[%s1273 + $0x51] sm:$0xff]
      %v1820 = vld [vmem:[%s1273 + $0x61] sm:$0xff]
      %v1821 = vld [vmem:[%s1273 + $0x69] sm:$0xff]
      %v1822 = vld [vmem:[%s1273 + $0x71] sm:$0xff]
      %v1823 = vld [vmem:[%s1273 + $0x81] sm:$0xff]
      %v1824 = vld [vmem:[%s1273 + $0x89] sm:$0xff]
      %v1825 = vld [vmem:[%s1273 + $0x91] sm:$0xff]
      %v1826 = vld [vmem:[%s1273 + $0xa1] sm:$0xff]
      %v1827 = vld [vmem:[%s1273 + $0xa9] sm:$0xff]
      %v1828 = vld [vmem:[%s1273 + $0xb1] sm:$0xff]
      %v1829 = vld [vmem:[%s1273 + $0xc1] sm:$0xff]
      %v1830 = vld [vmem:[%s1273 + $0xc9] sm:$0xff]
      %v1831 = vld [vmem:[%s1273 + $0xd1] sm:$0xff]
      %v1832 = vld [vmem:[%s1273 + $0xe1] sm:$0xff]
      %v1833 = vld [vmem:[%s1273 + $0xe9] sm:$0xff]
      %v1834 = vld [vmem:[%s1273 + $0xf1] sm:$0xff]
      %v1835 = vmax.f32 %v1787, %v1811
      %v1836 = vmax.f32 %v1788, %v1812
      %v1837 = vmax.f32 %v1789, %v1813
      %v1838 = vmax.f32 %v1790, %v1814
      %v1839 = vmax.f32 %v1791, %v1815
      %v1840 = vmax.f32 %v1792, %v1816
      %v1841 = vmax.f32 %v1793, %v1817
      %v1842 = vmax.f32 %v1794, %v1818
      %v1843 = vmax.f32 %v1795, %v1819
      %v1844 = vmax.f32 %v1796, %v1820
      %v1845 = vmax.f32 %v1797, %v1821
      %v1846 = vmax.f32 %v1798, %v1822
      %v1847 = vmax.f32 %v1799, %v1823
      %v1848 = vmax.f32 %v1800, %v1824
      %v1849 = vmax.f32 %v1801, %v1825
      %v1850 = vmax.f32 %v1802, %v1826
      %v1851 = vmax.f32 %v1803, %v1827
      %v1852 = vmax.f32 %v1804, %v1828
      %v1853 = vmax.f32 %v1805, %v1829
      %v1854 = vmax.f32 %v1806, %v1830
      %v1855 = vmax.f32 %v1807, %v1831
      %v1856 = vmax.f32 %v1808, %v1832
      %v1857 = vmax.f32 %v1809, %v1833
      %v1858 = vmax.f32 %v1810, %v1834
      %v1859 = vld [vmem:[%s1273 + $0x2] sm:$0xff]
      %v1860 = vld [vmem:[%s1273 + $0xa] sm:$0xff]
      %v1861 = vld [vmem:[%s1273 + $0x12] sm:$0xff]
      %v1862 = vld [vmem:[%s1273 + $0x22] sm:$0xff]
      %v1863 = vld [vmem:[%s1273 + $0x2a] sm:$0xff]
      %v1864 = vld [vmem:[%s1273 + $0x32] sm:$0xff]
      %v1865 = vld [vmem:[%s1273 + $0x42] sm:$0xff]
      %v1866 = vld [vmem:[%s1273 + $0x4a] sm:$0xff]
      %v1867 = vld [vmem:[%s1273 + $0x52] sm:$0xff]
      %v1868 = vld [vmem:[%s1273 + $0x62] sm:$0xff]
      %v1869 = vld [vmem:[%s1273 + $0x6a] sm:$0xff]
      %v1870 = vld [vmem:[%s1273 + $0x72] sm:$0xff]
      %v1871 = vld [vmem:[%s1273 + $0x82] sm:$0xff]
      %v1872 = vld [vmem:[%s1273 + $0x8a] sm:$0xff]
      %v1873 = vld [vmem:[%s1273 + $0x92] sm:$0xff]
      %v1874 = vld [vmem:[%s1273 + $0xa2] sm:$0xff]
      %v1875 = vld [vmem:[%s1273 + $0xaa] sm:$0xff]
      %v1876 = vld [vmem:[%s1273 + $0xb2] sm:$0xff]
      %v1877 = vld [vmem:[%s1273 + $0xc2] sm:$0xff]
      %v1878 = vld [vmem:[%s1273 + $0xca] sm:$0xff]
      %v1879 = vld [vmem:[%s1273 + $0xd2] sm:$0xff]
      %v1880 = vld [vmem:[%s1273 + $0xe2] sm:$0xff]
      %v1881 = vld [vmem:[%s1273 + $0xea] sm:$0xff]
      %v1882 = vld [vmem:[%s1273 + $0xf2] sm:$0xff]
      %v1883 = vmax.f32 %v1835, %v1859
      %v1884 = vmax.f32 %v1836, %v1860
      %v1885 = vmax.f32 %v1837, %v1861
      %v1886 = vmax.f32 %v1838, %v1862
      %v1887 = vmax.f32 %v1839, %v1863
      %v1888 = vmax.f32 %v1840, %v1864
      %v1889 = vmax.f32 %v1841, %v1865
      %v1890 = vmax.f32 %v1842, %v1866
      %v1891 = vmax.f32 %v1843, %v1867
      %v1892 = vmax.f32 %v1844, %v1868
      %v1893 = vmax.f32 %v1845, %v1869
      %v1894 = vmax.f32 %v1846, %v1870
      %v1895 = vmax.f32 %v1847, %v1871
      %v1896 = vmax.f32 %v1848, %v1872
      %v1897 = vmax.f32 %v1849, %v1873
      %v1898 = vmax.f32 %v1850, %v1874
      %v1899 = vmax.f32 %v1851, %v1875
      %v1900 = vmax.f32 %v1852, %v1876
      %v1901 = vmax.f32 %v1853, %v1877
      %v1902 = vmax.f32 %v1854, %v1878
      %v1903 = vmax.f32 %v1855, %v1879
      %v1904 = vmax.f32 %v1856, %v1880
      %v1905 = vmax.f32 %v1857, %v1881
      %v1906 = vmax.f32 %v1858, %v1882
      %v1907 = vld [vmem:[%s1273 + $0x3] sm:$0xff]
      %v1908 = vld [vmem:[%s1273 + $0xb] sm:$0xff]
      %v1909 = vld [vmem:[%s1273 + $0x13] sm:$0xff]
      %v1910 = vld [vmem:[%s1273 + $0x23] sm:$0xff]
      %v1911 = vld [vmem:[%s1273 + $0x2b] sm:$0xff]
      %v1912 = vld [vmem:[%s1273 + $0x33] sm:$0xff]
      %v1913 = vld [vmem:[%s1273 + $0x43] sm:$0xff]
      %v1914 = vld [vmem:[%s1273 + $0x4b] sm:$0xff]
      %v1915 = vld [vmem:[%s1273 + $0x53] sm:$0xff]
      %v1916 = vld [vmem:[%s1273 + $0x63] sm:$0xff]
      %v1917 = vld [vmem:[%s1273 + $0x6b] sm:$0xff]
      %v1918 = vld [vmem:[%s1273 + $0x73] sm:$0xff]
      %v1919 = vld [vmem:[%s1273 + $0x83] sm:$0xff]
      %v1920 = vld [vmem:[%s1273 + $0x8b] sm:$0xff]
      %v1921 = vld [vmem:[%s1273 + $0x93] sm:$0xff]
      %v1922 = vld [vmem:[%s1273 + $0xa3] sm:$0xff]
      %v1923 = vld [vmem:[%s1273 + $0xab] sm:$0xff]
      %v1924 = vld [vmem:[%s1273 + $0xb3] sm:$0xff]
      %v1925 = vld [vmem:[%s1273 + $0xc3] sm:$0xff]
      %v1926 = vld [vmem:[%s1273 + $0xcb] sm:$0xff]
      %v1927 = vld [vmem:[%s1273 + $0xd3] sm:$0xff]
      %v1928 = vld [vmem:[%s1273 + $0xe3] sm:$0xff]
      %v1929 = vld [vmem:[%s1273 + $0xeb] sm:$0xff]
      %v1930 = vld [vmem:[%s1273 + $0xf3] sm:$0xff]
      %v1931 = vmax.f32 %v1883, %v1907
      %v1932 = vmax.f32 %v1884, %v1908
      %v1933 = vmax.f32 %v1885, %v1909
      %v1934 = vmax.f32 %v1886, %v1910
      %v1935 = vmax.f32 %v1887, %v1911
      %v1936 = vmax.f32 %v1888, %v1912
      %v1937 = vmax.f32 %v1889, %v1913
      %v1938 = vmax.f32 %v1890, %v1914
      %v1939 = vmax.f32 %v1891, %v1915
      %v1940 = vmax.f32 %v1892, %v1916
      %v1941 = vmax.f32 %v1893, %v1917
      %v1942 = vmax.f32 %v1894, %v1918
      %v1943 = vmax.f32 %v1895, %v1919
      %v1944 = vmax.f32 %v1896, %v1920
      %v1945 = vmax.f32 %v1897, %v1921
      %v1946 = vmax.f32 %v1898, %v1922
      %v1947 = vmax.f32 %v1899, %v1923
      %v1948 = vmax.f32 %v1900, %v1924
      %v1949 = vmax.f32 %v1901, %v1925
      %v1950 = vmax.f32 %v1902, %v1926
      %v1951 = vmax.f32 %v1903, %v1927
      %v1952 = vmax.f32 %v1904, %v1928
      %v1953 = vmax.f32 %v1905, %v1929
      %v1954 = vmax.f32 %v1906, %v1930
      %v1955 = vld [vmem:[%s1273 + $0x4] sm:$0xff]
      %v1956 = vld [vmem:[%s1273 + $0xc] sm:$0xff]
      %v1957 = vld [vmem:[%s1273 + $0x14] sm:$0xff]
      %v1958 = vld [vmem:[%s1273 + $0x24] sm:$0xff]
      %v1959 = vld [vmem:[%s1273 + $0x2c] sm:$0xff]
      %v1960 = vld [vmem:[%s1273 + $0x34] sm:$0xff]
      %v1961 = vld [vmem:[%s1273 + $0x44] sm:$0xff]
      %v1962 = vld [vmem:[%s1273 + $0x4c] sm:$0xff]
      %v1963 = vld [vmem:[%s1273 + $0x54] sm:$0xff]
      %v1964 = vld [vmem:[%s1273 + $0x64] sm:$0xff]
      %v1965 = vld [vmem:[%s1273 + $0x6c] sm:$0xff]
      %v1966 = vld [vmem:[%s1273 + $0x74] sm:$0xff]
      %v1967 = vld [vmem:[%s1273 + $0x84] sm:$0xff]
      %v1968 = vld [vmem:[%s1273 + $0x8c] sm:$0xff]
      %v1969 = vld [vmem:[%s1273 + $0x94] sm:$0xff]
      %v1970 = vld [vmem:[%s1273 + $0xa4] sm:$0xff]
      %v1971 = vld [vmem:[%s1273 + $0xac] sm:$0xff]
      %v1972 = vld [vmem:[%s1273 + $0xb4] sm:$0xff]
      %v1973 = vld [vmem:[%s1273 + $0xc4] sm:$0xff]
      %v1974 = vld [vmem:[%s1273 + $0xcc] sm:$0xff]
      %v1975 = vld [vmem:[%s1273 + $0xd4] sm:$0xff]
      %v1976 = vld [vmem:[%s1273 + $0xe4] sm:$0xff]
      %v1977 = vld [vmem:[%s1273 + $0xec] sm:$0xff]
      %v1978 = vld [vmem:[%s1273 + $0xf4] sm:$0xff]
      %v1979 = vmax.f32 %v1931, %v1955
      %v1980 = vmax.f32 %v1932, %v1956
      %v1981 = vmax.f32 %v1933, %v1957
      %v1982 = vmax.f32 %v1934, %v1958
      %v1983 = vmax.f32 %v1935, %v1959
      %v1984 = vmax.f32 %v1936, %v1960
      %v1985 = vmax.f32 %v1937, %v1961
      %v1986 = vmax.f32 %v1938, %v1962
      %v1987 = vmax.f32 %v1939, %v1963
      %v1988 = vmax.f32 %v1940, %v1964
      %v1989 = vmax.f32 %v1941, %v1965
      %v1990 = vmax.f32 %v1942, %v1966
      %v1991 = vmax.f32 %v1943, %v1967
      %v1992 = vmax.f32 %v1944, %v1968
      %v1993 = vmax.f32 %v1945, %v1969
      %v1994 = vmax.f32 %v1946, %v1970
      %v1995 = vmax.f32 %v1947, %v1971
      %v1996 = vmax.f32 %v1948, %v1972
      %v1997 = vmax.f32 %v1949, %v1973
      %v1998 = vmax.f32 %v1950, %v1974
      %v1999 = vmax.f32 %v1951, %v1975
      %v2000 = vmax.f32 %v1952, %v1976
      %v2001 = vmax.f32 %v1953, %v1977
      %v2002 = vmax.f32 %v1954, %v1978
      %s2003 = scalar_lea.vmem [#allocation4], 384
      %2004 = vst.msk [vmem:[%s2003] sm:$0xff] %vm151, %v1979
      %2005 = vst.msk [vmem:[%s2003 + $0x8] sm:$0xff] %vm151, %v1980
      %2006 = vst.msk [vmem:[%s2003 + $0x10] sm:$0xff] %vm151, %v1981
      %2007 = vst.msk [vmem:[%s2003 + $0x18] sm:$0xff] %vm151, %v1982
      %2008 = vst.msk [vmem:[%s2003 + $0x20] sm:$0xff] %vm151, %v1983
      %2009 = vst.msk [vmem:[%s2003 + $0x28] sm:$0xff] %vm151, %v1984
      %2010 = vst.msk [vmem:[%s2003 + $0x30] sm:$0xff] %vm151, %v1985
      %2011 = vst.msk [vmem:[%s2003 + $0x38] sm:$0xff] %vm151, %v1986
      %2012 = vst.msk [vmem:[%s2003 + $0x40] sm:$0xff] %vm151, %v1987
      %2013 = vst.msk [vmem:[%s2003 + $0x48] sm:$0xff] %vm151, %v1988
      %2014 = vst.msk [vmem:[%s2003 + $0x50] sm:$0xff] %vm151, %v1989
      %2015 = vst.msk [vmem:[%s2003 + $0x58] sm:$0xff] %vm151, %v1990
      %2016 = vst.msk [vmem:[%s2003 + $0x60] sm:$0xff] %vm151, %v1991
      %2017 = vst.msk [vmem:[%s2003 + $0x68] sm:$0xff] %vm151, %v1992
      %2018 = vst.msk [vmem:[%s2003 + $0x70] sm:$0xff] %vm151, %v1993
      %2019 = vst.msk [vmem:[%s2003 + $0x78] sm:$0xff] %vm151, %v1994
      %2020 = vst.msk [vmem:[%s2003 + $0x80] sm:$0xff] %vm151, %v1995
      %2021 = vst.msk [vmem:[%s2003 + $0x88] sm:$0xff] %vm151, %v1996
      %2022 = vst.msk [vmem:[%s2003 + $0x90] sm:$0xff] %vm151, %v1997
      %2023 = vst.msk [vmem:[%s2003 + $0x98] sm:$0xff] %vm151, %v1998
      %2024 = vst.msk [vmem:[%s2003 + $0xa0] sm:$0xff] %vm151, %v1999
      %2025 = vst.msk [vmem:[%s2003 + $0xa8] sm:$0xff] %vm151, %v2000
      %2026 = vst.msk [vmem:[%s2003 + $0xb0] sm:$0xff] %vm151, %v2001
      %2027 = vst.msk [vmem:[%s2003 + $0xb8] sm:$0xff] %vm151, %v2002
      %s2028 = scalar_lea.vmem [#allocation4], 96
      %v2029 = vld [vmem:[%s2028 + $0x4] sm:$0xff]
      %v2030 = vld [vmem:[%s2028 + $0xc] sm:$0xff]
      %v2031 = vld [vmem:[%s2028 + $0x1c] sm:$0xff]
      %v2032 = vld [vmem:[%s2028 + $0x24] sm:$0xff]
      %v2033 = vld [vmem:[%s2028 + $0x34] sm:$0xff]
      %v2034 = vld [vmem:[%s2028 + $0x3c] sm:$0xff]
      %v2035 = vld [vmem:[%s2028 + $0x4c] sm:$0xff]
      %v2036 = vld [vmem:[%s2028 + $0x54] sm:$0xff]
      %v2037 = vld [vmem:[%s2028 + $0x64] sm:$0xff]
      %v2038 = vld [vmem:[%s2028 + $0x6c] sm:$0xff]
      %v2039 = vld [vmem:[%s2028 + $0x7c] sm:$0xff]
      %v2040 = vld [vmem:[%s2028 + $0x84] sm:$0xff]
      %v2041 = vld [vmem:[%s2028 + $0x94] sm:$0xff]
      %v2042 = vld [vmem:[%s2028 + $0x9c] sm:$0xff]
      %v2043 = vld [vmem:[%s2028 + $0xac] sm:$0xff]
      %v2044 = vld [vmem:[%s2028 + $0xb4] sm:$0xff]
      %s2045 = scalar_lea.vmem %s149, 512
      %2046 = vst.msk [vmem:[%s2045] sm:$0xff] %vm151, %v2029
      %2047 = vst.msk [vmem:[%s2045 + $0x8] sm:$0xff] %vm151, %v2030
      %2048 = vst.msk [vmem:[%s2045 + $0x10] sm:$0xff] %vm151, %v2031
      %2049 = vst.msk [vmem:[%s2045 + $0x18] sm:$0xff] %vm151, %v2032
      %2050 = vst.msk [vmem:[%s2045 + $0x20] sm:$0xff] %vm151, %v2033
      %2051 = vst.msk [vmem:[%s2045 + $0x28] sm:$0xff] %vm151, %v2034
      %2052 = vst.msk [vmem:[%s2045 + $0x30] sm:$0xff] %vm151, %v2035
      %2053 = vst.msk [vmem:[%s2045 + $0x38] sm:$0xff] %vm151, %v2036
      %2054 = vst.msk [vmem:[%s2045 + $0x40] sm:$0xff] %vm151, %v2037
      %2055 = vst.msk [vmem:[%s2045 + $0x48] sm:$0xff] %vm151, %v2038
      %2056 = vst.msk [vmem:[%s2045 + $0x50] sm:$0xff] %vm151, %v2039
      %2057 = vst.msk [vmem:[%s2045 + $0x58] sm:$0xff] %vm151, %v2040
      %2058 = vst.msk [vmem:[%s2045 + $0x60] sm:$0xff] %vm151, %v2041
      %2059 = vst.msk [vmem:[%s2045 + $0x68] sm:$0xff] %vm151, %v2042
      %2060 = vst.msk [vmem:[%s2045 + $0x70] sm:$0xff] %vm151, %v2043
      %2061 = vst.msk [vmem:[%s2045 + $0x78] sm:$0xff] %vm151, %v2044
      %s2062 = scalar_lea.vmem [#allocation4], 48
      %v2063 = vld [vmem:[%s2062 + $0x2] sm:$0xff]
      %v2064 = vld [vmem:[%s2062 + $0xa] sm:$0xff]
      %v2065 = vld [vmem:[%s2062 + $0x1a] sm:$0xff]
      %v2066 = vld [vmem:[%s2062 + $0x22] sm:$0xff]
      %v2067 = vld [vmem:[%s2062 + $0x32] sm:$0xff]
      %v2068 = vld [vmem:[%s2062 + $0x3a] sm:$0xff]
      %v2069 = vld [vmem:[%s2062 + $0x4a] sm:$0xff]
      %v2070 = vld [vmem:[%s2062 + $0x52] sm:$0xff]
      %v2071 = vld [vmem:[%s2062 + $0x62] sm:$0xff]
      %v2072 = vld [vmem:[%s2062 + $0x6a] sm:$0xff]
      %v2073 = vld [vmem:[%s2062 + $0x7a] sm:$0xff]
      %v2074 = vld [vmem:[%s2062 + $0x82] sm:$0xff]
      %v2075 = vld [vmem:[%s2062 + $0x92] sm:$0xff]
      %v2076 = vld [vmem:[%s2062 + $0x9a] sm:$0xff]
      %v2077 = vld [vmem:[%s2062 + $0xaa] sm:$0xff]
      %v2078 = vld [vmem:[%s2062 + $0xb2] sm:$0xff]
      %v2079 = vld [vmem:[%s2062 + $0x6] sm:$0xff]
      %v2080 = vld [vmem:[%s2062 + $0xe] sm:$0xff]
      %v2081 = vld [vmem:[%s2062 + $0x1e] sm:$0xff]
      %v2082 = vld [vmem:[%s2062 + $0x26] sm:$0xff]
      %v2083 = vld [vmem:[%s2062 + $0x36] sm:$0xff]
      %v2084 = vld [vmem:[%s2062 + $0x3e] sm:$0xff]
      %v2085 = vld [vmem:[%s2062 + $0x4e] sm:$0xff]
      %v2086 = vld [vmem:[%s2062 + $0x56] sm:$0xff]
      %v2087 = vld [vmem:[%s2062 + $0x66] sm:$0xff]
      %v2088 = vld [vmem:[%s2062 + $0x6e] sm:$0xff]
      %v2089 = vld [vmem:[%s2062 + $0x7e] sm:$0xff]
      %v2090 = vld [vmem:[%s2062 + $0x86] sm:$0xff]
      %v2091 = vld [vmem:[%s2062 + $0x96] sm:$0xff]
      %v2092 = vld [vmem:[%s2062 + $0x9e] sm:$0xff]
      %v2093 = vld [vmem:[%s2062 + $0xae] sm:$0xff]
      %v2094 = vld [vmem:[%s2062 + $0xb6] sm:$0xff]
      %v2095 = vmax.f32 %v2063, %v2079
      %v2096 = vmax.f32 %v2064, %v2080
      %v2097 = vmax.f32 %v2065, %v2081
      %v2098 = vmax.f32 %v2066, %v2082
      %v2099 = vmax.f32 %v2067, %v2083
      %v2100 = vmax.f32 %v2068, %v2084
      %v2101 = vmax.f32 %v2069, %v2085
      %v2102 = vmax.f32 %v2070, %v2086
      %v2103 = vmax.f32 %v2071, %v2087
      %v2104 = vmax.f32 %v2072, %v2088
      %v2105 = vmax.f32 %v2073, %v2089
      %v2106 = vmax.f32 %v2074, %v2090
      %v2107 = vmax.f32 %v2075, %v2091
      %v2108 = vmax.f32 %v2076, %v2092
      %v2109 = vmax.f32 %v2077, %v2093
      %v2110 = vmax.f32 %v2078, %v2094
      %s2111 = scalar_lea.vmem [#allocation4], 144
      %v2112 = vld [vmem:[%s2111 + $0x2] sm:$0xff]
      %v2113 = vld [vmem:[%s2111 + $0xa] sm:$0xff]
      %v2114 = vld [vmem:[%s2111 + $0x1a] sm:$0xff]
      %v2115 = vld [vmem:[%s2111 + $0x22] sm:$0xff]
      %v2116 = vld [vmem:[%s2111 + $0x32] sm:$0xff]
      %v2117 = vld [vmem:[%s2111 + $0x3a] sm:$0xff]
      %v2118 = vld [vmem:[%s2111 + $0x4a] sm:$0xff]
      %v2119 = vld [vmem:[%s2111 + $0x52] sm:$0xff]
      %v2120 = vld [vmem:[%s2111 + $0x62] sm:$0xff]
      %v2121 = vld [vmem:[%s2111 + $0x6a] sm:$0xff]
      %v2122 = vld [vmem:[%s2111 + $0x7a] sm:$0xff]
      %v2123 = vld [vmem:[%s2111 + $0x82] sm:$0xff]
      %v2124 = vld [vmem:[%s2111 + $0x92] sm:$0xff]
      %v2125 = vld [vmem:[%s2111 + $0x9a] sm:$0xff]
      %v2126 = vld [vmem:[%s2111 + $0xaa] sm:$0xff]
      %v2127 = vld [vmem:[%s2111 + $0xb2] sm:$0xff]
      %v2128 = vmax.f32 %v2095, %v2112
      %v2129 = vmax.f32 %v2096, %v2113
      %v2130 = vmax.f32 %v2097, %v2114
      %v2131 = vmax.f32 %v2098, %v2115
      %v2132 = vmax.f32 %v2099, %v2116
      %v2133 = vmax.f32 %v2100, %v2117
      %v2134 = vmax.f32 %v2101, %v2118
      %v2135 = vmax.f32 %v2102, %v2119
      %v2136 = vmax.f32 %v2103, %v2120
      %v2137 = vmax.f32 %v2104, %v2121
      %v2138 = vmax.f32 %v2105, %v2122
      %v2139 = vmax.f32 %v2106, %v2123
      %v2140 = vmax.f32 %v2107, %v2124
      %v2141 = vmax.f32 %v2108, %v2125
      %v2142 = vmax.f32 %v2109, %v2126
      %v2143 = vmax.f32 %v2110, %v2127
      %v2144 = vld [vmem:[%s2111 + $0x6] sm:$0xff]
      %v2145 = vld [vmem:[%s2111 + $0xe] sm:$0xff]
      %v2146 = vld [vmem:[%s2111 + $0x1e] sm:$0xff]
      %v2147 = vld [vmem:[%s2111 + $0x26] sm:$0xff]
      %v2148 = vld [vmem:[%s2111 + $0x36] sm:$0xff]
      %v2149 = vld [vmem:[%s2111 + $0x3e] sm:$0xff]
      %v2150 = vld [vmem:[%s2111 + $0x4e] sm:$0xff]
      %v2151 = vld [vmem:[%s2111 + $0x56] sm:$0xff]
      %v2152 = vld [vmem:[%s2111 + $0x66] sm:$0xff]
      %v2153 = vld [vmem:[%s2111 + $0x6e] sm:$0xff]
      %v2154 = vld [vmem:[%s2111 + $0x7e] sm:$0xff]
      %v2155 = vld [vmem:[%s2111 + $0x86] sm:$0xff]
      %v2156 = vld [vmem:[%s2111 + $0x96] sm:$0xff]
      %v2157 = vld [vmem:[%s2111 + $0x9e] sm:$0xff]
      %v2158 = vld [vmem:[%s2111 + $0xae] sm:$0xff]
      %v2159 = vld [vmem:[%s2111 + $0xb6] sm:$0xff]
      %v2160 = vmax.f32 %v2128, %v2144
      %v2161 = vmax.f32 %v2129, %v2145
      %v2162 = vmax.f32 %v2130, %v2146
      %v2163 = vmax.f32 %v2131, %v2147
      %v2164 = vmax.f32 %v2132, %v2148
      %v2165 = vmax.f32 %v2133, %v2149
      %v2166 = vmax.f32 %v2134, %v2150
      %v2167 = vmax.f32 %v2135, %v2151
      %v2168 = vmax.f32 %v2136, %v2152
      %v2169 = vmax.f32 %v2137, %v2153
      %v2170 = vmax.f32 %v2138, %v2154
      %v2171 = vmax.f32 %v2139, %v2155
      %v2172 = vmax.f32 %v2140, %v2156
      %v2173 = vmax.f32 %v2141, %v2157
      %v2174 = vmax.f32 %v2142, %v2158
      %v2175 = vmax.f32 %v2143, %v2159
      %s2176 = scalar_lea.vmem %s149, 256
      %2177 = vst.msk [vmem:[%s2176] sm:$0xff] %vm151, %v2160
      %2178 = vst.msk [vmem:[%s2176 + $0x8] sm:$0xff] %vm151, %v2161
      %2179 = vst.msk [vmem:[%s2176 + $0x10] sm:$0xff] %vm151, %v2162
      %2180 = vst.msk [vmem:[%s2176 + $0x18] sm:$0xff] %vm151, %v2163
      %2181 = vst.msk [vmem:[%s2176 + $0x20] sm:$0xff] %vm151, %v2164
      %2182 = vst.msk [vmem:[%s2176 + $0x28] sm:$0xff] %vm151, %v2165
      %2183 = vst.msk [vmem:[%s2176 + $0x30] sm:$0xff] %vm151, %v2166
      %2184 = vst.msk [vmem:[%s2176 + $0x38] sm:$0xff] %vm151, %v2167
      %2185 = vst.msk [vmem:[%s2176 + $0x40] sm:$0xff] %vm151, %v2168
      %2186 = vst.msk [vmem:[%s2176 + $0x48] sm:$0xff] %vm151, %v2169
      %2187 = vst.msk [vmem:[%s2176 + $0x50] sm:$0xff] %vm151, %v2170
      %2188 = vst.msk [vmem:[%s2176 + $0x58] sm:$0xff] %vm151, %v2171
      %2189 = vst.msk [vmem:[%s2176 + $0x60] sm:$0xff] %vm151, %v2172
      %2190 = vst.msk [vmem:[%s2176 + $0x68] sm:$0xff] %vm151, %v2173
      %2191 = vst.msk [vmem:[%s2176 + $0x70] sm:$0xff] %vm151, %v2174
      %2192 = vst.msk [vmem:[%s2176 + $0x78] sm:$0xff] %vm151, %v2175
      %v2193 = vld [vmem:[#allocation4] sm:$0xff]
      %v2194 = vld [vmem:[#allocation4 + $0x8] sm:$0xff]
      %v2195 = vld [vmem:[#allocation4 + $0x18] sm:$0xff]
      %v2196 = vld [vmem:[#allocation4 + $0x20] sm:$0xff]
      %v2197 = vld [vmem:[#allocation4 + $0x30] sm:$0xff]
      %v2198 = vld [vmem:[#allocation4 + $0x38] sm:$0xff]
      %v2199 = vld [vmem:[#allocation4 + $0x48] sm:$0xff]
      %v2200 = vld [vmem:[#allocation4 + $0x50] sm:$0xff]
      %v2201 = vld [vmem:[#allocation4 + $0x60] sm:$0xff]
      %v2202 = vld [vmem:[#allocation4 + $0x68] sm:$0xff]
      %v2203 = vld [vmem:[#allocation4 + $0x78] sm:$0xff]
      %v2204 = vld [vmem:[#allocation4 + $0x80] sm:$0xff]
      %v2205 = vld [vmem:[#allocation4 + $0x90] sm:$0xff]
      %v2206 = vld [vmem:[#allocation4 + $0x98] sm:$0xff]
      %v2207 = vld [vmem:[#allocation4 + $0xa8] sm:$0xff]
      %v2208 = vld [vmem:[#allocation4 + $0xb0] sm:$0xff]
      %v2209 = vld [vmem:[#allocation4 + $0x4] sm:$0xff]
      %v2210 = vld [vmem:[#allocation4 + $0xc] sm:$0xff]
      %v2211 = vld [vmem:[#allocation4 + $0x1c] sm:$0xff]
      %v2212 = vld [vmem:[#allocation4 + $0x24] sm:$0xff]
      %v2213 = vld [vmem:[#allocation4 + $0x34] sm:$0xff]
      %v2214 = vld [vmem:[#allocation4 + $0x3c] sm:$0xff]
      %v2215 = vld [vmem:[#allocation4 + $0x4c] sm:$0xff]
      %v2216 = vld [vmem:[#allocation4 + $0x54] sm:$0xff]
      %v2217 = vld [vmem:[#allocation4 + $0x64] sm:$0xff]
      %v2218 = vld [vmem:[#allocation4 + $0x6c] sm:$0xff]
      %v2219 = vld [vmem:[#allocation4 + $0x7c] sm:$0xff]
      %v2220 = vld [vmem:[#allocation4 + $0x84] sm:$0xff]
      %v2221 = vld [vmem:[#allocation4 + $0x94] sm:$0xff]
      %v2222 = vld [vmem:[#allocation4 + $0x9c] sm:$0xff]
      %v2223 = vld [vmem:[#allocation4 + $0xac] sm:$0xff]
      %v2224 = vld [vmem:[#allocation4 + $0xb4] sm:$0xff]
      %v2225 = vmax.f32 %v2193, %v2209
      %v2226 = vmax.f32 %v2194, %v2210
      %v2227 = vmax.f32 %v2195, %v2211
      %v2228 = vmax.f32 %v2196, %v2212
      %v2229 = vmax.f32 %v2197, %v2213
      %v2230 = vmax.f32 %v2198, %v2214
      %v2231 = vmax.f32 %v2199, %v2215
      %v2232 = vmax.f32 %v2200, %v2216
      %v2233 = vmax.f32 %v2201, %v2217
      %v2234 = vmax.f32 %v2202, %v2218
      %v2235 = vmax.f32 %v2203, %v2219
      %v2236 = vmax.f32 %v2204, %v2220
      %v2237 = vmax.f32 %v2205, %v2221
      %v2238 = vmax.f32 %v2206, %v2222
      %v2239 = vmax.f32 %v2207, %v2223
      %v2240 = vmax.f32 %v2208, %v2224
      %v2241 = vld [vmem:[#allocation4 + $0x10] sm:$0xff]
      %v2242 = vld [vmem:[#allocation4 + $0x28] sm:$0xff]
      %v2243 = vld [vmem:[#allocation4 + $0x40] sm:$0xff]
      %v2244 = vld [vmem:[#allocation4 + $0x58] sm:$0xff]
      %v2245 = vld [vmem:[#allocation4 + $0x70] sm:$0xff]
      %v2246 = vld [vmem:[#allocation4 + $0x88] sm:$0xff]
      %v2247 = vld [vmem:[#allocation4 + $0xa0] sm:$0xff]
      %v2248 = vld [vmem:[#allocation4 + $0xb8] sm:$0xff]
      %v2249 = vmax.f32 %v2225, %v2194
      %v2250 = vmax.f32 %v2226, %v2241
      %v2251 = vmax.f32 %v2227, %v2196
      %v2252 = vmax.f32 %v2228, %v2242
      %v2253 = vmax.f32 %v2229, %v2198
      %v2254 = vmax.f32 %v2230, %v2243
      %v2255 = vmax.f32 %v2231, %v2200
      %v2256 = vmax.f32 %v2232, %v2244
      %v2257 = vmax.f32 %v2233, %v2202
      %v2258 = vmax.f32 %v2234, %v2245
      %v2259 = vmax.f32 %v2235, %v2204
      %v2260 = vmax.f32 %v2236, %v2246
      %v2261 = vmax.f32 %v2237, %v2206
      %v2262 = vmax.f32 %v2238, %v2247
      %v2263 = vmax.f32 %v2239, %v2208
      %v2264 = vmax.f32 %v2240, %v2248
      %v2265 = vld [vmem:[%s2028] sm:$0xff]
      %v2266 = vld [vmem:[%s2028 + $0x8] sm:$0xff]
      %v2267 = vld [vmem:[%s2028 + $0x18] sm:$0xff]
      %v2268 = vld [vmem:[%s2028 + $0x20] sm:$0xff]
      %v2269 = vld [vmem:[%s2028 + $0x30] sm:$0xff]
      %v2270 = vld [vmem:[%s2028 + $0x38] sm:$0xff]
      %v2271 = vld [vmem:[%s2028 + $0x48] sm:$0xff]
      %v2272 = vld [vmem:[%s2028 + $0x50] sm:$0xff]
      %v2273 = vld [vmem:[%s2028 + $0x60] sm:$0xff]
      %v2274 = vld [vmem:[%s2028 + $0x68] sm:$0xff]
      %v2275 = vld [vmem:[%s2028 + $0x78] sm:$0xff]
      %v2276 = vld [vmem:[%s2028 + $0x80] sm:$0xff]
      %v2277 = vld [vmem:[%s2028 + $0x90] sm:$0xff]
      %v2278 = vld [vmem:[%s2028 + $0x98] sm:$0xff]
      %v2279 = vld [vmem:[%s2028 + $0xa8] sm:$0xff]
      %v2280 = vld [vmem:[%s2028 + $0xb0] sm:$0xff]
      %v2281 = vmax.f32 %v2249, %v2265
      %v2282 = vmax.f32 %v2250, %v2266
      %v2283 = vmax.f32 %v2251, %v2267
      %v2284 = vmax.f32 %v2252, %v2268
      %v2285 = vmax.f32 %v2253, %v2269
      %v2286 = vmax.f32 %v2254, %v2270
      %v2287 = vmax.f32 %v2255, %v2271
      %v2288 = vmax.f32 %v2256, %v2272
      %v2289 = vmax.f32 %v2257, %v2273
      %v2290 = vmax.f32 %v2258, %v2274
      %v2291 = vmax.f32 %v2259, %v2275
      %v2292 = vmax.f32 %v2260, %v2276
      %v2293 = vmax.f32 %v2261, %v2277
      %v2294 = vmax.f32 %v2262, %v2278
      %v2295 = vmax.f32 %v2263, %v2279
      %v2296 = vmax.f32 %v2264, %v2280
      %v2297 = vld [vmem:[%s2028 + $0x4] sm:$0xff]
      %v2298 = vld [vmem:[%s2028 + $0xc] sm:$0xff]
      %v2299 = vld [vmem:[%s2028 + $0x1c] sm:$0xff]
      %v2300 = vld [vmem:[%s2028 + $0x24] sm:$0xff]
      %v2301 = vld [vmem:[%s2028 + $0x34] sm:$0xff]
      %v2302 = vld [vmem:[%s2028 + $0x3c] sm:$0xff]
      %v2303 = vld [vmem:[%s2028 + $0x4c] sm:$0xff]
      %v2304 = vld [vmem:[%s2028 + $0x54] sm:$0xff]
      %v2305 = vld [vmem:[%s2028 + $0x64] sm:$0xff]
      %v2306 = vld [vmem:[%s2028 + $0x6c] sm:$0xff]
      %v2307 = vld [vmem:[%s2028 + $0x7c] sm:$0xff]
      %v2308 = vld [vmem:[%s2028 + $0x84] sm:$0xff]
      %v2309 = vld [vmem:[%s2028 + $0x94] sm:$0xff]
      %v2310 = vld [vmem:[%s2028 + $0x9c] sm:$0xff]
      %v2311 = vld [vmem:[%s2028 + $0xac] sm:$0xff]
      %v2312 = vld [vmem:[%s2028 + $0xb4] sm:$0xff]
      %v2313 = vmax.f32 %v2281, %v2297
      %v2314 = vmax.f32 %v2282, %v2298
      %v2315 = vmax.f32 %v2283, %v2299
      %v2316 = vmax.f32 %v2284, %v2300
      %v2317 = vmax.f32 %v2285, %v2301
      %v2318 = vmax.f32 %v2286, %v2302
      %v2319 = vmax.f32 %v2287, %v2303
      %v2320 = vmax.f32 %v2288, %v2304
      %v2321 = vmax.f32 %v2289, %v2305
      %v2322 = vmax.f32 %v2290, %v2306
      %v2323 = vmax.f32 %v2291, %v2307
      %v2324 = vmax.f32 %v2292, %v2308
      %v2325 = vmax.f32 %v2293, %v2309
      %v2326 = vmax.f32 %v2294, %v2310
      %v2327 = vmax.f32 %v2295, %v2311
      %v2328 = vmax.f32 %v2296, %v2312
      %v2329 = vld [vmem:[%s2028 + $0x10] sm:$0xff]
      %v2330 = vld [vmem:[%s2028 + $0x28] sm:$0xff]
      %v2331 = vld [vmem:[%s2028 + $0x40] sm:$0xff]
      %v2332 = vld [vmem:[%s2028 + $0x58] sm:$0xff]
      %v2333 = vld [vmem:[%s2028 + $0x70] sm:$0xff]
      %v2334 = vld [vmem:[%s2028 + $0x88] sm:$0xff]
      %v2335 = vld [vmem:[%s2028 + $0xa0] sm:$0xff]
      %v2336 = vld [vmem:[%s2028 + $0xb8] sm:$0xff]
      %v2337 = vmax.f32 %v2313, %v2266
      %v2338 = vmax.f32 %v2314, %v2329
      %v2339 = vmax.f32 %v2315, %v2268
      %v2340 = vmax.f32 %v2316, %v2330
      %v2341 = vmax.f32 %v2317, %v2270
      %v2342 = vmax.f32 %v2318, %v2331
      %v2343 = vmax.f32 %v2319, %v2272
      %v2344 = vmax.f32 %v2320, %v2332
      %v2345 = vmax.f32 %v2321, %v2274
      %v2346 = vmax.f32 %v2322, %v2333
      %v2347 = vmax.f32 %v2323, %v2276
      %v2348 = vmax.f32 %v2324, %v2334
      %v2349 = vmax.f32 %v2325, %v2278
      %v2350 = vmax.f32 %v2326, %v2335
      %v2351 = vmax.f32 %v2327, %v2280
      %v2352 = vmax.f32 %v2328, %v2336
      %v2353 = vld [vmem:[%s1762] sm:$0xff]
      %v2354 = vld [vmem:[%s1762 + $0x8] sm:$0xff]
      %v2355 = vld [vmem:[%s1762 + $0x18] sm:$0xff]
      %v2356 = vld [vmem:[%s1762 + $0x20] sm:$0xff]
      %v2357 = vld [vmem:[%s1762 + $0x30] sm:$0xff]
      %v2358 = vld [vmem:[%s1762 + $0x38] sm:$0xff]
      %v2359 = vld [vmem:[%s1762 + $0x48] sm:$0xff]
      %v2360 = vld [vmem:[%s1762 + $0x50] sm:$0xff]
      %v2361 = vld [vmem:[%s1762 + $0x60] sm:$0xff]
      %v2362 = vld [vmem:[%s1762 + $0x68] sm:$0xff]
      %v2363 = vld [vmem:[%s1762 + $0x78] sm:$0xff]
      %v2364 = vld [vmem:[%s1762 + $0x80] sm:$0xff]
      %v2365 = vld [vmem:[%s1762 + $0x90] sm:$0xff]
      %v2366 = vld [vmem:[%s1762 + $0x98] sm:$0xff]
      %v2367 = vld [vmem:[%s1762 + $0xa8] sm:$0xff]
      %v2368 = vld [vmem:[%s1762 + $0xb0] sm:$0xff]
      %v2369 = vmax.f32 %v2337, %v2353
      %v2370 = vmax.f32 %v2338, %v2354
      %v2371 = vmax.f32 %v2339, %v2355
      %v2372 = vmax.f32 %v2340, %v2356
      %v2373 = vmax.f32 %v2341, %v2357
      %v2374 = vmax.f32 %v2342, %v2358
      %v2375 = vmax.f32 %v2343, %v2359
      %v2376 = vmax.f32 %v2344, %v2360
      %v2377 = vmax.f32 %v2345, %v2361
      %v2378 = vmax.f32 %v2346, %v2362
      %v2379 = vmax.f32 %v2347, %v2363
      %v2380 = vmax.f32 %v2348, %v2364
      %v2381 = vmax.f32 %v2349, %v2365
      %v2382 = vmax.f32 %v2350, %v2366
      %v2383 = vmax.f32 %v2351, %v2367
      %v2384 = vmax.f32 %v2352, %v2368
      %v2385 = vld [vmem:[%s1762 + $0x4] sm:$0xff]
      %v2386 = vld [vmem:[%s1762 + $0xc] sm:$0xff]
      %v2387 = vld [vmem:[%s1762 + $0x1c] sm:$0xff]
      %v2388 = vld [vmem:[%s1762 + $0x24] sm:$0xff]
      %v2389 = vld [vmem:[%s1762 + $0x34] sm:$0xff]
      %v2390 = vld [vmem:[%s1762 + $0x3c] sm:$0xff]
      %v2391 = vld [vmem:[%s1762 + $0x4c] sm:$0xff]
      %v2392 = vld [vmem:[%s1762 + $0x54] sm:$0xff]
      %v2393 = vld [vmem:[%s1762 + $0x64] sm:$0xff]
      %v2394 = vld [vmem:[%s1762 + $0x6c] sm:$0xff]
      %v2395 = vld [vmem:[%s1762 + $0x7c] sm:$0xff]
      %v2396 = vld [vmem:[%s1762 + $0x84] sm:$0xff]
      %v2397 = vld [vmem:[%s1762 + $0x94] sm:$0xff]
      %v2398 = vld [vmem:[%s1762 + $0x9c] sm:$0xff]
      %v2399 = vld [vmem:[%s1762 + $0xac] sm:$0xff]
      %v2400 = vld [vmem:[%s1762 + $0xb4] sm:$0xff]
      %v2401 = vmax.f32 %v2369, %v2385
      %v2402 = vmax.f32 %v2370, %v2386
      %v2403 = vmax.f32 %v2371, %v2387
      %v2404 = vmax.f32 %v2372, %v2388
      %v2405 = vmax.f32 %v2373, %v2389
      %v2406 = vmax.f32 %v2374, %v2390
      %v2407 = vmax.f32 %v2375, %v2391
      %v2408 = vmax.f32 %v2376, %v2392
      %v2409 = vmax.f32 %v2377, %v2393
      %v2410 = vmax.f32 %v2378, %v2394
      %v2411 = vmax.f32 %v2379, %v2395
      %v2412 = vmax.f32 %v2380, %v2396
      %v2413 = vmax.f32 %v2381, %v2397
      %v2414 = vmax.f32 %v2382, %v2398
      %v2415 = vmax.f32 %v2383, %v2399
      %v2416 = vmax.f32 %v2384, %v2400
      %v2417 = vld [vmem:[%s1762 + $0x10] sm:$0xff]
      %v2418 = vld [vmem:[%s1762 + $0x28] sm:$0xff]
      %v2419 = vld [vmem:[%s1762 + $0x40] sm:$0xff]
      %v2420 = vld [vmem:[%s1762 + $0x58] sm:$0xff]
      %v2421 = vld [vmem:[%s1762 + $0x70] sm:$0xff]
      %v2422 = vld [vmem:[%s1762 + $0x88] sm:$0xff]
      %v2423 = vld [vmem:[%s1762 + $0xa0] sm:$0xff]
      %v2424 = vld [vmem:[%s1762 + $0xb8] sm:$0xff]
      %v2425 = vmax.f32 %v2401, %v2354
      %v2426 = vmax.f32 %v2402, %v2417
      %v2427 = vmax.f32 %v2403, %v2356
      %v2428 = vmax.f32 %v2404, %v2418
      %v2429 = vmax.f32 %v2405, %v2358
      %v2430 = vmax.f32 %v2406, %v2419
      %v2431 = vmax.f32 %v2407, %v2360
      %v2432 = vmax.f32 %v2408, %v2420
      %v2433 = vmax.f32 %v2409, %v2362
      %v2434 = vmax.f32 %v2410, %v2421
      %v2435 = vmax.f32 %v2411, %v2364
      %v2436 = vmax.f32 %v2412, %v2422
      %v2437 = vmax.f32 %v2413, %v2366
      %v2438 = vmax.f32 %v2414, %v2423
      %v2439 = vmax.f32 %v2415, %v2368
      %v2440 = vmax.f32 %v2416, %v2424
      %2441 = vst.msk [vmem:[%s149] sm:$0xff] %vm151, %v2425
      %2442 = vst.msk [vmem:[%s149 + $0x8] sm:$0xff] %vm151, %v2426
      %2443 = vst.msk [vmem:[%s149 + $0x10] sm:$0xff] %vm151, %v2427
      %2444 = vst.msk [vmem:[%s149 + $0x18] sm:$0xff] %vm151, %v2428
      %2445 = vst.msk [vmem:[%s149 + $0x20] sm:$0xff] %vm151, %v2429
      %2446 = vst.msk [vmem:[%s149 + $0x28] sm:$0xff] %vm151, %v2430
      %2447 = vst.msk [vmem:[%s149 + $0x30] sm:$0xff] %vm151, %v2431
      %2448 = vst.msk [vmem:[%s149 + $0x38] sm:$0xff] %vm151, %v2432
      %2449 = vst.msk [vmem:[%s149 + $0x40] sm:$0xff] %vm151, %v2433
      %2450 = vst.msk [vmem:[%s149 + $0x48] sm:$0xff] %vm151, %v2434
      %2451 = vst.msk [vmem:[%s149 + $0x50] sm:$0xff] %vm151, %v2435
      %2452 = vst.msk [vmem:[%s149 + $0x58] sm:$0xff] %vm151, %v2436
      %2453 = vst.msk [vmem:[%s149 + $0x60] sm:$0xff] %vm151, %v2437
      %2454 = vst.msk [vmem:[%s149 + $0x68] sm:$0xff] %vm151, %v2438
      %2455 = vst.msk [vmem:[%s149 + $0x70] sm:$0xff] %vm151, %v2439
      %2456 = vst.msk [vmem:[%s149 + $0x78] sm:$0xff] %vm151, %v2440
      %v2457 = vld [vmem:[%s140] sm:$0xff]
      %v2458 = vld [vmem:[%s140 + $0x8] sm:$0xff]
      %v2459 = vld [vmem:[%s140 + $0x10] sm:$0xff]
      %v2460 = vld [vmem:[%s140 + $0x18] sm:$0xff]
      %v2461 = vld [vmem:[%s140 + $0x20] sm:$0xff]
      %v2462 = vld [vmem:[%s140 + $0x28] sm:$0xff]
      %v2463 = vld [vmem:[%s140 + $0x30] sm:$0xff]
      %v2464 = vld [vmem:[%s140 + $0x38] sm:$0xff]
      %v2465 = vld [vmem:[%s140 + $0x40] sm:$0xff]
      %v2466 = vld [vmem:[%s140 + $0x48] sm:$0xff]
      %v2467 = vld [vmem:[%s140 + $0x50] sm:$0xff]
      %v2468 = vld [vmem:[%s140 + $0x58] sm:$0xff]
      %v2469 = vld [vmem:[%s140 + $0x60] sm:$0xff]
      %v2470 = vld [vmem:[%s140 + $0x68] sm:$0xff]
      %v2471 = vld [vmem:[%s140 + $0x70] sm:$0xff]
      %v2472 = vld [vmem:[%s140 + $0x78] sm:$0xff]
      %s2473 = scalar_lea.vmem %s149, 768
      %2474 = vst.msk [vmem:[%s2473] sm:$0xff] %vm151, %v2457
      %2475 = vst.msk [vmem:[%s2473 + $0x8] sm:$0xff] %vm151, %v2458
      %2476 = vst.msk [vmem:[%s2473 + $0x10] sm:$0xff] %vm151, %v2459
      %2477 = vst.msk [vmem:[%s2473 + $0x18] sm:$0xff] %vm151, %v2460
      %2478 = vst.msk [vmem:[%s2473 + $0x20] sm:$0xff] %vm151, %v2461
      %2479 = vst.msk [vmem:[%s2473 + $0x28] sm:$0xff] %vm151, %v2462
      %2480 = vst.msk [vmem:[%s2473 + $0x30] sm:$0xff] %vm151, %v2463
      %2481 = vst.msk [vmem:[%s2473 + $0x38] sm:$0xff] %vm151, %v2464
      %2482 = vst.msk [vmem:[%s2473 + $0x40] sm:$0xff] %vm151, %v2465
      %2483 = vst.msk [vmem:[%s2473 + $0x48] sm:$0xff] %vm151, %v2466
      %2484 = vst.msk [vmem:[%s2473 + $0x50] sm:$0xff] %vm151, %v2467
      %2485 = vst.msk [vmem:[%s2473 + $0x58] sm:$0xff] %vm151, %v2468
      %2486 = vst.msk [vmem:[%s2473 + $0x60] sm:$0xff] %vm151, %v2469
      %2487 = vst.msk [vmem:[%s2473 + $0x68] sm:$0xff] %vm151, %v2470
      %2488 = vst.msk [vmem:[%s2473 + $0x70] sm:$0xff] %vm151, %v2471
      %2489 = vst.msk [vmem:[%s2473 + $0x78] sm:$0xff] %vm151, %v2472
      %s2490 = scalar_lea.vmem [#allocation4], 288
      %v2491 = vld [vmem:[%s2490 + $0x4] sm:$0xff]
      %v2492 = vld [vmem:[%s2490 + $0xc] sm:$0xff]
      %v2493 = vld [vmem:[%s2490 + $0x1c] sm:$0xff]
      %v2494 = vld [vmem:[%s2490 + $0x24] sm:$0xff]
      %v2495 = vld [vmem:[%s2490 + $0x34] sm:$0xff]
      %v2496 = vld [vmem:[%s2490 + $0x3c] sm:$0xff]
      %v2497 = vld [vmem:[%s2490 + $0x4c] sm:$0xff]
      %v2498 = vld [vmem:[%s2490 + $0x54] sm:$0xff]
      %v2499 = vld [vmem:[%s2490 + $0x64] sm:$0xff]
      %v2500 = vld [vmem:[%s2490 + $0x6c] sm:$0xff]
      %v2501 = vld [vmem:[%s2490 + $0x7c] sm:$0xff]
      %v2502 = vld [vmem:[%s2490 + $0x84] sm:$0xff]
      %v2503 = vld [vmem:[%s2490 + $0x94] sm:$0xff]
      %v2504 = vld [vmem:[%s2490 + $0x9c] sm:$0xff]
      %v2505 = vld [vmem:[%s2490 + $0xac] sm:$0xff]
      %v2506 = vld [vmem:[%s2490 + $0xb4] sm:$0xff]
      %s2507 = scalar_lea.vmem %s149, 640
      %2508 = vst.msk [vmem:[%s2507] sm:$0xff] %vm151, %v2491
      %2509 = vst.msk [vmem:[%s2507 + $0x8] sm:$0xff] %vm151, %v2492
      %2510 = vst.msk [vmem:[%s2507 + $0x10] sm:$0xff] %vm151, %v2493
      %2511 = vst.msk [vmem:[%s2507 + $0x18] sm:$0xff] %vm151, %v2494
      %2512 = vst.msk [vmem:[%s2507 + $0x20] sm:$0xff] %vm151, %v2495
      %2513 = vst.msk [vmem:[%s2507 + $0x28] sm:$0xff] %vm151, %v2496
      %2514 = vst.msk [vmem:[%s2507 + $0x30] sm:$0xff] %vm151, %v2497
      %2515 = vst.msk [vmem:[%s2507 + $0x38] sm:$0xff] %vm151, %v2498
      %2516 = vst.msk [vmem:[%s2507 + $0x40] sm:$0xff] %vm151, %v2499
      %2517 = vst.msk [vmem:[%s2507 + $0x48] sm:$0xff] %vm151, %v2500
      %2518 = vst.msk [vmem:[%s2507 + $0x50] sm:$0xff] %vm151, %v2501
      %2519 = vst.msk [vmem:[%s2507 + $0x58] sm:$0xff] %vm151, %v2502
      %2520 = vst.msk [vmem:[%s2507 + $0x60] sm:$0xff] %vm151, %v2503
      %2521 = vst.msk [vmem:[%s2507 + $0x68] sm:$0xff] %vm151, %v2504
      %2522 = vst.msk [vmem:[%s2507 + $0x70] sm:$0xff] %vm151, %v2505
      %2523 = vst.msk [vmem:[%s2507 + $0x78] sm:$0xff] %vm151, %v2506
      %s2524 = scalar_lea.vmem [#allocation4], 240
      %v2525 = vld [vmem:[%s2524 + $0x2] sm:$0xff]
      %v2526 = vld [vmem:[%s2524 + $0xa] sm:$0xff]
      %v2527 = vld [vmem:[%s2524 + $0x1a] sm:$0xff]
      %v2528 = vld [vmem:[%s2524 + $0x22] sm:$0xff]
      %v2529 = vld [vmem:[%s2524 + $0x32] sm:$0xff]
      %v2530 = vld [vmem:[%s2524 + $0x3a] sm:$0xff]
      %v2531 = vld [vmem:[%s2524 + $0x4a] sm:$0xff]
      %v2532 = vld [vmem:[%s2524 + $0x52] sm:$0xff]
      %v2533 = vld [vmem:[%s2524 + $0x62] sm:$0xff]
      %v2534 = vld [vmem:[%s2524 + $0x6a] sm:$0xff]
      %v2535 = vld [vmem:[%s2524 + $0x7a] sm:$0xff]
      %v2536 = vld [vmem:[%s2524 + $0x82] sm:$0xff]
      %v2537 = vld [vmem:[%s2524 + $0x92] sm:$0xff]
      %v2538 = vld [vmem:[%s2524 + $0x9a] sm:$0xff]
      %v2539 = vld [vmem:[%s2524 + $0xaa] sm:$0xff]
      %v2540 = vld [vmem:[%s2524 + $0xb2] sm:$0xff]
      %v2541 = vld [vmem:[%s2524 + $0x6] sm:$0xff]
      %v2542 = vld [vmem:[%s2524 + $0xe] sm:$0xff]
      %v2543 = vld [vmem:[%s2524 + $0x1e] sm:$0xff]
      %v2544 = vld [vmem:[%s2524 + $0x26] sm:$0xff]
      %v2545 = vld [vmem:[%s2524 + $0x36] sm:$0xff]
      %v2546 = vld [vmem:[%s2524 + $0x3e] sm:$0xff]
      %v2547 = vld [vmem:[%s2524 + $0x4e] sm:$0xff]
      %v2548 = vld [vmem:[%s2524 + $0x56] sm:$0xff]
      %v2549 = vld [vmem:[%s2524 + $0x66] sm:$0xff]
      %v2550 = vld [vmem:[%s2524 + $0x6e] sm:$0xff]
      %v2551 = vld [vmem:[%s2524 + $0x7e] sm:$0xff]
      %v2552 = vld [vmem:[%s2524 + $0x86] sm:$0xff]
      %v2553 = vld [vmem:[%s2524 + $0x96] sm:$0xff]
      %v2554 = vld [vmem:[%s2524 + $0x9e] sm:$0xff]
      %v2555 = vld [vmem:[%s2524 + $0xae] sm:$0xff]
      %v2556 = vld [vmem:[%s2524 + $0xb6] sm:$0xff]
      %v2557 = vmax.f32 %v2525, %v2541
      %v2558 = vmax.f32 %v2526, %v2542
      %v2559 = vmax.f32 %v2527, %v2543
      %v2560 = vmax.f32 %v2528, %v2544
      %v2561 = vmax.f32 %v2529, %v2545
      %v2562 = vmax.f32 %v2530, %v2546
      %v2563 = vmax.f32 %v2531, %v2547
      %v2564 = vmax.f32 %v2532, %v2548
      %v2565 = vmax.f32 %v2533, %v2549
      %v2566 = vmax.f32 %v2534, %v2550
      %v2567 = vmax.f32 %v2535, %v2551
      %v2568 = vmax.f32 %v2536, %v2552
      %v2569 = vmax.f32 %v2537, %v2553
      %v2570 = vmax.f32 %v2538, %v2554
      %v2571 = vmax.f32 %v2539, %v2555
      %v2572 = vmax.f32 %v2540, %v2556
      %s2573 = scalar_lea.vmem [#allocation4], 336
      %v2574 = vld [vmem:[%s2573 + $0x2] sm:$0xff]
      %v2575 = vld [vmem:[%s2573 + $0xa] sm:$0xff]
      %v2576 = vld [vmem:[%s2573 + $0x1a] sm:$0xff]
      %v2577 = vld [vmem:[%s2573 + $0x22] sm:$0xff]
      %v2578 = vld [vmem:[%s2573 + $0x32] sm:$0xff]
      %v2579 = vld [vmem:[%s2573 + $0x3a] sm:$0xff]
      %v2580 = vld [vmem:[%s2573 + $0x4a] sm:$0xff]
      %v2581 = vld [vmem:[%s2573 + $0x52] sm:$0xff]
      %v2582 = vld [vmem:[%s2573 + $0x62] sm:$0xff]
      %v2583 = vld [vmem:[%s2573 + $0x6a] sm:$0xff]
      %v2584 = vld [vmem:[%s2573 + $0x7a] sm:$0xff]
      %v2585 = vld [vmem:[%s2573 + $0x82] sm:$0xff]
      %v2586 = vld [vmem:[%s2573 + $0x92] sm:$0xff]
      %v2587 = vld [vmem:[%s2573 + $0x9a] sm:$0xff]
      %v2588 = vld [vmem:[%s2573 + $0xaa] sm:$0xff]
      %v2589 = vld [vmem:[%s2573 + $0xb2] sm:$0xff]
      %v2590 = vmax.f32 %v2557, %v2574
      %v2591 = vmax.f32 %v2558, %v2575
      %v2592 = vmax.f32 %v2559, %v2576
      %v2593 = vmax.f32 %v2560, %v2577
      %v2594 = vmax.f32 %v2561, %v2578
      %v2595 = vmax.f32 %v2562, %v2579
      %v2596 = vmax.f32 %v2563, %v2580
      %v2597 = vmax.f32 %v2564, %v2581
      %v2598 = vmax.f32 %v2565, %v2582
      %v2599 = vmax.f32 %v2566, %v2583
      %v2600 = vmax.f32 %v2567, %v2584
      %v2601 = vmax.f32 %v2568, %v2585
      %v2602 = vmax.f32 %v2569, %v2586
      %v2603 = vmax.f32 %v2570, %v2587
      %v2604 = vmax.f32 %v2571, %v2588
      %v2605 = vmax.f32 %v2572, %v2589
      %v2606 = vld [vmem:[%s2573 + $0x6] sm:$0xff]
      %v2607 = vld [vmem:[%s2573 + $0xe] sm:$0xff]
      %v2608 = vld [vmem:[%s2573 + $0x1e] sm:$0xff]
      %v2609 = vld [vmem:[%s2573 + $0x26] sm:$0xff]
      %v2610 = vld [vmem:[%s2573 + $0x36] sm:$0xff]
      %v2611 = vld [vmem:[%s2573 + $0x3e] sm:$0xff]
      %v2612 = vld [vmem:[%s2573 + $0x4e] sm:$0xff]
      %v2613 = vld [vmem:[%s2573 + $0x56] sm:$0xff]
      %v2614 = vld [vmem:[%s2573 + $0x66] sm:$0xff]
      %v2615 = vld [vmem:[%s2573 + $0x6e] sm:$0xff]
      %v2616 = vld [vmem:[%s2573 + $0x7e] sm:$0xff]
      %v2617 = vld [vmem:[%s2573 + $0x86] sm:$0xff]
      %v2618 = vld [vmem:[%s2573 + $0x96] sm:$0xff]
      %v2619 = vld [vmem:[%s2573 + $0x9e] sm:$0xff]
      %v2620 = vld [vmem:[%s2573 + $0xae] sm:$0xff]
      %v2621 = vld [vmem:[%s2573 + $0xb6] sm:$0xff]
      %v2622 = vmax.f32 %v2590, %v2606
      %v2623 = vmax.f32 %v2591, %v2607
      %v2624 = vmax.f32 %v2592, %v2608
      %v2625 = vmax.f32 %v2593, %v2609
      %v2626 = vmax.f32 %v2594, %v2610
      %v2627 = vmax.f32 %v2595, %v2611
      %v2628 = vmax.f32 %v2596, %v2612
      %v2629 = vmax.f32 %v2597, %v2613
      %v2630 = vmax.f32 %v2598, %v2614
      %v2631 = vmax.f32 %v2599, %v2615
      %v2632 = vmax.f32 %v2600, %v2616
      %v2633 = vmax.f32 %v2601, %v2617
      %v2634 = vmax.f32 %v2602, %v2618
      %v2635 = vmax.f32 %v2603, %v2619
      %v2636 = vmax.f32 %v2604, %v2620
      %v2637 = vmax.f32 %v2605, %v2621
      %s2638 = scalar_lea.vmem %s149, 384
      %2639 = vst.msk [vmem:[%s2638] sm:$0xff] %vm151, %v2622
      %2640 = vst.msk [vmem:[%s2638 + $0x8] sm:$0xff] %vm151, %v2623
      %2641 = vst.msk [vmem:[%s2638 + $0x10] sm:$0xff] %vm151, %v2624
      %2642 = vst.msk [vmem:[%s2638 + $0x18] sm:$0xff] %vm151, %v2625
      %2643 = vst.msk [vmem:[%s2638 + $0x20] sm:$0xff] %vm151, %v2626
      %2644 = vst.msk [vmem:[%s2638 + $0x28] sm:$0xff] %vm151, %v2627
      %2645 = vst.msk [vmem:[%s2638 + $0x30] sm:$0xff] %vm151, %v2628
      %2646 = vst.msk [vmem:[%s2638 + $0x38] sm:$0xff] %vm151, %v2629
      %2647 = vst.msk [vmem:[%s2638 + $0x40] sm:$0xff] %vm151, %v2630
      %2648 = vst.msk [vmem:[%s2638 + $0x48] sm:$0xff] %vm151, %v2631
      %2649 = vst.msk [vmem:[%s2638 + $0x50] sm:$0xff] %vm151, %v2632
      %2650 = vst.msk [vmem:[%s2638 + $0x58] sm:$0xff] %vm151, %v2633
      %2651 = vst.msk [vmem:[%s2638 + $0x60] sm:$0xff] %vm151, %v2634
      %2652 = vst.msk [vmem:[%s2638 + $0x68] sm:$0xff] %vm151, %v2635
      %2653 = vst.msk [vmem:[%s2638 + $0x70] sm:$0xff] %vm151, %v2636
      %2654 = vst.msk [vmem:[%s2638 + $0x78] sm:$0xff] %vm151, %v2637
      %v2655 = vld [vmem:[%s1762] sm:$0xff]
      %v2656 = vld [vmem:[%s1762 + $0x8] sm:$0xff]
      %v2657 = vld [vmem:[%s1762 + $0x18] sm:$0xff]
      %v2658 = vld [vmem:[%s1762 + $0x20] sm:$0xff]
      %v2659 = vld [vmem:[%s1762 + $0x30] sm:$0xff]
      %v2660 = vld [vmem:[%s1762 + $0x38] sm:$0xff]
      %v2661 = vld [vmem:[%s1762 + $0x48] sm:$0xff]
      %v2662 = vld [vmem:[%s1762 + $0x50] sm:$0xff]
      %v2663 = vld [vmem:[%s1762 + $0x60] sm:$0xff]
      %v2664 = vld [vmem:[%s1762 + $0x68] sm:$0xff]
      %v2665 = vld [vmem:[%s1762 + $0x78] sm:$0xff]
      %v2666 = vld [vmem:[%s1762 + $0x80] sm:$0xff]
      %v2667 = vld [vmem:[%s1762 + $0x90] sm:$0xff]
      %v2668 = vld [vmem:[%s1762 + $0x98] sm:$0xff]
      %v2669 = vld [vmem:[%s1762 + $0xa8] sm:$0xff]
      %v2670 = vld [vmem:[%s1762 + $0xb0] sm:$0xff]
      %v2671 = vld [vmem:[%s1762 + $0x4] sm:$0xff]
      %v2672 = vld [vmem:[%s1762 + $0xc] sm:$0xff]
      %v2673 = vld [vmem:[%s1762 + $0x1c] sm:$0xff]
      %v2674 = vld [vmem:[%s1762 + $0x24] sm:$0xff]
      %v2675 = vld [vmem:[%s1762 + $0x34] sm:$0xff]
      %v2676 = vld [vmem:[%s1762 + $0x3c] sm:$0xff]
      %v2677 = vld [vmem:[%s1762 + $0x4c] sm:$0xff]
      %v2678 = vld [vmem:[%s1762 + $0x54] sm:$0xff]
      %v2679 = vld [vmem:[%s1762 + $0x64] sm:$0xff]
      %v2680 = vld [vmem:[%s1762 + $0x6c] sm:$0xff]
      %v2681 = vld [vmem:[%s1762 + $0x7c] sm:$0xff]
      %v2682 = vld [vmem:[%s1762 + $0x84] sm:$0xff]
      %v2683 = vld [vmem:[%s1762 + $0x94] sm:$0xff]
      %v2684 = vld [vmem:[%s1762 + $0x9c] sm:$0xff]
      %v2685 = vld [vmem:[%s1762 + $0xac] sm:$0xff]
      %v2686 = vld [vmem:[%s1762 + $0xb4] sm:$0xff]
      %v2687 = vmax.f32 %v2655, %v2671
      %v2688 = vmax.f32 %v2656, %v2672
      %v2689 = vmax.f32 %v2657, %v2673
      %v2690 = vmax.f32 %v2658, %v2674
      %v2691 = vmax.f32 %v2659, %v2675
      %v2692 = vmax.f32 %v2660, %v2676
      %v2693 = vmax.f32 %v2661, %v2677
      %v2694 = vmax.f32 %v2662, %v2678
      %v2695 = vmax.f32 %v2663, %v2679
      %v2696 = vmax.f32 %v2664, %v2680
      %v2697 = vmax.f32 %v2665, %v2681
      %v2698 = vmax.f32 %v2666, %v2682
      %v2699 = vmax.f32 %v2667, %v2683
      %v2700 = vmax.f32 %v2668, %v2684
      %v2701 = vmax.f32 %v2669, %v2685
      %v2702 = vmax.f32 %v2670, %v2686
      %v2703 = vld [vmem:[%s1762 + $0x10] sm:$0xff]
      %v2704 = vld [vmem:[%s1762 + $0x28] sm:$0xff]
      %v2705 = vld [vmem:[%s1762 + $0x40] sm:$0xff]
      %v2706 = vld [vmem:[%s1762 + $0x58] sm:$0xff]
      %v2707 = vld [vmem:[%s1762 + $0x70] sm:$0xff]
      %v2708 = vld [vmem:[%s1762 + $0x88] sm:$0xff]
      %v2709 = vld [vmem:[%s1762 + $0xa0] sm:$0xff]
      %v2710 = vld [vmem:[%s1762 + $0xb8] sm:$0xff]
      %v2711 = vmax.f32 %v2687, %v2656
      %v2712 = vmax.f32 %v2688, %v2703
      %v2713 = vmax.f32 %v2689, %v2658
      %v2714 = vmax.f32 %v2690, %v2704
      %v2715 = vmax.f32 %v2691, %v2660
      %v2716 = vmax.f32 %v2692, %v2705
      %v2717 = vmax.f32 %v2693, %v2662
      %v2718 = vmax.f32 %v2694, %v2706
      %v2719 = vmax.f32 %v2695, %v2664
      %v2720 = vmax.f32 %v2696, %v2707
      %v2721 = vmax.f32 %v2697, %v2666
      %v2722 = vmax.f32 %v2698, %v2708
      %v2723 = vmax.f32 %v2699, %v2668
      %v2724 = vmax.f32 %v2700, %v2709
      %v2725 = vmax.f32 %v2701, %v2670
      %v2726 = vmax.f32 %v2702, %v2710
      %v2727 = vld [vmem:[%s2490] sm:$0xff]
      %v2728 = vld [vmem:[%s2490 + $0x8] sm:$0xff]
      %v2729 = vld [vmem:[%s2490 + $0x18] sm:$0xff]
      %v2730 = vld [vmem:[%s2490 + $0x20] sm:$0xff]
      %v2731 = vld [vmem:[%s2490 + $0x30] sm:$0xff]
      %v2732 = vld [vmem:[%s2490 + $0x38] sm:$0xff]
      %v2733 = vld [vmem:[%s2490 + $0x48] sm:$0xff]
      %v2734 = vld [vmem:[%s2490 + $0x50] sm:$0xff]
      %v2735 = vld [vmem:[%s2490 + $0x60] sm:$0xff]
      %v2736 = vld [vmem:[%s2490 + $0x68] sm:$0xff]
      %v2737 = vld [vmem:[%s2490 + $0x78] sm:$0xff]
      %v2738 = vld [vmem:[%s2490 + $0x80] sm:$0xff]
      %v2739 = vld [vmem:[%s2490 + $0x90] sm:$0xff]
      %v2740 = vld [vmem:[%s2490 + $0x98] sm:$0xff]
      %v2741 = vld [vmem:[%s2490 + $0xa8] sm:$0xff]
      %v2742 = vld [vmem:[%s2490 + $0xb0] sm:$0xff]
      %v2743 = vmax.f32 %v2711, %v2727
      %v2744 = vmax.f32 %v2712, %v2728
      %v2745 = vmax.f32 %v2713, %v2729
      %v2746 = vmax.f32 %v2714, %v2730
      %v2747 = vmax.f32 %v2715, %v2731
      %v2748 = vmax.f32 %v2716, %v2732
      %v2749 = vmax.f32 %v2717, %v2733
      %v2750 = vmax.f32 %v2718, %v2734
      %v2751 = vmax.f32 %v2719, %v2735
      %v2752 = vmax.f32 %v2720, %v2736
      %v2753 = vmax.f32 %v2721, %v2737
      %v2754 = vmax.f32 %v2722, %v2738
      %v2755 = vmax.f32 %v2723, %v2739
      %v2756 = vmax.f32 %v2724, %v2740
      %v2757 = vmax.f32 %v2725, %v2741
      %v2758 = vmax.f32 %v2726, %v2742
      %v2759 = vld [vmem:[%s2490 + $0x4] sm:$0xff]
      %v2760 = vld [vmem:[%s2490 + $0xc] sm:$0xff]
      %v2761 = vld [vmem:[%s2490 + $0x1c] sm:$0xff]
      %v2762 = vld [vmem:[%s2490 + $0x24] sm:$0xff]
      %v2763 = vld [vmem:[%s2490 + $0x34] sm:$0xff]
      %v2764 = vld [vmem:[%s2490 + $0x3c] sm:$0xff]
      %v2765 = vld [vmem:[%s2490 + $0x4c] sm:$0xff]
      %v2766 = vld [vmem:[%s2490 + $0x54] sm:$0xff]
      %v2767 = vld [vmem:[%s2490 + $0x64] sm:$0xff]
      %v2768 = vld [vmem:[%s2490 + $0x6c] sm:$0xff]
      %v2769 = vld [vmem:[%s2490 + $0x7c] sm:$0xff]
      %v2770 = vld [vmem:[%s2490 + $0x84] sm:$0xff]
      %v2771 = vld [vmem:[%s2490 + $0x94] sm:$0xff]
      %v2772 = vld [vmem:[%s2490 + $0x9c] sm:$0xff]
      %v2773 = vld [vmem:[%s2490 + $0xac] sm:$0xff]
      %v2774 = vld [vmem:[%s2490 + $0xb4] sm:$0xff]
      %v2775 = vmax.f32 %v2743, %v2759
      %v2776 = vmax.f32 %v2744, %v2760
      %v2777 = vmax.f32 %v2745, %v2761
      %v2778 = vmax.f32 %v2746, %v2762
      %v2779 = vmax.f32 %v2747, %v2763
      %v2780 = vmax.f32 %v2748, %v2764
      %v2781 = vmax.f32 %v2749, %v2765
      %v2782 = vmax.f32 %v2750, %v2766
      %v2783 = vmax.f32 %v2751, %v2767
      %v2784 = vmax.f32 %v2752, %v2768
      %v2785 = vmax.f32 %v2753, %v2769
      %v2786 = vmax.f32 %v2754, %v2770
      %v2787 = vmax.f32 %v2755, %v2771
      %v2788 = vmax.f32 %v2756, %v2772
      %v2789 = vmax.f32 %v2757, %v2773
      %v2790 = vmax.f32 %v2758, %v2774
      %v2791 = vld [vmem:[%s2490 + $0x10] sm:$0xff]
      %v2792 = vld [vmem:[%s2490 + $0x28] sm:$0xff]
      %v2793 = vld [vmem:[%s2490 + $0x40] sm:$0xff]
      %v2794 = vld [vmem:[%s2490 + $0x58] sm:$0xff]
      %v2795 = vld [vmem:[%s2490 + $0x70] sm:$0xff]
      %v2796 = vld [vmem:[%s2490 + $0x88] sm:$0xff]
      %v2797 = vld [vmem:[%s2490 + $0xa0] sm:$0xff]
      %v2798 = vld [vmem:[%s2490 + $0xb8] sm:$0xff]
      %v2799 = vmax.f32 %v2775, %v2728
      %v2800 = vmax.f32 %v2776, %v2791
      %v2801 = vmax.f32 %v2777, %v2730
      %v2802 = vmax.f32 %v2778, %v2792
      %v2803 = vmax.f32 %v2779, %v2732
      %v2804 = vmax.f32 %v2780, %v2793
      %v2805 = vmax.f32 %v2781, %v2734
      %v2806 = vmax.f32 %v2782, %v2794
      %v2807 = vmax.f32 %v2783, %v2736
      %v2808 = vmax.f32 %v2784, %v2795
      %v2809 = vmax.f32 %v2785, %v2738
      %v2810 = vmax.f32 %v2786, %v2796
      %v2811 = vmax.f32 %v2787, %v2740
      %v2812 = vmax.f32 %v2788, %v2797
      %v2813 = vmax.f32 %v2789, %v2742
      %v2814 = vmax.f32 %v2790, %v2798
      %v2815 = vld [vmem:[%s2003] sm:$0xff]
      %v2816 = vld [vmem:[%s2003 + $0x8] sm:$0xff]
      %v2817 = vld [vmem:[%s2003 + $0x18] sm:$0xff]
      %v2818 = vld [vmem:[%s2003 + $0x20] sm:$0xff]
      %v2819 = vld [vmem:[%s2003 + $0x30] sm:$0xff]
      %v2820 = vld [vmem:[%s2003 + $0x38] sm:$0xff]
      %v2821 = vld [vmem:[%s2003 + $0x48] sm:$0xff]
      %v2822 = vld [vmem:[%s2003 + $0x50] sm:$0xff]
      %v2823 = vld [vmem:[%s2003 + $0x60] sm:$0xff]
      %v2824 = vld [vmem:[%s2003 + $0x68] sm:$0xff]
      %v2825 = vld [vmem:[%s2003 + $0x78] sm:$0xff]
      %v2826 = vld [vmem:[%s2003 + $0x80] sm:$0xff]
      %v2827 = vld [vmem:[%s2003 + $0x90] sm:$0xff]
      %v2828 = vld [vmem:[%s2003 + $0x98] sm:$0xff]
      %v2829 = vld [vmem:[%s2003 + $0xa8] sm:$0xff]
      %v2830 = vld [vmem:[%s2003 + $0xb0] sm:$0xff]
      %v2831 = vmax.f32 %v2799, %v2815
      %v2832 = vmax.f32 %v2800, %v2816
      %v2833 = vmax.f32 %v2801, %v2817
      %v2834 = vmax.f32 %v2802, %v2818
      %v2835 = vmax.f32 %v2803, %v2819
      %v2836 = vmax.f32 %v2804, %v2820
      %v2837 = vmax.f32 %v2805, %v2821
      %v2838 = vmax.f32 %v2806, %v2822
      %v2839 = vmax.f32 %v2807, %v2823
      %v2840 = vmax.f32 %v2808, %v2824
      %v2841 = vmax.f32 %v2809, %v2825
      %v2842 = vmax.f32 %v2810, %v2826
      %v2843 = vmax.f32 %v2811, %v2827
      %v2844 = vmax.f32 %v2812, %v2828
      %v2845 = vmax.f32 %v2813, %v2829
      %v2846 = vmax.f32 %v2814, %v2830
      %v2847 = vld [vmem:[%s2003 + $0x4] sm:$0xff]
      %v2848 = vld [vmem:[%s2003 + $0xc] sm:$0xff]
      %v2849 = vld [vmem:[%s2003 + $0x1c] sm:$0xff]
      %v2850 = vld [vmem:[%s2003 + $0x24] sm:$0xff]
      %v2851 = vld [vmem:[%s2003 + $0x34] sm:$0xff]
      %v2852 = vld [vmem:[%s2003 + $0x3c] sm:$0xff]
      %v2853 = vld [vmem:[%s2003 + $0x4c] sm:$0xff]
      %v2854 = vld [vmem:[%s2003 + $0x54] sm:$0xff]
      %v2855 = vld [vmem:[%s2003 + $0x64] sm:$0xff]
      %v2856 = vld [vmem:[%s2003 + $0x6c] sm:$0xff]
      %v2857 = vld [vmem:[%s2003 + $0x7c] sm:$0xff]
      %v2858 = vld [vmem:[%s2003 + $0x84] sm:$0xff]
      %v2859 = vld [vmem:[%s2003 + $0x94] sm:$0xff]
      %v2860 = vld [vmem:[%s2003 + $0x9c] sm:$0xff]
      %v2861 = vld [vmem:[%s2003 + $0xac] sm:$0xff]
      %v2862 = vld [vmem:[%s2003 + $0xb4] sm:$0xff]
      %v2863 = vmax.f32 %v2831, %v2847
      %v2864 = vmax.f32 %v2832, %v2848
      %v2865 = vmax.f32 %v2833, %v2849
      %v2866 = vmax.f32 %v2834, %v2850
      %v2867 = vmax.f32 %v2835, %v2851
      %v2868 = vmax.f32 %v2836, %v2852
      %v2869 = vmax.f32 %v2837, %v2853
      %v2870 = vmax.f32 %v2838, %v2854
      %v2871 = vmax.f32 %v2839, %v2855
      %v2872 = vmax.f32 %v2840, %v2856
      %v2873 = vmax.f32 %v2841, %v2857
      %v2874 = vmax.f32 %v2842, %v2858
      %v2875 = vmax.f32 %v2843, %v2859
      %v2876 = vmax.f32 %v2844, %v2860
      %v2877 = vmax.f32 %v2845, %v2861
      %v2878 = vmax.f32 %v2846, %v2862
      %v2879 = vld [vmem:[%s2003 + $0x10] sm:$0xff]
      %v2880 = vld [vmem:[%s2003 + $0x28] sm:$0xff]
      %v2881 = vld [vmem:[%s2003 + $0x40] sm:$0xff]
      %v2882 = vld [vmem:[%s2003 + $0x58] sm:$0xff]
      %v2883 = vld [vmem:[%s2003 + $0x70] sm:$0xff]
      %v2884 = vld [vmem:[%s2003 + $0x88] sm:$0xff]
      %v2885 = vld [vmem:[%s2003 + $0xa0] sm:$0xff]
      %v2886 = vld [vmem:[%s2003 + $0xb8] sm:$0xff]
      %v2887 = vmax.f32 %v2863, %v2816
      %v2888 = vmax.f32 %v2864, %v2879
      %v2889 = vmax.f32 %v2865, %v2818
      %v2890 = vmax.f32 %v2866, %v2880
      %v2891 = vmax.f32 %v2867, %v2820
      %v2892 = vmax.f32 %v2868, %v2881
      %v2893 = vmax.f32 %v2869, %v2822
      %v2894 = vmax.f32 %v2870, %v2882
      %v2895 = vmax.f32 %v2871, %v2824
      %v2896 = vmax.f32 %v2872, %v2883
      %v2897 = vmax.f32 %v2873, %v2826
      %v2898 = vmax.f32 %v2874, %v2884
      %v2899 = vmax.f32 %v2875, %v2828
      %v2900 = vmax.f32 %v2876, %v2885
      %v2901 = vmax.f32 %v2877, %v2830
      %v2902 = vmax.f32 %v2878, %v2886
      %s2903 = scalar_lea.vmem %s149, 128
      %2904 = vst.msk [vmem:[%s2903] sm:$0xff] %vm151, %v2887
      %2905 = vst.msk [vmem:[%s2903 + $0x8] sm:$0xff] %vm151, %v2888
      %2906 = vst.msk [vmem:[%s2903 + $0x10] sm:$0xff] %vm151, %v2889
      %2907 = vst.msk [vmem:[%s2903 + $0x18] sm:$0xff] %vm151, %v2890
      %2908 = vst.msk [vmem:[%s2903 + $0x20] sm:$0xff] %vm151, %v2891
      %2909 = vst.msk [vmem:[%s2903 + $0x28] sm:$0xff] %vm151, %v2892
      %2910 = vst.msk [vmem:[%s2903 + $0x30] sm:$0xff] %vm151, %v2893
      %2911 = vst.msk [vmem:[%s2903 + $0x38] sm:$0xff] %vm151, %v2894
      %2912 = vst.msk [vmem:[%s2903 + $0x40] sm:$0xff] %vm151, %v2895
      %2913 = vst.msk [vmem:[%s2903 + $0x48] sm:$0xff] %vm151, %v2896
      %2914 = vst.msk [vmem:[%s2903 + $0x50] sm:$0xff] %vm151, %v2897
      %2915 = vst.msk [vmem:[%s2903 + $0x58] sm:$0xff] %vm151, %v2898
      %2916 = vst.msk [vmem:[%s2903 + $0x60] sm:$0xff] %vm151, %v2899
      %2917 = vst.msk [vmem:[%s2903 + $0x68] sm:$0xff] %vm151, %v2900
      %2918 = vst.msk [vmem:[%s2903 + $0x70] sm:$0xff] %vm151, %v2901
      %2919 = vst.msk [vmem:[%s2903 + $0x78] sm:$0xff] %vm151, %v2902
      %s2920 = scalar_lea.vmem %s140, 128
      %v2921 = vld [vmem:[%s2920] sm:$0xff]
      %v2922 = vld [vmem:[%s2920 + $0x8] sm:$0xff]
      %v2923 = vld [vmem:[%s2920 + $0x10] sm:$0xff]
      %v2924 = vld [vmem:[%s2920 + $0x18] sm:$0xff]
      %v2925 = vld [vmem:[%s2920 + $0x20] sm:$0xff]
      %v2926 = vld [vmem:[%s2920 + $0x28] sm:$0xff]
      %v2927 = vld [vmem:[%s2920 + $0x30] sm:$0xff]
      %v2928 = vld [vmem:[%s2920 + $0x38] sm:$0xff]
      %v2929 = vld [vmem:[%s2920 + $0x40] sm:$0xff]
      %v2930 = vld [vmem:[%s2920 + $0x48] sm:$0xff]
      %v2931 = vld [vmem:[%s2920 + $0x50] sm:$0xff]
      %v2932 = vld [vmem:[%s2920 + $0x58] sm:$0xff]
      %v2933 = vld [vmem:[%s2920 + $0x60] sm:$0xff]
      %v2934 = vld [vmem:[%s2920 + $0x68] sm:$0xff]
      %v2935 = vld [vmem:[%s2920 + $0x70] sm:$0xff]
      %v2936 = vld [vmem:[%s2920 + $0x78] sm:$0xff]
      %s2937 = scalar_lea.vmem %s149, 896
      %2938 = vst.msk [vmem:[%s2937] sm:$0xff] %vm151, %v2921
      %2939 = vst.msk [vmem:[%s2937 + $0x8] sm:$0xff] %vm151, %v2922
      %2940 = vst.msk [vmem:[%s2937 + $0x10] sm:$0xff] %vm151, %v2923
      %2941 = vst.msk [vmem:[%s2937 + $0x18] sm:$0xff] %vm151, %v2924
      %2942 = vst.msk [vmem:[%s2937 + $0x20] sm:$0xff] %vm151, %v2925
      %2943 = vst.msk [vmem:[%s2937 + $0x28] sm:$0xff] %vm151, %v2926
      %2944 = vst.msk [vmem:[%s2937 + $0x30] sm:$0xff] %vm151, %v2927
      %2945 = vst.msk [vmem:[%s2937 + $0x38] sm:$0xff] %vm151, %v2928
      %2946 = vst.msk [vmem:[%s2937 + $0x40] sm:$0xff] %vm151, %v2929
      %2947 = vst.msk [vmem:[%s2937 + $0x48] sm:$0xff] %vm151, %v2930
      %2948 = vst.msk [vmem:[%s2937 + $0x50] sm:$0xff] %vm151, %v2931
      %2949 = vst.msk [vmem:[%s2937 + $0x58] sm:$0xff] %vm151, %v2932
      %2950 = vst.msk [vmem:[%s2937 + $0x60] sm:$0xff] %vm151, %v2933
      %2951 = vst.msk [vmem:[%s2937 + $0x68] sm:$0xff] %vm151, %v2934
      %2952 = vst.msk [vmem:[%s2937 + $0x70] sm:$0xff] %vm151, %v2935
      %2953 = vst.msk [vmem:[%s2937 + $0x78] sm:$0xff] %vm151, %v2936
      %s2954 = smul.u32 4, %s16
      %p2955 = scmp.lt.s32.totalorder %s2954, 7
      %s2956 = scalar_select %p2955, %s2954, 7
      %p2957 = scmp.lt.s32.totalorder %s17, 0
      %s2958 = scalar_select %p2957, %s17, 0
      %s2959 = smul.addr %s2956, 32
      %s2960 = sadd.s32 %s2958, %s2959
      %s2961 = smul.addr %s2960, 8
      %s2962 = scalar_lea.vmem %s1, %s2961
      // Predicated region
      $region25: #{tpu_custom_call.1} parent=23 // pred_check
        %p2963 = pneg %p72
      $region26: #{tpu_custom_call.1} parent=23 // pred_check_branch
        %2965 = sbr.rel (%p2963) target = $region28
      $region27: #{tpu_custom_call.1} parent=23 // pred_region
        %s2966 = smul.u32 4, %s16
      $region28: #{tpu_custom_call.1} parent=23 // pred_fallthru
        _
    $region24: #{tpu_custom_call.1} parent=5 // pred_fallthru
      _
    %p2967 = scmp.le.s32.totalorder 2, %s7
    // Predicated region
    $region29: #{tpu_custom_call.1} parent=5 // pred_check
      %p2968 = pneg %p2967
    $region30: #{tpu_custom_call.1} parent=5 // pred_check_branch
      %2970 = sbr.rel (%p2968) target = $region32
    $region31: #{tpu_custom_call.1} parent=5 // pred_region
      %s2971 = ssub.s32 %s7, 2
      // Predicated region
      $region33: #{tpu_custom_call.1} parent=31 // pred_check
        %p2972 = pneg %p78
      $region34: #{tpu_custom_call.1} parent=31 // pred_check_branch
        %2974 = sbr.rel (%p2972) target = $region36
      $region35: #{tpu_custom_call.1} parent=31 // pred_region
        %s2975 = smul.u32 4, %s18
        %p2976 = scmp.lt.s32.totalorder %s2975, 7
        %s2977 = scalar_select %p2976, %s2975, 7
        %p2978 = scmp.lt.s32.totalorder %s19, 0
        %s2979 = scalar_select %p2978, %s19, 0
        %s2980 = smul.addr %s2977, 32
        %s2981 = sadd.s32 %s2979, %s2980
        %s2982 = smul.addr %s2981, 8
        %s2983 = scalar_lea.vmem %s1, %s2982
      $region36: #{tpu_custom_call.1} parent=31 // pred_fallthru
        _
    $region32: #{tpu_custom_call.1} parent=5 // pred_fallthru
      _
  $region6: #{tpu_custom_call.1} parent=0 // loop_footer
    %s11 = sadd.s32 1, %s7
  $region7: #{tpu_custom_call.1} parent=0 // loop_footer_branch
    %6 = sbr.rel target = $region3
  $region8: #{tpu_custom_call.1} parent=0 // loop_exit
    _

</llo_original>
